<compile_context>
chip_gen: v5e
topology: v5e:2x2
jax: 0.10.0
libtpu: 0.0.40
codegen_flags: <defaults>
</compile_context>

<pallas_src>
import math
import functools

import jax
import jax.numpy as jnp
from jax.experimental import pallas as pl
from jax.experimental.pallas import tpu as pltpu

LN_EPS = 1e-5        # torch.nn.LayerNorm default
MASK_FILL = -1e30    # finite large-negative fill (NaN-robust)


# ----------------------------------------------------------------------------
# compiler-params helper
# ----------------------------------------------------------------------------
def _vmem_limit_bytes():
    try:
        cap = getattr(pltpu.get_tpu_info(), "vmem_capacity_bytes", 0)
        if cap:
            return int(cap * 0.85)      # ~108 MiB v5e/v6e, ~54 MiB v7x
    except Exception:
        pass
    return 64 * 1024 * 1024


def _mosaic_params(dims):
    return pltpu.CompilerParams(dimension_semantics=dims,
                                vmem_limit_bytes=_vmem_limit_bytes())


# ----------------------------------------------------------------------------
# in-kernel helpers (pure jnp, traced inside the Pallas bodies)
# ----------------------------------------------------------------------------
def _erf(x):
    # Abramowitz & Stegun 7.1.26 polynomial (max abs err ~1.5e-7 @ fp32).
    a1, a2, a3, a4, a5 = (0.254829592, -0.284496736, 1.421413741,
                          -1.453152027, 1.061405429)
    p = 0.3275911
    ax = jnp.abs(x)
    t = pl.reciprocal(1.0 + p * ax, approx=True)       # EUP, off the VPU path
    poly = ((((a5 * t + a4) * t + a3) * t + a2) * t + a1) * t
    y = 1.0 - poly * jnp.exp(-ax * ax)
    return jnp.where(x >= 0, y, -y)


def _gelu(x):
    # exact (erf-based) GELU, matching torch.nn.GELU()
    return 0.5 * x * (1.0 + _erf(x * (1.0 / math.sqrt(2.0))))


def _layernorm(x, w, b):
    mu = jnp.mean(x, axis=-1, keepdims=True)
    xc = x - mu
    var = jnp.mean(xc * xc, axis=-1, keepdims=True)
    return xc * jax.lax.rsqrt(var + LN_EPS) * w + b


# ----------------------------------------------------------------------------
# fused transformer stack kernel.  grid = (batch_block, layer); the layer axis
# is "arbitrary", so the residual scratch stays VMEM-resident across layers.
# ----------------------------------------------------------------------------
def _block_kernel(n_head, t,
                  x_ref,
                  ln1w_ref, ln1b_ref,
                  wq_ref, bq_ref, wk_ref, bk_ref, wv_ref, bv_ref,
                  wp_ref, bp_ref,
                  ln2w_ref, ln2b_ref,
                  w1_ref, b1_ref, w2_ref, b2_ref,
                  o_ref,
                  res_ref, bias_ref):
    layer = pl.program_id(1)
    BB, T, C = o_ref.shape
    M = BB * T
    hd = C // n_head
    bf = jnp.bfloat16

    @pl.when(layer == 0)
    def _():
        # seed the flat residual stream and build the 10x10-tiled tril mask
        # bias once per batch block (matches torch's mask[:t,:t].repeat(10,10)).
        res_ref[...] = x_ref[...].reshape(M, C)
        row = jax.lax.broadcasted_iota(jnp.int32, (T, T), 0)
        col = jax.lax.broadcasted_iota(jnp.int32, (T, T), 1)
        bias_ref[...] = jnp.where((col % t) <= (row % t),
                                  0.0, MASK_FILL).astype(jnp.float32)

    x = res_ref[...]                     # (M, C) fp32 residual stream
    bias = bias_ref[...]                 # (T, T) additive mask

    # --- attention branch: x + proj(attn(ln1(x))) ---
    # 1/sqrt(hd) is folded into Wq / bq at init (no per-score multiply).
    h = _layernorm(x, ln1w_ref[0], ln1b_ref[0]).astype(bf)
    q = (jnp.dot(h, wq_ref[0], preferred_element_type=jnp.float32)
         + bq_ref[0]).astype(bf)
    k = (jnp.dot(h, wk_ref[0], preferred_element_type=jnp.float32)
         + bk_ref[0]).astype(bf)
    v = (jnp.dot(h, wv_ref[0], preferred_element_type=jnp.float32)
         + bv_ref[0]).astype(bf)
    wp = wp_ref[0]                       # (C, C) bf16
    bp = bp_ref[0]                       # (1, C) f32

    # TODO(synk): for large n_head, switch to a head-major layout (one
    # transpose per q/k/v per layer) + lax.fori_loop over heads to avoid the
    # per-head sub-128 lane slices below.
    for b in range(BB):                  # small static batch-in-block loop
        rs = slice(b * T, (b + 1) * T)
        acc = jnp.zeros((T, C), jnp.float32)
        for hi in range(n_head):
            cs = slice(hi * hd, (hi + 1) * hd)
            att = jnp.einsum('qd,kd->qk', q[rs, cs], k[rs, cs],
                             preferred_element_type=jnp.float32) + bias
            att = att - jnp.max(att, axis=-1, keepdims=True)
            att = jnp.exp(att)
            att = att / jnp.sum(att, axis=-1, keepdims=True)   # exact softmax
            # attn_drop is identity (eval mode)
            yh = jnp.dot(att.astype(bf), v[rs, cs],
                         preferred_element_type=jnp.float32)
            # concat_h(y_h) @ Wp  ==  sum_h y_h @ Wp[h*hd:(h+1)*hd, :]
            acc = acc + jnp.dot(yh.astype(bf), wp[cs, :],
                                preferred_element_type=jnp.float32)
        # resid_drop is identity (eval mode)
        res_ref[rs, :] = x[rs, :] + acc + bp

    # --- MLP branch: x + W2(gelu(W1(ln2(x)))) ---
    # TODO(synk): on v7x (64 MiB VMEM) with C >= 1024, tile W1/W2 over the 4C
    # hidden axis (pltpu.emit_pipeline from pl.ANY refs) instead of holding
    # them fully resident per layer.
    x2 = res_ref[...]
    h2 = _layernorm(x2, ln2w_ref[0], ln2b_ref[0]).astype(bf)
    m = jnp.dot(h2, w1_ref[0], preferred_element_type=jnp.float32) + b1_ref[0]
    m = _gelu(m).astype(bf)
    m = jnp.dot(m, w2_ref[0], preferred_element_type=jnp.float32) + b2_ref[0]
    res_ref[...] = x2 + m

    @pl.when(layer == pl.num_programs(1) - 1)
    def _():
        o_ref[...] = res_ref[...].reshape(BB, T, C)


# ----------------------------------------------------------------------------
# vocab heads kernel: one (B*t, C) x (C, TN) matmul per (head, vocab-tile).
# ----------------------------------------------------------------------------
def _heads_kernel(x_ref, w_ref, o_ref):
    B, _, t, C = x_ref.shape
    x = x_ref[...].reshape(B * t, C).astype(jnp.bfloat16)   # cast in-kernel
    o_ref[0] = jnp.dot(x, w_ref[0], preferred_element_type=jnp.float32)


# ----------------------------------------------------------------------------
# wrappers
# ----------------------------------------------------------------------------
def _transformer_stack(x, p, n_head, t, batch_blocks):
    B, T, C = x.shape
    L = p['wq'].shape[0]
    assert B % batch_blocks == 0
    BB = B // batch_blocks

    args = (x,
            p['ln1_w'], p['ln1_b'],
            p['wq'], p['bq'], p['wk'], p['bk'], p['wv'], p['bv'],
            p['wp'], p['bp'],
            p['ln2_w'], p['ln2_b'],
            p['w1'], p['b1'], p['w2'], p['b2'])

    def lspec(a):
        return pl.BlockSpec((1,) + tuple(a.shape[1:]), lambda bb, l: (l, 0, 0))

    in_specs = ([pl.BlockSpec((BB, T, C), lambda bb, l: (bb, 0, 0))]
                + [lspec(a) for a in args[1:]])

    return pl.pallas_call(
        functools.partial(_block_kernel, n_head, t),
        out_shape=jax.ShapeDtypeStruct((B, T, C), jnp.float32),
        grid=(batch_blocks, L),
        in_specs=in_specs,
        out_specs=pl.BlockSpec((BB, T, C), lambda bb, l: (bb, 0, 0)),
        scratch_shapes=[pltpu.VMEM((BB * T, C), jnp.float32),   # residual
                        pltpu.VMEM((T, T), jnp.float32)],       # mask bias
        # x seeds the residual and is never needed again -> reuse its HBM
        # buffer for the output (output blocks are still written explicitly
        # at the last layer; x stays an input because Pallas does not preload
        # aliased output blocks into VMEM).
        input_output_aliases={0: 0},
        compiler_params=_mosaic_params(("parallel", "arbitrary")),
    )(*args)


def _head_projections(y, head_w, vocab_sizes, t):
    B, T, C = y.shape
    S, Cw, Vp = head_w.shape
    assert S == 5 and Cw == C and T == 10 * t
    TN = min(512, Vp)
    assert Vp % TN == 0

    # free reshape: the BlockSpec index_map below picks sequence block 5+s of
    # length t straight from HBM (no slice / transpose / cast slab in XLA).
    y4 = y.reshape(B, 10, t, C)

    out = pl.pallas_call(
        _heads_kernel,
        out_shape=jax.ShapeDtypeStruct((5, B * t, Vp), jnp.float32),
        grid=(5, Vp // TN),
        in_specs=[pl.BlockSpec((B, 1, t, C), lambda s, v: (0, 5 + s, 0, 0)),
                  pl.BlockSpec((1, C, TN), lambda s, v: (s, 0, v))],
        out_specs=pl.BlockSpec((1, B * t, TN), lambda s, v: (s, 0, v)),
        compiler_params=_mosaic_params(("parallel", "parallel")),
    )(y4, head_w)

    out = out.reshape(5, B, t, Vp)
    return tuple(out[s, :, :, :vocab_sizes[s]] for s in range(5))


def gpt_head_forward(x, params, n_head, targets=None, batch_blocks=None):
    """Forward pass of GPTHead (eval mode, targets=None -> losses are None)."""
    B, T, C = x.shape
    assert T % 10 == 0
    t = T // 10
    if batch_blocks is None:
        # keep the parallel grid axis >= 2 when possible so both v7x
        # TensorCores are fed; on v5e/v6e (1 TC) this is harmless.
        batch_blocks = 2 if (B % 2 == 0 and B >= 2) else 1
    y = _transformer_stack(x, params, n_head, t, batch_blocks)
    logits = _head_projections(y, params['head_w'],
                               params['head_vocab_sizes'], t)
    # TODO(synk): cross-entropy losses are only computed when targets is given;
    # this eval path returns None losses, matching the module with targets=None.
    return logits + (None, None, None, None, None)


# ----------------------------------------------------------------------------
# deterministic, kernel-ready parameter init (mirrors GPTHead._init_weights).
# Weight casting / padding / stacking and the 1/sqrt(hd) fold happen ONCE here
# instead of on every forward call.
# ----------------------------------------------------------------------------
def init_params(key, *, n_embd, n_head, n_layer,
                vocab_up, vocab_down, vocab_transl):
    C, H, L = n_embd, 4 * n_embd, n_layer
    assert C % n_head == 0
    hd = C // n_head
    bf = jnp.bfloat16
    ks = jax.random.split(key, 11)

    def lin(k, *shape):
        return 0.02 * jax.random.normal(k, shape, jnp.float32)

    scale = 1.0 / math.sqrt(hd)          # folded into Wq / bq (zero biases here)

    vocab_sizes = (vocab_up, vocab_down, vocab_up, vocab_down, vocab_transl)
    head_ws = [lin(ks[6], C, vocab_up), lin(ks[7], C, vocab_down),
               lin(ks[8], C, vocab_up), lin(ks[9], C, vocab_down),
               lin(ks[10], C, vocab_transl)]
    v128 = ((max(vocab_sizes) + 127) // 128) * 128
    tn = min(512, v128)
    vp = ((v128 + tn - 1) // tn) * tn
    head_w = jnp.stack([jnp.pad(w, ((0, 0), (0, vp - w.shape[1])))
                        for w in head_ws]).astype(bf)        # (5, C, Vp)

    return dict(
        ln1_w=jnp.ones((L, 1, C), jnp.float32),
        ln1_b=jnp.zeros((L, 1, C), jnp.float32),
        wq=(scale * lin(ks[0], L, C, C)).astype(bf),
        bq=jnp.zeros((L, 1, C), jnp.float32),            # (bias * scale) = 0
        wk=lin(ks[1], L, C, C).astype(bf),
        bk=jnp.zeros((L, 1, C), jnp.float32),
        wv=lin(ks[2], L, C, C).astype(bf),
        bv=jnp.zeros((L, 1, C), jnp.float32),
        wp=lin(ks[3], L, C, C).astype(bf),
        bp=jnp.zeros((L, 1, C), jnp.float32),
        ln2_w=jnp.ones((L, 1, C), jnp.float32),
        ln2_b=jnp.zeros((L, 1, C), jnp.float32),
        w1=lin(ks[4], L, C, H).astype(bf),
        b1=jnp.zeros((L, 1, H), jnp.float32),
        w2=lin(ks[5], L, H, C).astype(bf),
        b2=jnp.zeros((L, 1, C), jnp.float32),
        head_w=head_w,
        head_vocab_sizes=vocab_sizes,
    )


# ----------------------------------------------------------------------------
if __name__ == "__main__":
    # small config consistent with the module: T must be divisible by 10.
    B, T, C = 2, 40, 32
    n_head, n_layer = 4, 2
    vocab_up, vocab_down, vocab_transl = 16, 16, 8

    key = jax.random.PRNGKey(0)
    k_params, k_x = jax.random.split(key)
    params = init_params(k_params, n_embd=C, n_head=n_head, n_layer=n_layer,
                         vocab_up=vocab_up, vocab_down=vocab_down,
                         vocab_transl=vocab_transl)
    x = jax.random.normal(k_x, (B, T, C), jnp.float32)

    outs = gpt_head_forward(x, params, n_head)
    for o in outs:
        if o is not None:
            jax.block_until_ready(o)

    t = T // 10
    assert outs[0].shape == (B, t, vocab_up)
    assert outs[1].shape == (B, t, vocab_down)
    assert outs[2].shape == (B, t, vocab_up)
    assert outs[3].shape == (B, t, vocab_down)
    assert outs[4].shape == (B, t, vocab_transl)
    for o in outs[:5]:
        assert bool(jnp.isfinite(o).all())
    print("KERNEL_OK")
</pallas_src>

<mosaic_0001>
module attributes {stable_mosaic.version = 11 : i64} {
  func.func @_block_kernel(%arg0: i32, %arg1: i32, %arg2: memref<1x40x32xf32, #tpu.memory_space<vmem>>, %arg3: memref<1x1x32xf32, #tpu.memory_space<vmem>>, %arg4: memref<1x1x32xf32, #tpu.memory_space<vmem>>, %arg5: memref<1x32x32xbf16, #tpu.memory_space<vmem>>, %arg6: memref<1x1x32xf32, #tpu.memory_space<vmem>>, %arg7: memref<1x32x32xbf16, #tpu.memory_space<vmem>>, %arg8: memref<1x1x32xf32, #tpu.memory_space<vmem>>, %arg9: memref<1x32x32xbf16, #tpu.memory_space<vmem>>, %arg10: memref<1x1x32xf32, #tpu.memory_space<vmem>>, %arg11: memref<1x32x32xbf16, #tpu.memory_space<vmem>>, %arg12: memref<1x1x32xf32, #tpu.memory_space<vmem>>, %arg13: memref<1x1x32xf32, #tpu.memory_space<vmem>>, %arg14: memref<1x1x32xf32, #tpu.memory_space<vmem>>, %arg15: memref<1x32x128xbf16, #tpu.memory_space<vmem>>, %arg16: memref<1x1x128xf32, #tpu.memory_space<vmem>>, %arg17: memref<1x128x32xbf16, #tpu.memory_space<vmem>>, %arg18: memref<1x1x32xf32, #tpu.memory_space<vmem>>, %arg19: memref<1x40x32xf32, #tpu.memory_space<vmem>>, %arg20: memref<40x32xf32, #tpu.memory_space<vmem>>, %arg21: memref<40x40xf32, #tpu.memory_space<vmem>>) attributes {dimension_semantics = [#tpu.dimension_semantics<parallel>, #tpu.dimension_semantics<arbitrary>], iteration_bounds = array<i64: 2, 2>, scalar_prefetch = 0 : i64, scratch_operands = 2 : i64, tpu.core_type = #tpu.core_type<tc>, window_params = [{transform_indices = @transform_0, window_bounds = array<i64: 1, 40, 32>}, {transform_indices = @transform_1, window_bounds = array<i64: 1, 1, 32>}, {transform_indices = @transform_2, window_bounds = array<i64: 1, 1, 32>}, {transform_indices = @transform_3, window_bounds = array<i64: 1, 32, 32>}, {transform_indices = @transform_4, window_bounds = array<i64: 1, 1, 32>}, {transform_indices = @transform_5, window_bounds = array<i64: 1, 32, 32>}, {transform_indices = @transform_6, window_bounds = array<i64: 1, 1, 32>}, {transform_indices = @transform_7, window_bounds = array<i64: 1, 32, 32>}, {transform_indices = @transform_8, window_bounds = array<i64: 1, 1, 32>}, {transform_indices = @transform_9, window_bounds = array<i64: 1, 32, 32>}, {transform_indices = @transform_10, window_bounds = array<i64: 1, 1, 32>}, {transform_indices = @transform_11, window_bounds = array<i64: 1, 1, 32>}, {transform_indices = @transform_12, window_bounds = array<i64: 1, 1, 32>}, {transform_indices = @transform_13, window_bounds = array<i64: 1, 32, 128>}, {transform_indices = @transform_14, window_bounds = array<i64: 1, 1, 128>}, {transform_indices = @transform_15, window_bounds = array<i64: 1, 128, 32>}, {transform_indices = @transform_16, window_bounds = array<i64: 1, 1, 32>}, {transform_indices = @transform_17, window_bounds = array<i64: 1, 40, 32>}]} {
    %c0_i32 = arith.constant 0 : i32
    %0 = arith.cmpi eq, %arg1, %c0_i32 : i32
    %1 = arith.extui %0 : i1 to i32
    %c0_i32_0 = arith.constant 0 : i32
    %2 = arith.cmpi ne, %1, %c0_i32_0 : i32
    scf.if %2 {
      %c0_108 = arith.constant 0 : index
      %c0_109 = arith.constant 0 : index
      %c0_110 = arith.constant 0 : index
      %228 = vector.load %arg2[%c0_108, %c0_109, %c0_110] : memref<1x40x32xf32, #tpu.memory_space<vmem>>, vector<1x40x32xf32>
      %229 = vector.shape_cast %228 : vector<1x40x32xf32> to vector<40x32xf32>
      %c0_111 = arith.constant 0 : index
      %c0_112 = arith.constant 0 : index
      %230 = vector.load %arg20[%c0_111, %c0_112] : memref<40x32xf32, #tpu.memory_space<vmem>>, vector<40x32xf32>
      tpu.vector_store %arg20[%c0_111, %c0_112], %229 {strides = array<i32>} : memref<40x32xf32, #tpu.memory_space<vmem>>, vector<40x32xf32>,
      %231 = tpu.iota {dimensions = array<i32: 0>} : vector<40x40xi32>
      %232 = tpu.iota {dimensions = array<i32: 1>} : vector<40x40xi32>
      %c4_i32 = arith.constant 4 : i32
      %c0_i32_113 = arith.constant 0 : i32
      %233 = arith.cmpi eq, %c4_i32, %c0_i32_113 : i32
      %c1_i32_114 = arith.constant 1 : i32
      %234 = arith.select %233, %c1_i32_114, %c4_i32 : i32
      %235 = vector.broadcast %234 : i32 to vector<40x40xi32>
      %236 = arith.remsi %232, %235 : vector<40x40xi32>
      %c0_i32_115 = arith.constant 0 : i32
      %237 = vector.broadcast %c0_i32_115 : i32 to vector<40x40xi32>
      %238 = arith.cmpi ne, %236, %237 : vector<40x40xi32>
      %c0_i32_116 = arith.constant 0 : i32
      %239 = vector.broadcast %c0_i32_116 : i32 to vector<40x40xi32>
      %240 = arith.cmpi slt, %236, %239 : vector<40x40xi32>
      %c0_i32_117 = arith.constant 0 : i32
      %241 = arith.cmpi slt, %234, %c0_i32_117 : i32
      %242 = vector.broadcast %241 : i1 to vector<40x40xi1>
      %243 = vector.broadcast %242 : vector<40x40xi1> to vector<40x40xi1>
      %244 = arith.xori %240, %243 : vector<40x40xi1>
      %245 = arith.andi %244, %238 : vector<40x40xi1>
      %246 = vector.broadcast %234 : i32 to vector<40x40xi32>
      %247 = arith.addi %236, %246 : vector<40x40xi32>
      %248 = arith.select %245, %247, %236 : vector<40x40xi1>, vector<40x40xi32>
      %c4_i32_118 = arith.constant 4 : i32
      %c0_i32_119 = arith.constant 0 : i32
      %249 = arith.cmpi eq, %c4_i32_118, %c0_i32_119 : i32
      %c1_i32_120 = arith.constant 1 : i32
      %250 = arith.select %249, %c1_i32_120, %c4_i32_118 : i32
      %251 = vector.broadcast %250 : i32 to vector<40x40xi32>
      %252 = arith.remsi %231, %251 : vector<40x40xi32>
      %c0_i32_121 = arith.constant 0 : i32
      %253 = vector.broadcast %c0_i32_121 : i32 to vector<40x40xi32>
      %254 = arith.cmpi ne, %252, %253 : vector<40x40xi32>
      %c0_i32_122 = arith.constant 0 : i32
      %255 = vector.broadcast %c0_i32_122 : i32 to vector<40x40xi32>
      %256 = arith.cmpi slt, %252, %255 : vector<40x40xi32>
      %c0_i32_123 = arith.constant 0 : i32
      %257 = arith.cmpi slt, %250, %c0_i32_123 : i32
      %258 = vector.broadcast %257 : i1 to vector<40x40xi1>
      %259 = vector.broadcast %258 : vector<40x40xi1> to vector<40x40xi1>
      %260 = arith.xori %256, %259 : vector<40x40xi1>
      %261 = arith.andi %260, %254 : vector<40x40xi1>
      %262 = vector.broadcast %250 : i32 to vector<40x40xi32>
      %263 = arith.addi %252, %262 : vector<40x40xi32>
      %264 = arith.select %261, %263, %252 : vector<40x40xi1>, vector<40x40xi32>
      %265 = arith.cmpi sle, %248, %264 : vector<40x40xi32>
      %cst_124 = arith.constant 0.000000e+00 : f32
      %cst_125 = arith.constant -1.000000e+30 : f32
      %266 = vector.broadcast %cst_124 : f32 to vector<40x40xf32>
      %267 = vector.broadcast %cst_125 : f32 to vector<40x40xf32>
      %268 = arith.select %265, %266, %267 : vector<40x40xi1>, vector<40x40xf32>
      %c0_126 = arith.constant 0 : index
      %c0_127 = arith.constant 0 : index
      %269 = vector.load %arg21[%c0_126, %c0_127] : memref<40x40xf32, #tpu.memory_space<vmem>>, vector<40x40xf32>
      tpu.vector_store %arg21[%c0_126, %c0_127], %268 {strides = array<i32>} : memref<40x40xf32, #tpu.memory_space<vmem>>, vector<40x40xf32>,
    } else {
    }
    %c0 = arith.constant 0 : index
    %c0_1 = arith.constant 0 : index
    %3 = vector.load %arg20[%c0, %c0_1] : memref<40x32xf32, #tpu.memory_space<vmem>>, vector<40x32xf32>
    %c0_2 = arith.constant 0 : index
    %c0_3 = arith.constant 0 : index
    %4 = vector.load %arg21[%c0_2, %c0_3] : memref<40x40xf32, #tpu.memory_space<vmem>>, vector<40x40xf32>
    %c0_4 = arith.constant 0 : index
    %c0_5 = arith.constant 0 : index
    %c0_6 = arith.constant 0 : index
    %5 = vector.load %arg3[%c0_4, %c0_5, %c0_6] : memref<1x1x32xf32, #tpu.memory_space<vmem>>, vector<1x1x32xf32>
    %6 = vector.shape_cast %5 : vector<1x1x32xf32> to vector<1x32xf32>
    %c0_7 = arith.constant 0 : index
    %c0_8 = arith.constant 0 : index
    %c0_9 = arith.constant 0 : index
    %7 = vector.load %arg4[%c0_7, %c0_8, %c0_9] : memref<1x1x32xf32, #tpu.memory_space<vmem>>, vector<1x1x32xf32>
    %8 = vector.shape_cast %7 : vector<1x1x32xf32> to vector<1x32xf32>
    %cst = arith.constant dense<0.000000e+00> : vector<40xf32>
    %9 = vector.multi_reduction <add>, %3, %cst [1] : vector<40x32xf32> to vector<40xf32>
    %10 = vector.shape_cast %9 : vector<40xf32> to vector<40x1xf32>
    %cst_10 = arith.constant 3.200000e+01 : f32
    %11 = vector.broadcast %cst_10 : f32 to vector<40x1xf32>
    %12 = arith.divf %10, %11 : vector<40x1xf32>
    %13 = vector.broadcast %12 : vector<40x1xf32> to vector<40x32xf32>
    %14 = arith.subf %3, %13 : vector<40x32xf32>
    %15 = arith.mulf %14, %14 : vector<40x32xf32>
    %cst_11 = arith.constant dense<0.000000e+00> : vector<40xf32>
    %16 = vector.multi_reduction <add>, %15, %cst_11 [1] : vector<40x32xf32> to vector<40xf32>
    %17 = vector.shape_cast %16 : vector<40xf32> to vector<40x1xf32>
    %cst_12 = arith.constant 3.200000e+01 : f32
    %18 = vector.broadcast %cst_12 : f32 to vector<40x1xf32>
    %19 = arith.divf %17, %18 : vector<40x1xf32>
    %cst_13 = arith.constant 9.99999974E-6 : f32
    %20 = vector.broadcast %cst_13 : f32 to vector<40x1xf32>
    %21 = arith.addf %19, %20 : vector<40x1xf32>
    %22 = math.rsqrt %21 : vector<40x1xf32>
    %23 = vector.broadcast %22 : vector<40x1xf32> to vector<40x32xf32>
    %24 = arith.mulf %14, %23 : vector<40x32xf32>
    %25 = vector.broadcast %6 : vector<1x32xf32> to vector<40x32xf32>
    %26 = arith.mulf %24, %25 : vector<40x32xf32>
    %27 = vector.broadcast %8 : vector<1x32xf32> to vector<40x32xf32>
    %28 = arith.addf %26, %27 : vector<40x32xf32>
    %29 = arith.truncf %28 : vector<40x32xf32> to vector<40x32xbf16>
    %c0_14 = arith.constant 0 : index
    %c0_15 = arith.constant 0 : index
    %c0_16 = arith.constant 0 : index
    %30 = vector.load %arg5[%c0_14, %c0_15, %c0_16] : memref<1x32x32xbf16, #tpu.memory_space<vmem>>, vector<1x32x32xbf16>
    %31 = vector.shape_cast %30 : vector<1x32x32xbf16> to vector<32x32xbf16>
    %cst_17 = arith.constant dense<0.000000e+00> : vector<40x32xf32>
    %32 = tpu.matmul %29, %31, %cst_17 {dimension_numbers = #tpu.dot_dimension_numbers<[1], [0], [0], [1], [0, 0, 1, 1], [], []>} : vector<40x32xbf16>, vector<32x32xbf16>, vector<40x32xf32> -> vector<40x32xf32>
    %c0_18 = arith.constant 0 : index
    %c0_19 = arith.constant 0 : index
    %c0_20 = arith.constant 0 : index
    %33 = vector.load %arg6[%c0_18, %c0_19, %c0_20] : memref<1x1x32xf32, #tpu.memory_space<vmem>>, vector<1x1x32xf32>
    %34 = vector.shape_cast %33 : vector<1x1x32xf32> to vector<1x32xf32>
    %35 = vector.broadcast %34 : vector<1x32xf32> to vector<40x32xf32>
    %36 = arith.addf %32, %35 : vector<40x32xf32>
    %37 = arith.truncf %36 : vector<40x32xf32> to vector<40x32xbf16>
    %c0_21 = arith.constant 0 : index
    %c0_22 = arith.constant 0 : index
    %c0_23 = arith.constant 0 : index
    %38 = vector.load %arg7[%c0_21, %c0_22, %c0_23] : memref<1x32x32xbf16, #tpu.memory_space<vmem>>, vector<1x32x32xbf16>
    %39 = vector.shape_cast %38 : vector<1x32x32xbf16> to vector<32x32xbf16>
    %cst_24 = arith.constant dense<0.000000e+00> : vector<40x32xf32>
    %40 = tpu.matmul %29, %39, %cst_24 {dimension_numbers = #tpu.dot_dimension_numbers<[1], [0], [0], [1], [0, 0, 1, 1], [], []>} : vector<40x32xbf16>, vector<32x32xbf16>, vector<40x32xf32> -> vector<40x32xf32>
    %c0_25 = arith.constant 0 : index
    %c0_26 = arith.constant 0 : index
    %c0_27 = arith.constant 0 : index
    %41 = vector.load %arg8[%c0_25, %c0_26, %c0_27] : memref<1x1x32xf32, #tpu.memory_space<vmem>>, vector<1x1x32xf32>
    %42 = vector.shape_cast %41 : vector<1x1x32xf32> to vector<1x32xf32>
    %43 = vector.broadcast %42 : vector<1x32xf32> to vector<40x32xf32>
    %44 = arith.addf %40, %43 : vector<40x32xf32>
    %45 = arith.truncf %44 : vector<40x32xf32> to vector<40x32xbf16>
    %c0_28 = arith.constant 0 : index
    %c0_29 = arith.constant 0 : index
    %c0_30 = arith.constant 0 : index
    %46 = vector.load %arg9[%c0_28, %c0_29, %c0_30] : memref<1x32x32xbf16, #tpu.memory_space<vmem>>, vector<1x32x32xbf16>
    %47 = vector.shape_cast %46 : vector<1x32x32xbf16> to vector<32x32xbf16>
    %cst_31 = arith.constant dense<0.000000e+00> : vector<40x32xf32>
    %48 = tpu.matmul %29, %47, %cst_31 {dimension_numbers = #tpu.dot_dimension_numbers<[1], [0], [0], [1], [0, 0, 1, 1], [], []>} : vector<40x32xbf16>, vector<32x32xbf16>, vector<40x32xf32> -> vector<40x32xf32>
    %c0_32 = arith.constant 0 : index
    %c0_33 = arith.constant 0 : index
    %c0_34 = arith.constant 0 : index
    %49 = vector.load %arg10[%c0_32, %c0_33, %c0_34] : memref<1x1x32xf32, #tpu.memory_space<vmem>>, vector<1x1x32xf32>
    %50 = vector.shape_cast %49 : vector<1x1x32xf32> to vector<1x32xf32>
    %51 = vector.broadcast %50 : vector<1x32xf32> to vector<40x32xf32>
    %52 = arith.addf %48, %51 : vector<40x32xf32>
    %53 = arith.truncf %52 : vector<40x32xf32> to vector<40x32xbf16>
    %c0_35 = arith.constant 0 : index
    %c0_36 = arith.constant 0 : index
    %c0_37 = arith.constant 0 : index
    %54 = vector.load %arg11[%c0_35, %c0_36, %c0_37] : memref<1x32x32xbf16, #tpu.memory_space<vmem>>, vector<1x32x32xbf16>
    %55 = vector.shape_cast %54 : vector<1x32x32xbf16> to vector<32x32xbf16>
    %c0_38 = arith.constant 0 : index
    %c0_39 = arith.constant 0 : index
    %c0_40 = arith.constant 0 : index
    %56 = vector.load %arg12[%c0_38, %c0_39, %c0_40] : memref<1x1x32xf32, #tpu.memory_space<vmem>>, vector<1x1x32xf32>
    %57 = vector.shape_cast %56 : vector<1x1x32xf32> to vector<1x32xf32>
    %cst_41 = arith.constant 0.000000e+00 : f32
    %58 = vector.broadcast %cst_41 : f32 to vector<40x32xf32>
    %59 = vector.extract_strided_slice %37 {offsets = [0, 0], sizes = [40, 8], strides = [1, 1]} : vector<40x32xbf16> to vector<40x8xbf16>
    %60 = vector.extract_strided_slice %45 {offsets = [0, 0], sizes = [40, 8], strides = [1, 1]} : vector<40x32xbf16> to vector<40x8xbf16>
    "tpu.trace_start"() <{level = 10 : i32, message = "qd,kd->qk"}> : () -> ()
    %cst_42 = arith.constant dense<0.000000e+00> : vector<40x40xf32>
    %61 = tpu.matmul %59, %60, %cst_42 {dimension_numbers = #tpu.dot_dimension_numbers<[1], [1], [0], [0], [0, 0, 1, 0], [], []>} : vector<40x8xbf16>, vector<40x8xbf16>, vector<40x40xf32> -> vector<40x40xf32>
    "tpu.trace_stop"() : () -> ()
    %62 = arith.addf %61, %4 : vector<40x40xf32>
    %cst_43 = arith.constant dense<0xFF800000> : vector<40xf32>
    %63 = vector.multi_reduction <maximumf>, %62, %cst_43 [1] : vector<40x40xf32> to vector<40xf32>
    %64 = vector.shape_cast %63 : vector<40xf32> to vector<40x1xf32>
    %65 = vector.broadcast %64 : vector<40x1xf32> to vector<40x40xf32>
    %66 = arith.subf %62, %65 : vector<40x40xf32>
    %67 = math.exp %66 : vector<40x40xf32>
    %cst_44 = arith.constant dense<0.000000e+00> : vector<40xf32>
    %68 = vector.multi_reduction <add>, %67, %cst_44 [1] : vector<40x40xf32> to vector<40xf32>
    %69 = vector.shape_cast %68 : vector<40xf32> to vector<40x1xf32>
    %70 = vector.broadcast %69 : vector<40x1xf32> to vector<40x40xf32>
    %71 = arith.divf %67, %70 : vector<40x40xf32>
    %72 = arith.truncf %71 : vector<40x40xf32> to vector<40x40xbf16>
    %73 = vector.extract_strided_slice %53 {offsets = [0, 0], sizes = [40, 8], strides = [1, 1]} : vector<40x32xbf16> to vector<40x8xbf16>
    %cst_45 = arith.constant dense<0.000000e+00> : vector<40x8xf32>
    %74 = tpu.matmul %72, %73, %cst_45 {dimension_numbers = #tpu.dot_dimension_numbers<[1], [0], [0], [1], [0, 0, 1, 1], [], []>} : vector<40x40xbf16>, vector<40x8xbf16>, vector<40x8xf32> -> vector<40x8xf32>
    %75 = arith.truncf %74 : vector<40x8xf32> to vector<40x8xbf16>
    %76 = vector.extract_strided_slice %55 {offsets = [0, 0], sizes = [8, 32], strides = [1, 1]} : vector<32x32xbf16> to vector<8x32xbf16>
    %cst_46 = arith.constant dense<0.000000e+00> : vector<40x32xf32>
    %77 = tpu.matmul %75, %76, %cst_46 {dimension_numbers = #tpu.dot_dimension_numbers<[1], [0], [0], [1], [0, 0, 1, 1], [], []>} : vector<40x8xbf16>, vector<8x32xbf16>, vector<40x32xf32> -> vector<40x32xf32>
    %78 = arith.addf %58, %77 : vector<40x32xf32>
    %79 = vector.extract_strided_slice %37 {offsets = [0, 8], sizes = [40, 8], strides = [1, 1]} : vector<40x32xbf16> to vector<40x8xbf16>
    %80 = vector.extract_strided_slice %45 {offsets = [0, 8], sizes = [40, 8], strides = [1, 1]} : vector<40x32xbf16> to vector<40x8xbf16>
    "tpu.trace_start"() <{level = 10 : i32, message = "qd,kd->qk"}> : () -> ()
    %cst_47 = arith.constant dense<0.000000e+00> : vector<40x40xf32>
    %81 = tpu.matmul %79, %80, %cst_47 {dimension_numbers = #tpu.dot_dimension_numbers<[1], [1], [0], [0], [0, 0, 1, 0], [], []>} : vector<40x8xbf16>, vector<40x8xbf16>, vector<40x40xf32> -> vector<40x40xf32>
    "tpu.trace_stop"() : () -> ()
    %82 = arith.addf %81, %4 : vector<40x40xf32>
    %cst_48 = arith.constant dense<0xFF800000> : vector<40xf32>
    %83 = vector.multi_reduction <maximumf>, %82, %cst_48 [1] : vector<40x40xf32> to vector<40xf32>
    %84 = vector.shape_cast %83 : vector<40xf32> to vector<40x1xf32>
    %85 = vector.broadcast %84 : vector<40x1xf32> to vector<40x40xf32>
    %86 = arith.subf %82, %85 : vector<40x40xf32>
    %87 = math.exp %86 : vector<40x40xf32>
    %cst_49 = arith.constant dense<0.000000e+00> : vector<40xf32>
    %88 = vector.multi_reduction <add>, %87, %cst_49 [1] : vector<40x40xf32> to vector<40xf32>
    %89 = vector.shape_cast %88 : vector<40xf32> to vector<40x1xf32>
    %90 = vector.broadcast %89 : vector<40x1xf32> to vector<40x40xf32>
    %91 = arith.divf %87, %90 : vector<40x40xf32>
    %92 = arith.truncf %91 : vector<40x40xf32> to vector<40x40xbf16>
    %93 = vector.extract_strided_slice %53 {offsets = [0, 8], sizes = [40, 8], strides = [1, 1]} : vector<40x32xbf16> to vector<40x8xbf16>
    %cst_50 = arith.constant dense<0.000000e+00> : vector<40x8xf32>
    %94 = tpu.matmul %92, %93, %cst_50 {dimension_numbers = #tpu.dot_dimension_numbers<[1], [0], [0], [1], [0, 0, 1, 1], [], []>} : vector<40x40xbf16>, vector<40x8xbf16>, vector<40x8xf32> -> vector<40x8xf32>
    %95 = arith.truncf %94 : vector<40x8xf32> to vector<40x8xbf16>
    %96 = vector.extract_strided_slice %55 {offsets = [8, 0], sizes = [8, 32], strides = [1, 1]} : vector<32x32xbf16> to vector<8x32xbf16>
    %cst_51 = arith.constant dense<0.000000e+00> : vector<40x32xf32>
    %97 = tpu.matmul %95, %96, %cst_51 {dimension_numbers = #tpu.dot_dimension_numbers<[1], [0], [0], [1], [0, 0, 1, 1], [], []>} : vector<40x8xbf16>, vector<8x32xbf16>, vector<40x32xf32> -> vector<40x32xf32>
    %98 = arith.addf %78, %97 : vector<40x32xf32>
    %99 = vector.extract_strided_slice %37 {offsets = [0, 16], sizes = [40, 8], strides = [1, 1]} : vector<40x32xbf16> to vector<40x8xbf16>
    %100 = vector.extract_strided_slice %45 {offsets = [0, 16], sizes = [40, 8], strides = [1, 1]} : vector<40x32xbf16> to vector<40x8xbf16>
    "tpu.trace_start"() <{level = 10 : i32, message = "qd,kd->qk"}> : () -> ()
    %cst_52 = arith.constant dense<0.000000e+00> : vector<40x40xf32>
    %101 = tpu.matmul %99, %100, %cst_52 {dimension_numbers = #tpu.dot_dimension_numbers<[1], [1], [0], [0], [0, 0, 1, 0], [], []>} : vector<40x8xbf16>, vector<40x8xbf16>, vector<40x40xf32> -> vector<40x40xf32>
    "tpu.trace_stop"() : () -> ()
    %102 = arith.addf %101, %4 : vector<40x40xf32>
    %cst_53 = arith.constant dense<0xFF800000> : vector<40xf32>
    %103 = vector.multi_reduction <maximumf>, %102, %cst_53 [1] : vector<40x40xf32> to vector<40xf32>
    %104 = vector.shape_cast %103 : vector<40xf32> to vector<40x1xf32>
    %105 = vector.broadcast %104 : vector<40x1xf32> to vector<40x40xf32>
    %106 = arith.subf %102, %105 : vector<40x40xf32>
    %107 = math.exp %106 : vector<40x40xf32>
    %cst_54 = arith.constant dense<0.000000e+00> : vector<40xf32>
    %108 = vector.multi_reduction <add>, %107, %cst_54 [1] : vector<40x40xf32> to vector<40xf32>
    %109 = vector.shape_cast %108 : vector<40xf32> to vector<40x1xf32>
    %110 = vector.broadcast %109 : vector<40x1xf32> to vector<40x40xf32>
    %111 = arith.divf %107, %110 : vector<40x40xf32>
    %112 = arith.truncf %111 : vector<40x40xf32> to vector<40x40xbf16>
    %113 = vector.extract_strided_slice %53 {offsets = [0, 16], sizes = [40, 8], strides = [1, 1]} : vector<40x32xbf16> to vector<40x8xbf16>
    %cst_55 = arith.constant dense<0.000000e+00> : vector<40x8xf32>
    %114 = tpu.matmul %112, %113, %cst_55 {dimension_numbers = #tpu.dot_dimension_numbers<[1], [0], [0], [1], [0, 0, 1, 1], [], []>} : vector<40x40xbf16>, vector<40x8xbf16>, vector<40x8xf32> -> vector<40x8xf32>
    %115 = arith.truncf %114 : vector<40x8xf32> to vector<40x8xbf16>
    %116 = vector.extract_strided_slice %55 {offsets = [16, 0], sizes = [8, 32], strides = [1, 1]} : vector<32x32xbf16> to vector<8x32xbf16>
    %cst_56 = arith.constant dense<0.000000e+00> : vector<40x32xf32>
    %117 = tpu.matmul %115, %116, %cst_56 {dimension_numbers = #tpu.dot_dimension_numbers<[1], [0], [0], [1], [0, 0, 1, 1], [], []>} : vector<40x8xbf16>, vector<8x32xbf16>, vector<40x32xf32> -> vector<40x32xf32>
    %118 = arith.addf %98, %117 : vector<40x32xf32>
    %119 = vector.extract_strided_slice %37 {offsets = [0, 24], sizes = [40, 8], strides = [1, 1]} : vector<40x32xbf16> to vector<40x8xbf16>
    %120 = vector.extract_strided_slice %45 {offsets = [0, 24], sizes = [40, 8], strides = [1, 1]} : vector<40x32xbf16> to vector<40x8xbf16>
    "tpu.trace_start"() <{level = 10 : i32, message = "qd,kd->qk"}> : () -> ()
    %cst_57 = arith.constant dense<0.000000e+00> : vector<40x40xf32>
    %121 = tpu.matmul %119, %120, %cst_57 {dimension_numbers = #tpu.dot_dimension_numbers<[1], [1], [0], [0], [0, 0, 1, 0], [], []>} : vector<40x8xbf16>, vector<40x8xbf16>, vector<40x40xf32> -> vector<40x40xf32>
    "tpu.trace_stop"() : () -> ()
    %122 = arith.addf %121, %4 : vector<40x40xf32>
    %cst_58 = arith.constant dense<0xFF800000> : vector<40xf32>
    %123 = vector.multi_reduction <maximumf>, %122, %cst_58 [1] : vector<40x40xf32> to vector<40xf32>
    %124 = vector.shape_cast %123 : vector<40xf32> to vector<40x1xf32>
    %125 = vector.broadcast %124 : vector<40x1xf32> to vector<40x40xf32>
    %126 = arith.subf %122, %125 : vector<40x40xf32>
    %127 = math.exp %126 : vector<40x40xf32>
    %cst_59 = arith.constant dense<0.000000e+00> : vector<40xf32>
    %128 = vector.multi_reduction <add>, %127, %cst_59 [1] : vector<40x40xf32> to vector<40xf32>
    %129 = vector.shape_cast %128 : vector<40xf32> to vector<40x1xf32>
    %130 = vector.broadcast %129 : vector<40x1xf32> to vector<40x40xf32>
    %131 = arith.divf %127, %130 : vector<40x40xf32>
    %132 = arith.truncf %131 : vector<40x40xf32> to vector<40x40xbf16>
    %133 = vector.extract_strided_slice %53 {offsets = [0, 24], sizes = [40, 8], strides = [1, 1]} : vector<40x32xbf16> to vector<40x8xbf16>
    %cst_60 = arith.constant dense<0.000000e+00> : vector<40x8xf32>
    %134 = tpu.matmul %132, %133, %cst_60 {dimension_numbers = #tpu.dot_dimension_numbers<[1], [0], [0], [1], [0, 0, 1, 1], [], []>} : vector<40x40xbf16>, vector<40x8xbf16>, vector<40x8xf32> -> vector<40x8xf32>
    %135 = arith.truncf %134 : vector<40x8xf32> to vector<40x8xbf16>
    %136 = vector.extract_strided_slice %55 {offsets = [24, 0], sizes = [8, 32], strides = [1, 1]} : vector<32x32xbf16> to vector<8x32xbf16>
    %cst_61 = arith.constant dense<0.000000e+00> : vector<40x32xf32>
    %137 = tpu.matmul %135, %136, %cst_61 {dimension_numbers = #tpu.dot_dimension_numbers<[1], [0], [0], [1], [0, 0, 1, 1], [], []>} : vector<40x8xbf16>, vector<8x32xbf16>, vector<40x32xf32> -> vector<40x32xf32>
    %138 = arith.addf %118, %137 : vector<40x32xf32>
    %139 = arith.addf %3, %138 : vector<40x32xf32>
    %140 = vector.broadcast %57 : vector<1x32xf32> to vector<40x32xf32>
    %141 = arith.addf %139, %140 : vector<40x32xf32>
    %c0_62 = arith.constant 0 : index
    %c0_63 = arith.constant 0 : index
    %142 = vector.load %arg20[%c0_62, %c0_63] : memref<40x32xf32, #tpu.memory_space<vmem>>, vector<40x32xf32>
    tpu.vector_store %arg20[%c0_62, %c0_63], %141 {strides = array<i32>} : memref<40x32xf32, #tpu.memory_space<vmem>>, vector<40x32xf32>,
    %c0_64 = arith.constant 0 : index
    %c0_65 = arith.constant 0 : index
    %143 = vector.load %arg20[%c0_64, %c0_65] : memref<40x32xf32, #tpu.memory_space<vmem>>, vector<40x32xf32>
    %c0_66 = arith.constant 0 : index
    %c0_67 = arith.constant 0 : index
    %c0_68 = arith.constant 0 : index
    %144 = vector.load %arg13[%c0_66, %c0_67, %c0_68] : memref<1x1x32xf32, #tpu.memory_space<vmem>>, vector<1x1x32xf32>
    %145 = vector.shape_cast %144 : vector<1x1x32xf32> to vector<1x32xf32>
    %c0_69 = arith.constant 0 : index
    %c0_70 = arith.constant 0 : index
    %c0_71 = arith.constant 0 : index
    %146 = vector.load %arg14[%c0_69, %c0_70, %c0_71] : memref<1x1x32xf32, #tpu.memory_space<vmem>>, vector<1x1x32xf32>
    %147 = vector.shape_cast %146 : vector<1x1x32xf32> to vector<1x32xf32>
    %cst_72 = arith.constant dense<0.000000e+00> : vector<40xf32>
    %148 = vector.multi_reduction <add>, %143, %cst_72 [1] : vector<40x32xf32> to vector<40xf32>
    %149 = vector.shape_cast %148 : vector<40xf32> to vector<40x1xf32>
    %cst_73 = arith.constant 3.200000e+01 : f32
    %150 = vector.broadcast %cst_73 : f32 to vector<40x1xf32>
    %151 = arith.divf %149, %150 : vector<40x1xf32>
    %152 = vector.broadcast %151 : vector<40x1xf32> to vector<40x32xf32>
    %153 = arith.subf %143, %152 : vector<40x32xf32>
    %154 = arith.mulf %153, %153 : vector<40x32xf32>
    %cst_74 = arith.constant dense<0.000000e+00> : vector<40xf32>
    %155 = vector.multi_reduction <add>, %154, %cst_74 [1] : vector<40x32xf32> to vector<40xf32>
    %156 = vector.shape_cast %155 : vector<40xf32> to vector<40x1xf32>
    %cst_75 = arith.constant 3.200000e+01 : f32
    %157 = vector.broadcast %cst_75 : f32 to vector<40x1xf32>
    %158 = arith.divf %156, %157 : vector<40x1xf32>
    %cst_76 = arith.constant 9.99999974E-6 : f32
    %159 = vector.broadcast %cst_76 : f32 to vector<40x1xf32>
    %160 = arith.addf %158, %159 : vector<40x1xf32>
    %161 = math.rsqrt %160 : vector<40x1xf32>
    %162 = vector.broadcast %161 : vector<40x1xf32> to vector<40x32xf32>
    %163 = arith.mulf %153, %162 : vector<40x32xf32>
    %164 = vector.broadcast %145 : vector<1x32xf32> to vector<40x32xf32>
    %165 = arith.mulf %163, %164 : vector<40x32xf32>
    %166 = vector.broadcast %147 : vector<1x32xf32> to vector<40x32xf32>
    %167 = arith.addf %165, %166 : vector<40x32xf32>
    %168 = arith.truncf %167 : vector<40x32xf32> to vector<40x32xbf16>
    %c0_77 = arith.constant 0 : index
    %c0_78 = arith.constant 0 : index
    %c0_79 = arith.constant 0 : index
    %169 = vector.load %arg15[%c0_77, %c0_78, %c0_79] : memref<1x32x128xbf16, #tpu.memory_space<vmem>>, vector<1x32x128xbf16>
    %170 = vector.shape_cast %169 : vector<1x32x128xbf16> to vector<32x128xbf16>
    %cst_80 = arith.constant dense<0.000000e+00> : vector<40x128xf32>
    %171 = tpu.matmul %168, %170, %cst_80 {dimension_numbers = #tpu.dot_dimension_numbers<[1], [0], [0], [1], [0, 0, 1, 1], [], []>} : vector<40x32xbf16>, vector<32x128xbf16>, vector<40x128xf32> -> vector<40x128xf32>
    %c0_81 = arith.constant 0 : index
    %c0_82 = arith.constant 0 : index
    %c0_83 = arith.constant 0 : index
    %172 = vector.load %arg16[%c0_81, %c0_82, %c0_83] : memref<1x1x128xf32, #tpu.memory_space<vmem>>, vector<1x1x128xf32>
    %173 = vector.shape_cast %172 : vector<1x1x128xf32> to vector<1x128xf32>
    %174 = vector.broadcast %173 : vector<1x128xf32> to vector<40x128xf32>
    %175 = arith.addf %171, %174 : vector<40x128xf32>
    %cst_84 = arith.constant 5.000000e-01 : f32
    %176 = vector.broadcast %cst_84 : f32 to vector<40x128xf32>
    %177 = arith.mulf %176, %175 : vector<40x128xf32>
    %cst_85 = arith.constant 0.707106769 : f32
    %178 = vector.broadcast %cst_85 : f32 to vector<40x128xf32>
    %179 = arith.mulf %175, %178 : vector<40x128xf32>
    %180 = math.absf %179 : vector<40x128xf32>
    %cst_86 = arith.constant 0.327591091 : f32
    %181 = vector.broadcast %cst_86 : f32 to vector<40x128xf32>
    %182 = arith.mulf %181, %180 : vector<40x128xf32>
    %cst_87 = arith.constant 1.000000e+00 : f32
    %183 = vector.broadcast %cst_87 : f32 to vector<40x128xf32>
    %184 = arith.addf %183, %182 : vector<40x128xf32>
    %185 = tpu.reciprocal %184 {approx = true} : vector<40x128xf32> -> vector<40x128xf32>
    %cst_88 = arith.constant 1.06140542 : f32
    %186 = vector.broadcast %cst_88 : f32 to vector<40x128xf32>
    %187 = arith.mulf %186, %185 : vector<40x128xf32>
    %cst_89 = arith.constant -1.45315206 : f32
    %188 = vector.broadcast %cst_89 : f32 to vector<40x128xf32>
    %189 = arith.addf %187, %188 : vector<40x128xf32>
    %190 = arith.mulf %189, %185 : vector<40x128xf32>
    %cst_90 = arith.constant 1.42141378 : f32
    %191 = vector.broadcast %cst_90 : f32 to vector<40x128xf32>
    %192 = arith.addf %190, %191 : vector<40x128xf32>
    %193 = arith.mulf %192, %185 : vector<40x128xf32>
    %cst_91 = arith.constant -0.284496725 : f32
    %194 = vector.broadcast %cst_91 : f32 to vector<40x128xf32>
    %195 = arith.addf %193, %194 : vector<40x128xf32>
    %196 = arith.mulf %195, %185 : vector<40x128xf32>
    %cst_92 = arith.constant 0.254829586 : f32
    %197 = vector.broadcast %cst_92 : f32 to vector<40x128xf32>
    %198 = arith.addf %196, %197 : vector<40x128xf32>
    %199 = arith.mulf %198, %185 : vector<40x128xf32>
    %cst_93 = arith.constant 0.000000e+00 : f32
    %200 = vector.broadcast %cst_93 : f32 to vector<40x128xf32>
    %201 = arith.subf %200, %180 : vector<40x128xf32>
    %202 = arith.mulf %201, %180 : vector<40x128xf32>
    %203 = math.exp %202 : vector<40x128xf32>
    %204 = arith.mulf %199, %203 : vector<40x128xf32>
    %cst_94 = arith.constant 1.000000e+00 : f32
    %205 = vector.broadcast %cst_94 : f32 to vector<40x128xf32>
    %206 = arith.subf %205, %204 : vector<40x128xf32>
    %cst_95 = arith.constant 0.000000e+00 : f32
    %207 = vector.broadcast %cst_95 : f32 to vector<40x128xf32>
    %208 = arith.cmpf oge, %179, %207 : vector<40x128xf32>
    %cst_96 = arith.constant 0.000000e+00 : f32
    %209 = vector.broadcast %cst_96 : f32 to vector<40x128xf32>
    %210 = arith.subf %209, %206 : vector<40x128xf32>
    %211 = arith.select %208, %206, %210 : vector<40x128xi1>, vector<40x128xf32>
    %cst_97 = arith.constant 1.000000e+00 : f32
    %212 = vector.broadcast %cst_97 : f32 to vector<40x128xf32>
    %213 = arith.addf %212, %211 : vector<40x128xf32>
    %214 = arith.mulf %177, %213 : vector<40x128xf32>
    %215 = arith.truncf %214 : vector<40x128xf32> to vector<40x128xbf16>
    %c0_98 = arith.constant 0 : index
    %c0_99 = arith.constant 0 : index
    %c0_100 = arith.constant 0 : index
    %216 = vector.load %arg17[%c0_98, %c0_99, %c0_100] : memref<1x128x32xbf16, #tpu.memory_space<vmem>>, vector<1x128x32xbf16>
    %217 = vector.shape_cast %216 : vector<1x128x32xbf16> to vector<128x32xbf16>
    %cst_101 = arith.constant dense<0.000000e+00> : vector<40x32xf32>
    %218 = tpu.matmul %215, %217, %cst_101 {dimension_numbers = #tpu.dot_dimension_numbers<[1], [0], [0], [1], [0, 0, 1, 1], [], []>} : vector<40x128xbf16>, vector<128x32xbf16>, vector<40x32xf32> -> vector<40x32xf32>
    %c0_102 = arith.constant 0 : index
    %c0_103 = arith.constant 0 : index
    %c0_104 = arith.constant 0 : index
    %219 = vector.load %arg18[%c0_102, %c0_103, %c0_104] : memref<1x1x32xf32, #tpu.memory_space<vmem>>, vector<1x1x32xf32>
    %220 = vector.shape_cast %219 : vector<1x1x32xf32> to vector<1x32xf32>
    %221 = vector.broadcast %220 : vector<1x32xf32> to vector<40x32xf32>
    %222 = arith.addf %218, %221 : vector<40x32xf32>
    %223 = arith.addf %143, %222 : vector<40x32xf32>
    %c0_105 = arith.constant 0 : index
    %c0_106 = arith.constant 0 : index
    %224 = vector.load %arg20[%c0_105, %c0_106] : memref<40x32xf32, #tpu.memory_space<vmem>>, vector<40x32xf32>
    tpu.vector_store %arg20[%c0_105, %c0_106], %223 {strides = array<i32>} : memref<40x32xf32, #tpu.memory_space<vmem>>, vector<40x32xf32>,
    %c1_i32 = arith.constant 1 : i32
    %225 = arith.cmpi eq, %arg1, %c1_i32 : i32
    %226 = arith.extui %225 : i1 to i32
    %c0_i32_107 = arith.constant 0 : i32
    %227 = arith.cmpi ne, %226, %c0_i32_107 : i32
    scf.if %227 {
      %c0_108 = arith.constant 0 : index
      %c0_109 = arith.constant 0 : index
      %228 = vector.load %arg20[%c0_108, %c0_109] : memref<40x32xf32, #tpu.memory_space<vmem>>, vector<40x32xf32>
      %229 = vector.shape_cast %228 : vector<40x32xf32> to vector<1x40x32xf32>
      %c0_110 = arith.constant 0 : index
      %c0_111 = arith.constant 0 : index
      %c0_112 = arith.constant 0 : index
      %230 = vector.load %arg19[%c0_110, %c0_111, %c0_112] : memref<1x40x32xf32, #tpu.memory_space<vmem>>, vector<1x40x32xf32>
      tpu.vector_store %arg19[%c0_110, %c0_111, %c0_112], %229 {strides = array<i32>} : memref<1x40x32xf32, #tpu.memory_space<vmem>>, vector<1x40x32xf32>,
    } else {
    }
    return
  }
  func.func @transform_0(%arg0: i32, %arg1: i32) -> (i32, i32, i32) {
    %c0_i32 = arith.constant 0 : i32
    %c0_i32_0 = arith.constant 0 : i32
    %c0_i32_1 = arith.constant 0 : i32
    return %arg0, %c0_i32, %c0_i32_0 : i32, i32, i32
  }
  func.func @transform_1(%arg0: i32, %arg1: i32) -> (i32, i32, i32) {
    %c0_i32 = arith.constant 0 : i32
    %c0_i32_0 = arith.constant 0 : i32
    %c0_i32_1 = arith.constant 0 : i32
    return %arg1, %c0_i32, %c0_i32_0 : i32, i32, i32
  }
  func.func @transform_2(%arg0: i32, %arg1: i32) -> (i32, i32, i32) {
    %c0_i32 = arith.constant 0 : i32
    %c0_i32_0 = arith.constant 0 : i32
    %c0_i32_1 = arith.constant 0 : i32
    return %arg1, %c0_i32, %c0_i32_0 : i32, i32, i32
  }
  func.func @transform_3(%arg0: i32, %arg1: i32) -> (i32, i32, i32) {
    %c0_i32 = arith.constant 0 : i32
    %c0_i32_0 = arith.constant 0 : i32
    %c0_i32_1 = arith.constant 0 : i32
    return %arg1, %c0_i32, %c0_i32_0 : i32, i32, i32
  }
  func.func @transform_4(%arg0: i32, %arg1: i32) -> (i32, i32, i32) {
    %c0_i32 = arith.constant 0 : i32
    %c0_i32_0 = arith.constant 0 : i32
    %c0_i32_1 = arith.constant 0 : i32
    return %arg1, %c0_i32, %c0_i32_0 : i32, i32, i32
  }
  func.func @transform_5(%arg0: i32, %arg1: i32) -> (i32, i32, i32) {
    %c0_i32 = arith.constant 0 : i32
    %c0_i32_0 = arith.constant 0 : i32
    %c0_i32_1 = arith.constant 0 : i32
    return %arg1, %c0_i32, %c0_i32_0 : i32, i32, i32
  }
  func.func @transform_6(%arg0: i32, %arg1: i32) -> (i32, i32, i32) {
    %c0_i32 = arith.constant 0 : i32
    %c0_i32_0 = arith.constant 0 : i32
    %c0_i32_1 = arith.constant 0 : i32
    return %arg1, %c0_i32, %c0_i32_0 : i32, i32, i32
  }
  func.func @transform_7(%arg0: i32, %arg1: i32) -> (i32, i32, i32) {
    %c0_i32 = arith.constant 0 : i32
    %c0_i32_0 = arith.constant 0 : i32
    %c0_i32_1 = arith.constant 0 : i32
    return %arg1, %c0_i32, %c0_i32_0 : i32, i32, i32
  }
  func.func @transform_8(%arg0: i32, %arg1: i32) -> (i32, i32, i32) {
    %c0_i32 = arith.constant 0 : i32
    %c0_i32_0 = arith.constant 0 : i32
    %c0_i32_1 = arith.constant 0 : i32
    return %arg1, %c0_i32, %c0_i32_0 : i32, i32, i32
  }
  func.func @transform_9(%arg0: i32, %arg1: i32) -> (i32, i32, i32) {
    %c0_i32 = arith.constant 0 : i32
    %c0_i32_0 = arith.constant 0 : i32
    %c0_i32_1 = arith.constant 0 : i32
    return %arg1, %c0_i32, %c0_i32_0 : i32, i32, i32
  }
  func.func @transform_10(%arg0: i32, %arg1: i32) -> (i32, i32, i32) {
    %c0_i32 = arith.constant 0 : i32
    %c0_i32_0 = arith.constant 0 : i32
    %c0_i32_1 = arith.constant 0 : i32
    return %arg1, %c0_i32, %c0_i32_0 : i32, i32, i32
  }
  func.func @transform_11(%arg0: i32, %arg1: i32) -> (i32, i32, i32) {
    %c0_i32 = arith.constant 0 : i32
    %c0_i32_0 = arith.constant 0 : i32
    %c0_i32_1 = arith.constant 0 : i32
    return %arg1, %c0_i32, %c0_i32_0 : i32, i32, i32
  }
  func.func @transform_12(%arg0: i32, %arg1: i32) -> (i32, i32, i32) {
    %c0_i32 = arith.constant 0 : i32
    %c0_i32_0 = arith.constant 0 : i32
    %c0_i32_1 = arith.constant 0 : i32
    return %arg1, %c0_i32, %c0_i32_0 : i32, i32, i32
  }
  func.func @transform_13(%arg0: i32, %arg1: i32) -> (i32, i32, i32) {
    %c0_i32 = arith.constant 0 : i32
    %c0_i32_0 = arith.constant 0 : i32
    %c0_i32_1 = arith.constant 0 : i32
    return %arg1, %c0_i32, %c0_i32_0 : i32, i32, i32
  }
  func.func @transform_14(%arg0: i32, %arg1: i32) -> (i32, i32, i32) {
    %c0_i32 = arith.constant 0 : i32
    %c0_i32_0 = arith.constant 0 : i32
    %c0_i32_1 = arith.constant 0 : i32
    return %arg1, %c0_i32, %c0_i32_0 : i32, i32, i32
  }
  func.func @transform_15(%arg0: i32, %arg1: i32) -> (i32, i32, i32) {
    %c0_i32 = arith.constant 0 : i32
    %c0_i32_0 = arith.constant 0 : i32
    %c0_i32_1 = arith.constant 0 : i32
    return %arg1, %c0_i32, %c0_i32_0 : i32, i32, i32
  }
  func.func @transform_16(%arg0: i32, %arg1: i32) -> (i32, i32, i32) {
    %c0_i32 = arith.constant 0 : i32
    %c0_i32_0 = arith.constant 0 : i32
    %c0_i32_1 = arith.constant 0 : i32
    return %arg1, %c0_i32, %c0_i32_0 : i32, i32, i32
  }
  func.func @transform_17(%arg0: i32, %arg1: i32) -> (i32, i32, i32) {
    %c0_i32 = arith.constant 0 : i32
    %c0_i32_0 = arith.constant 0 : i32
    %c0_i32_1 = arith.constant 0 : i32
    return %arg0, %c0_i32, %c0_i32_0 : i32, i32, i32
  }
}

</mosaic_0001>

<llo_original>
// kernel: tpu_custom_call.1
$region0: #{tpu_custom_call.1}
  #allocation0 [shape = 'u32[]', space=smem, size = 0x4, offset = 0x4, fixed_abs, tag = 'smem constant byte address 0x4 - core index']
  #allocation1 [shape = 'u32[72,128]{1,0:T(1,128)}', space=vmem, size = 0x9000, scoped, tag = 'internal scratch']
  #allocation2 [shape = 'f32[40,32]{1,0:T(8,128)}', space=vmem, size = 0x5000, scoped, tag = 'scratch operand']
  #allocation3 [shape = 'f32[40,40]{1,0:T(8,128)}', space=vmem, size = 0x5000, scoped, tag = 'scratch operand']
  %s0 = inlined_call_operand.vmem [shape: f32[2,40,32], index: 0, kind: input, shape index: {}, may-alias: {0,17}]
  %s1 = inlined_call_operand.vmem [shape: f32[2,1,32], index: 1, kind: input, shape index: {}]
  %s2 = inlined_call_operand.vmem [shape: f32[2,1,32], index: 2, kind: input, shape index: {}]
  %s3 = inlined_call_operand.vmem [shape: bf16[2,32,32], index: 3, kind: input, shape index: {}]
  %s4 = inlined_call_operand.vmem [shape: f32[2,1,32], index: 4, kind: input, shape index: {}]
  %s5 = inlined_call_operand.vmem [shape: bf16[2,32,32], index: 5, kind: input, shape index: {}]
  %s6 = inlined_call_operand.vmem [shape: f32[2,1,32], index: 6, kind: input, shape index: {}]
  %s7 = inlined_call_operand.vmem [shape: bf16[2,32,32], index: 7, kind: input, shape index: {}]
  %s8 = inlined_call_operand.vmem [shape: f32[2,1,32], index: 8, kind: input, shape index: {}]
  %s9 = inlined_call_operand.vmem [shape: bf16[2,32,32], index: 9, kind: input, shape index: {}]
  %s10 = inlined_call_operand.vmem [shape: f32[2,1,32], index: 10, kind: input, shape index: {}]
  %s11 = inlined_call_operand.vmem [shape: f32[2,1,32], index: 11, kind: input, shape index: {}]
  %s12 = inlined_call_operand.vmem [shape: f32[2,1,32], index: 12, kind: input, shape index: {}]
  %s13 = inlined_call_operand.vmem [shape: bf16[2,32,128], index: 13, kind: input, shape index: {}]
  %s14 = inlined_call_operand.vmem [shape: f32[2,1,128], index: 14, kind: input, shape index: {}]
  %s15 = inlined_call_operand.vmem [shape: bf16[2,128,32], index: 15, kind: input, shape index: {}]
  %s16 = inlined_call_operand.vmem [shape: f32[2,1,32], index: 16, kind: input, shape index: {}]
  %s17 = inlined_call_operand.vmem [shape: f32[2,40,32], index: 17, kind: output, shape index: {}, may-alias: {0,17}]
  %s18 = sld [smem:[#allocation0]]
  $region109: #{tpu_custom_call.1} parent=0
    _
  %s20 = ssub.s32 1, %s18
  %s21 = scalar_select 0, %s20, %s18
  loop: start=0, step=1, limit=6
  $region2: #{tpu_custom_call.1} parent=0 // loop_pre_header
    _
  $region3: #{tpu_custom_call.1} parent=0 // loop_header
    %s23 = sphi 0, %s27
    %p24 = scmp.ge.s32.totalorder %s23, 6
    %s30 = sphi 0, %s42
    %s31 = sphi 0, %s38
    %s32 = sphi 0, %s30
    %s33 = sphi 0, %s31
    %s34 = sphi 0, %s32
    %s35 = sphi 0, %s33
    %s45 = sphi 0, %s47
    %s48 = sphi 0, %s45
    %s49 = sphi 0, %s48
    %s65 = sphi 0, %s49
    %s71 = sphi 0, %s73
    %s74 = sphi 0, %s71
    %s75 = sphi 0, %s74
    %s91 = sphi 0, %s75
    %s97 = sphi 0, %s99
    %s100 = sphi 0, %s97
    %s101 = sphi 0, %s100
    %s117 = sphi 0, %s101
    %s123 = sphi 0, %s125
    %s126 = sphi 0, %s123
    %s127 = sphi 0, %s126
    %s143 = sphi 0, %s127
    %s149 = sphi 0, %s151
    %s152 = sphi 0, %s149
    %s153 = sphi 0, %s152
    %s169 = sphi 0, %s153
    %s175 = sphi 0, %s177
    %s178 = sphi 0, %s175
    %s179 = sphi 0, %s178
    %s195 = sphi 0, %s179
    %s201 = sphi 0, %s203
    %s204 = sphi 0, %s201
    %s205 = sphi 0, %s204
    %s221 = sphi 0, %s205
    %s227 = sphi 0, %s229
    %s230 = sphi 0, %s227
    %s231 = sphi 0, %s230
    %s247 = sphi 0, %s231
    %s253 = sphi 0, %s255
    %s256 = sphi 0, %s253
    %s257 = sphi 0, %s256
    %s273 = sphi 0, %s257
    %s279 = sphi 0, %s281
    %s282 = sphi 0, %s279
    %s283 = sphi 0, %s282
    %s299 = sphi 0, %s283
    %s305 = sphi 0, %s307
    %s308 = sphi 0, %s305
    %s309 = sphi 0, %s308
    %s325 = sphi 0, %s309
    %s331 = sphi 0, %s333
    %s334 = sphi 0, %s331
    %s335 = sphi 0, %s334
    %s351 = sphi 0, %s335
    %s357 = sphi 0, %s359
    %s360 = sphi 0, %s357
    %s361 = sphi 0, %s360
    %s377 = sphi 0, %s361
    %s383 = sphi 0, %s385
    %s386 = sphi 0, %s383
    %s387 = sphi 0, %s386
    %s403 = sphi 0, %s387
    %s409 = sphi 0, %s411
    %s412 = sphi 0, %s409
    %s413 = sphi 0, %s412
    %s429 = sphi 0, %s413
    %s435 = sphi 0, %s437
    %s438 = sphi 0, %s435
    %s439 = sphi 0, %s438
    %s455 = sphi 0, %s439
    %s461 = sphi 0, %s463
    %s464 = sphi 0, %s461
    %s465 = sphi 0, %s464
    %s481 = sphi 0, %s465
    %s487 = sphi 0, %s489
    %s490 = sphi 0, %s487
    %s491 = sphi 0, %s490
    %s507 = sphi 0, %s491
  $region4: #{tpu_custom_call.1} parent=0 // loop_header_branch
    %26 = sbr.rel (%p24) target = $region8
  $region5: #{tpu_custom_call.1} parent=0 // loop_body
    %s28 = ssub.s32 %s23, 1
    %s29 = ssub.s32 %s23, 2
    %s36 = sadd.s32 1, %s31
    %p37 = scmp.ge.s32.totalorder %s36, 2
    %s38 = scalar_select %p37, 0, %s36
    %s39 = sadd.s32 1, %s30
    %s40 = scalar_select %p37, %s39, %s30
    %p41 = scmp.ge.s32.totalorder %s40, 2
    %s42 = scalar_select %p41, 0, %s40
    %s43 = ssub.s32 %s30, %s42
    %p44 = scmp.eq.s32.totalorder %s43, 0
    %s46 = sadd.s32 %s45, 1
    %s47 = scalar_select %p44, %s45, %s46
    %p50 = pneg %p44
    %p51 = scmp.eq.s32.totalorder %s23, 3
    %p52 = por %p50, %p51
    %p53 = scmp.ne.s32.totalorder %s45, %s48
    %p54 = scmp.eq.s32.totalorder %s23, 0
    %p55 = por %p53, %p54
    %p56 = scmp.ne.s32.totalorder %s45, %s48
    %p57 = scmp.eq.s32.totalorder %s28, 3
    %p58 = por %p56, %p57
    %p59 = scmp.ne.s32.totalorder %s48, %s49
    %p60 = scmp.eq.s32.totalorder %s28, 0
    %p61 = por %p59, %p60
    %p62 = scmp.ne.s32.totalorder %s48, %s49
    %p63 = scmp.eq.s32.totalorder %s29, 3
    %p64 = por %p62, %p63
    %p66 = scmp.ne.s32.totalorder %s49, %s65
    %p67 = scmp.eq.s32.totalorder %s29, 0
    %p68 = por %p66, %p67
    %s69 = ssub.s32 %s31, %s38
    %p70 = scmp.eq.s32.totalorder %s69, 0
    %s72 = sadd.s32 %s71, 1
    %s73 = scalar_select %p70, %s71, %s72
    %p76 = pneg %p70
    %p77 = scmp.eq.s32.totalorder %s23, 3
    %p78 = por %p76, %p77
    %p79 = scmp.ne.s32.totalorder %s71, %s74
    %p80 = scmp.eq.s32.totalorder %s23, 0
    %p81 = por %p79, %p80
    %p82 = scmp.ne.s32.totalorder %s71, %s74
    %p83 = scmp.eq.s32.totalorder %s28, 3
    %p84 = por %p82, %p83
    %p85 = scmp.ne.s32.totalorder %s74, %s75
    %p86 = scmp.eq.s32.totalorder %s28, 0
    %p87 = por %p85, %p86
    %p88 = scmp.ne.s32.totalorder %s74, %s75
    %p89 = scmp.eq.s32.totalorder %s29, 3
    %p90 = por %p88, %p89
    %p92 = scmp.ne.s32.totalorder %s75, %s91
    %p93 = scmp.eq.s32.totalorder %s29, 0
    %p94 = por %p92, %p93
    %s95 = ssub.s32 %s31, %s38
    %p96 = scmp.eq.s32.totalorder %s95, 0
    %s98 = sadd.s32 %s97, 1
    %s99 = scalar_select %p96, %s97, %s98
    %p102 = pneg %p96
    %p103 = scmp.eq.s32.totalorder %s23, 3
    %p104 = por %p102, %p103
    %p105 = scmp.ne.s32.totalorder %s97, %s100
    %p106 = scmp.eq.s32.totalorder %s23, 0
    %p107 = por %p105, %p106
    %p108 = scmp.ne.s32.totalorder %s97, %s100
    %p109 = scmp.eq.s32.totalorder %s28, 3
    %p110 = por %p108, %p109
    %p111 = scmp.ne.s32.totalorder %s100, %s101
    %p112 = scmp.eq.s32.totalorder %s28, 0
    %p113 = por %p111, %p112
    %p114 = scmp.ne.s32.totalorder %s100, %s101
    %p115 = scmp.eq.s32.totalorder %s29, 3
    %p116 = por %p114, %p115
    %p118 = scmp.ne.s32.totalorder %s101, %s117
    %p119 = scmp.eq.s32.totalorder %s29, 0
    %p120 = por %p118, %p119
    %s121 = ssub.s32 %s31, %s38
    %p122 = scmp.eq.s32.totalorder %s121, 0
    %s124 = sadd.s32 %s123, 1
    %s125 = scalar_select %p122, %s123, %s124
    %p128 = pneg %p122
    %p129 = scmp.eq.s32.totalorder %s23, 3
    %p130 = por %p128, %p129
    %p131 = scmp.ne.s32.totalorder %s123, %s126
    %p132 = scmp.eq.s32.totalorder %s23, 0
    %p133 = por %p131, %p132
    %p134 = scmp.ne.s32.totalorder %s123, %s126
    %p135 = scmp.eq.s32.totalorder %s28, 3
    %p136 = por %p134, %p135
    %p137 = scmp.ne.s32.totalorder %s126, %s127
    %p138 = scmp.eq.s32.totalorder %s28, 0
    %p139 = por %p137, %p138
    %p140 = scmp.ne.s32.totalorder %s126, %s127
    %p141 = scmp.eq.s32.totalorder %s29, 3
    %p142 = por %p140, %p141
    %p144 = scmp.ne.s32.totalorder %s127, %s143
    %p145 = scmp.eq.s32.totalorder %s29, 0
    %p146 = por %p144, %p145
    %s147 = ssub.s32 %s31, %s38
    %p148 = scmp.eq.s32.totalorder %s147, 0
    %s150 = sadd.s32 %s149, 1
    %s151 = scalar_select %p148, %s149, %s150
    %p154 = pneg %p148
    %p155 = scmp.eq.s32.totalorder %s23, 3
    %p156 = por %p154, %p155
    %p157 = scmp.ne.s32.totalorder %s149, %s152
    %p158 = scmp.eq.s32.totalorder %s23, 0
    %p159 = por %p157, %p158
    %p160 = scmp.ne.s32.totalorder %s149, %s152
    %p161 = scmp.eq.s32.totalorder %s28, 3
    %p162 = por %p160, %p161
    %p163 = scmp.ne.s32.totalorder %s152, %s153
    %p164 = scmp.eq.s32.totalorder %s28, 0
    %p165 = por %p163, %p164
    %p166 = scmp.ne.s32.totalorder %s152, %s153
    %p167 = scmp.eq.s32.totalorder %s29, 3
    %p168 = por %p166, %p167
    %p170 = scmp.ne.s32.totalorder %s153, %s169
    %p171 = scmp.eq.s32.totalorder %s29, 0
    %p172 = por %p170, %p171
    %s173 = ssub.s32 %s31, %s38
    %p174 = scmp.eq.s32.totalorder %s173, 0
    %s176 = sadd.s32 %s175, 1
    %s177 = scalar_select %p174, %s175, %s176
    %p180 = pneg %p174
    %p181 = scmp.eq.s32.totalorder %s23, 3
    %p182 = por %p180, %p181
    %p183 = scmp.ne.s32.totalorder %s175, %s178
    %p184 = scmp.eq.s32.totalorder %s23, 0
    %p185 = por %p183, %p184
    %p186 = scmp.ne.s32.totalorder %s175, %s178
    %p187 = scmp.eq.s32.totalorder %s28, 3
    %p188 = por %p186, %p187
    %p189 = scmp.ne.s32.totalorder %s178, %s179
    %p190 = scmp.eq.s32.totalorder %s28, 0
    %p191 = por %p189, %p190
    %p192 = scmp.ne.s32.totalorder %s178, %s179
    %p193 = scmp.eq.s32.totalorder %s29, 3
    %p194 = por %p192, %p193
    %p196 = scmp.ne.s32.totalorder %s179, %s195
    %p197 = scmp.eq.s32.totalorder %s29, 0
    %p198 = por %p196, %p197
    %s199 = ssub.s32 %s31, %s38
    %p200 = scmp.eq.s32.totalorder %s199, 0
    %s202 = sadd.s32 %s201, 1
    %s203 = scalar_select %p200, %s201, %s202
    %p206 = pneg %p200
    %p207 = scmp.eq.s32.totalorder %s23, 3
    %p208 = por %p206, %p207
    %p209 = scmp.ne.s32.totalorder %s201, %s204
    %p210 = scmp.eq.s32.totalorder %s23, 0
    %p211 = por %p209, %p210
    %p212 = scmp.ne.s32.totalorder %s201, %s204
    %p213 = scmp.eq.s32.totalorder %s28, 3
    %p214 = por %p212, %p213
    %p215 = scmp.ne.s32.totalorder %s204, %s205
    %p216 = scmp.eq.s32.totalorder %s28, 0
    %p217 = por %p215, %p216
    %p218 = scmp.ne.s32.totalorder %s204, %s205
    %p219 = scmp.eq.s32.totalorder %s29, 3
    %p220 = por %p218, %p219
    %p222 = scmp.ne.s32.totalorder %s205, %s221
    %p223 = scmp.eq.s32.totalorder %s29, 0
    %p224 = por %p222, %p223
    %s225 = ssub.s32 %s31, %s38
    %p226 = scmp.eq.s32.totalorder %s225, 0
    %s228 = sadd.s32 %s227, 1
    %s229 = scalar_select %p226, %s227, %s228
    %p232 = pneg %p226
    %p233 = scmp.eq.s32.totalorder %s23, 3
    %p234 = por %p232, %p233
    %p235 = scmp.ne.s32.totalorder %s227, %s230
    %p236 = scmp.eq.s32.totalorder %s23, 0
    %p237 = por %p235, %p236
    %p238 = scmp.ne.s32.totalorder %s227, %s230
    %p239 = scmp.eq.s32.totalorder %s28, 3
    %p240 = por %p238, %p239
    %p241 = scmp.ne.s32.totalorder %s230, %s231
    %p242 = scmp.eq.s32.totalorder %s28, 0
    %p243 = por %p241, %p242
    %p244 = scmp.ne.s32.totalorder %s230, %s231
    %p245 = scmp.eq.s32.totalorder %s29, 3
    %p246 = por %p244, %p245
    %p248 = scmp.ne.s32.totalorder %s231, %s247
    %p249 = scmp.eq.s32.totalorder %s29, 0
    %p250 = por %p248, %p249
    %s251 = ssub.s32 %s31, %s38
    %p252 = scmp.eq.s32.totalorder %s251, 0
    %s254 = sadd.s32 %s253, 1
    %s255 = scalar_select %p252, %s253, %s254
    %p258 = pneg %p252
    %p259 = scmp.eq.s32.totalorder %s23, 3
    %p260 = por %p258, %p259
    %p261 = scmp.ne.s32.totalorder %s253, %s256
    %p262 = scmp.eq.s32.totalorder %s23, 0
    %p263 = por %p261, %p262
    %p264 = scmp.ne.s32.totalorder %s253, %s256
    %p265 = scmp.eq.s32.totalorder %s28, 3
    %p266 = por %p264, %p265
    %p267 = scmp.ne.s32.totalorder %s256, %s257
    %p268 = scmp.eq.s32.totalorder %s28, 0
    %p269 = por %p267, %p268
    %p270 = scmp.ne.s32.totalorder %s256, %s257
    %p271 = scmp.eq.s32.totalorder %s29, 3
    %p272 = por %p270, %p271
    %p274 = scmp.ne.s32.totalorder %s257, %s273
    %p275 = scmp.eq.s32.totalorder %s29, 0
    %p276 = por %p274, %p275
    %s277 = ssub.s32 %s31, %s38
    %p278 = scmp.eq.s32.totalorder %s277, 0
    %s280 = sadd.s32 %s279, 1
    %s281 = scalar_select %p278, %s279, %s280
    %p284 = pneg %p278
    %p285 = scmp.eq.s32.totalorder %s23, 3
    %p286 = por %p284, %p285
    %p287 = scmp.ne.s32.totalorder %s279, %s282
    %p288 = scmp.eq.s32.totalorder %s23, 0
    %p289 = por %p287, %p288
    %p290 = scmp.ne.s32.totalorder %s279, %s282
    %p291 = scmp.eq.s32.totalorder %s28, 3
    %p292 = por %p290, %p291
    %p293 = scmp.ne.s32.totalorder %s282, %s283
    %p294 = scmp.eq.s32.totalorder %s28, 0
    %p295 = por %p293, %p294
    %p296 = scmp.ne.s32.totalorder %s282, %s283
    %p297 = scmp.eq.s32.totalorder %s29, 3
    %p298 = por %p296, %p297
    %p300 = scmp.ne.s32.totalorder %s283, %s299
    %p301 = scmp.eq.s32.totalorder %s29, 0
    %p302 = por %p300, %p301
    %s303 = ssub.s32 %s31, %s38
    %p304 = scmp.eq.s32.totalorder %s303, 0
    %s306 = sadd.s32 %s305, 1
    %s307 = scalar_select %p304, %s305, %s306
    %p310 = pneg %p304
    %p311 = scmp.eq.s32.totalorder %s23, 3
    %p312 = por %p310, %p311
    %p313 = scmp.ne.s32.totalorder %s305, %s308
    %p314 = scmp.eq.s32.totalorder %s23, 0
    %p315 = por %p313, %p314
    %p316 = scmp.ne.s32.totalorder %s305, %s308
    %p317 = scmp.eq.s32.totalorder %s28, 3
    %p318 = por %p316, %p317
    %p319 = scmp.ne.s32.totalorder %s308, %s309
    %p320 = scmp.eq.s32.totalorder %s28, 0
    %p321 = por %p319, %p320
    %p322 = scmp.ne.s32.totalorder %s308, %s309
    %p323 = scmp.eq.s32.totalorder %s29, 3
    %p324 = por %p322, %p323
    %p326 = scmp.ne.s32.totalorder %s309, %s325
    %p327 = scmp.eq.s32.totalorder %s29, 0
    %p328 = por %p326, %p327
    %s329 = ssub.s32 %s31, %s38
    %p330 = scmp.eq.s32.totalorder %s329, 0
    %s332 = sadd.s32 %s331, 1
    %s333 = scalar_select %p330, %s331, %s332
    %p336 = pneg %p330
    %p337 = scmp.eq.s32.totalorder %s23, 3
    %p338 = por %p336, %p337
    %p339 = scmp.ne.s32.totalorder %s331, %s334
    %p340 = scmp.eq.s32.totalorder %s23, 0
    %p341 = por %p339, %p340
    %p342 = scmp.ne.s32.totalorder %s331, %s334
    %p343 = scmp.eq.s32.totalorder %s28, 3
    %p344 = por %p342, %p343
    %p345 = scmp.ne.s32.totalorder %s334, %s335
    %p346 = scmp.eq.s32.totalorder %s28, 0
    %p347 = por %p345, %p346
    %p348 = scmp.ne.s32.totalorder %s334, %s335
    %p349 = scmp.eq.s32.totalorder %s29, 3
    %p350 = por %p348, %p349
    %p352 = scmp.ne.s32.totalorder %s335, %s351
    %p353 = scmp.eq.s32.totalorder %s29, 0
    %p354 = por %p352, %p353
    %s355 = ssub.s32 %s31, %s38
    %p356 = scmp.eq.s32.totalorder %s355, 0
    %s358 = sadd.s32 %s357, 1
    %s359 = scalar_select %p356, %s357, %s358
    %p362 = pneg %p356
    %p363 = scmp.eq.s32.totalorder %s23, 3
    %p364 = por %p362, %p363
    %p365 = scmp.ne.s32.totalorder %s357, %s360
    %p366 = scmp.eq.s32.totalorder %s23, 0
    %p367 = por %p365, %p366
    %p368 = scmp.ne.s32.totalorder %s357, %s360
    %p369 = scmp.eq.s32.totalorder %s28, 3
    %p370 = por %p368, %p369
    %p371 = scmp.ne.s32.totalorder %s360, %s361
    %p372 = scmp.eq.s32.totalorder %s28, 0
    %p373 = por %p371, %p372
    %p374 = scmp.ne.s32.totalorder %s360, %s361
    %p375 = scmp.eq.s32.totalorder %s29, 3
    %p376 = por %p374, %p375
    %p378 = scmp.ne.s32.totalorder %s361, %s377
    %p379 = scmp.eq.s32.totalorder %s29, 0
    %p380 = por %p378, %p379
    %s381 = ssub.s32 %s31, %s38
    %p382 = scmp.eq.s32.totalorder %s381, 0
    %s384 = sadd.s32 %s383, 1
    %s385 = scalar_select %p382, %s383, %s384
    %p388 = pneg %p382
    %p389 = scmp.eq.s32.totalorder %s23, 3
    %p390 = por %p388, %p389
    %p391 = scmp.ne.s32.totalorder %s383, %s386
    %p392 = scmp.eq.s32.totalorder %s23, 0
    %p393 = por %p391, %p392
    %p394 = scmp.ne.s32.totalorder %s383, %s386
    %p395 = scmp.eq.s32.totalorder %s28, 3
    %p396 = por %p394, %p395
    %p397 = scmp.ne.s32.totalorder %s386, %s387
    %p398 = scmp.eq.s32.totalorder %s28, 0
    %p399 = por %p397, %p398
    %p400 = scmp.ne.s32.totalorder %s386, %s387
    %p401 = scmp.eq.s32.totalorder %s29, 3
    %p402 = por %p400, %p401
    %p404 = scmp.ne.s32.totalorder %s387, %s403
    %p405 = scmp.eq.s32.totalorder %s29, 0
    %p406 = por %p404, %p405
    %s407 = ssub.s32 %s31, %s38
    %p408 = scmp.eq.s32.totalorder %s407, 0
    %s410 = sadd.s32 %s409, 1
    %s411 = scalar_select %p408, %s409, %s410
    %p414 = pneg %p408
    %p415 = scmp.eq.s32.totalorder %s23, 3
    %p416 = por %p414, %p415
    %p417 = scmp.ne.s32.totalorder %s409, %s412
    %p418 = scmp.eq.s32.totalorder %s23, 0
    %p419 = por %p417, %p418
    %p420 = scmp.ne.s32.totalorder %s409, %s412
    %p421 = scmp.eq.s32.totalorder %s28, 3
    %p422 = por %p420, %p421
    %p423 = scmp.ne.s32.totalorder %s412, %s413
    %p424 = scmp.eq.s32.totalorder %s28, 0
    %p425 = por %p423, %p424
    %p426 = scmp.ne.s32.totalorder %s412, %s413
    %p427 = scmp.eq.s32.totalorder %s29, 3
    %p428 = por %p426, %p427
    %p430 = scmp.ne.s32.totalorder %s413, %s429
    %p431 = scmp.eq.s32.totalorder %s29, 0
    %p432 = por %p430, %p431
    %s433 = ssub.s32 %s31, %s38
    %p434 = scmp.eq.s32.totalorder %s433, 0
    %s436 = sadd.s32 %s435, 1
    %s437 = scalar_select %p434, %s435, %s436
    %p440 = pneg %p434
    %p441 = scmp.eq.s32.totalorder %s23, 3
    %p442 = por %p440, %p441
    %p443 = scmp.ne.s32.totalorder %s435, %s438
    %p444 = scmp.eq.s32.totalorder %s23, 0
    %p445 = por %p443, %p444
    %p446 = scmp.ne.s32.totalorder %s435, %s438
    %p447 = scmp.eq.s32.totalorder %s28, 3
    %p448 = por %p446, %p447
    %p449 = scmp.ne.s32.totalorder %s438, %s439
    %p450 = scmp.eq.s32.totalorder %s28, 0
    %p451 = por %p449, %p450
    %p452 = scmp.ne.s32.totalorder %s438, %s439
    %p453 = scmp.eq.s32.totalorder %s29, 3
    %p454 = por %p452, %p453
    %p456 = scmp.ne.s32.totalorder %s439, %s455
    %p457 = scmp.eq.s32.totalorder %s29, 0
    %p458 = por %p456, %p457
    %s459 = ssub.s32 %s31, %s38
    %p460 = scmp.eq.s32.totalorder %s459, 0
    %s462 = sadd.s32 %s461, 1
    %s463 = scalar_select %p460, %s461, %s462
    %p466 = pneg %p460
    %p467 = scmp.eq.s32.totalorder %s23, 3
    %p468 = por %p466, %p467
    %p469 = scmp.ne.s32.totalorder %s461, %s464
    %p470 = scmp.eq.s32.totalorder %s23, 0
    %p471 = por %p469, %p470
    %p472 = scmp.ne.s32.totalorder %s461, %s464
    %p473 = scmp.eq.s32.totalorder %s28, 3
    %p474 = por %p472, %p473
    %p475 = scmp.ne.s32.totalorder %s464, %s465
    %p476 = scmp.eq.s32.totalorder %s28, 0
    %p477 = por %p475, %p476
    %p478 = scmp.ne.s32.totalorder %s464, %s465
    %p479 = scmp.eq.s32.totalorder %s29, 3
    %p480 = por %p478, %p479
    %p482 = scmp.ne.s32.totalorder %s465, %s481
    %p483 = scmp.eq.s32.totalorder %s29, 0
    %p484 = por %p482, %p483
    %s485 = ssub.s32 %s30, %s42
    %p486 = scmp.eq.s32.totalorder %s485, 0
    %s488 = sadd.s32 %s487, 1
    %s489 = scalar_select %p486, %s487, %s488
    %p492 = pneg %p486
    %p493 = scmp.eq.s32.totalorder %s23, 3
    %p494 = por %p492, %p493
    %p495 = scmp.ne.s32.totalorder %s487, %s490
    %p496 = scmp.eq.s32.totalorder %s23, 0
    %p497 = por %p495, %p496
    %p498 = scmp.ne.s32.totalorder %s487, %s490
    %p499 = scmp.eq.s32.totalorder %s28, 3
    %p500 = por %p498, %p499
    %p501 = scmp.ne.s32.totalorder %s490, %s491
    %p502 = scmp.eq.s32.totalorder %s28, 0
    %p503 = por %p501, %p502
    %p504 = scmp.ne.s32.totalorder %s490, %s491
    %p505 = scmp.eq.s32.totalorder %s29, 3
    %p506 = por %p504, %p505
    %p508 = scmp.ne.s32.totalorder %s491, %s507
    %p509 = scmp.eq.s32.totalorder %s29, 0
    %p510 = por %p508, %p509
    %p511 = scmp.le.s32.totalorder 1, %s23
    %p512 = scmp.lt.s32.totalorder %s23, 5
    %p513 = pnand %p511, %p512
    %p514 = pneg %p513
    // Predicated region
    $region9: #{tpu_custom_call.1} parent=5 // pred_check
      _
    $region10: #{tpu_custom_call.1} parent=5 // pred_check_branch
      %516 = sbr.rel (%p513) target = $region12
    $region11: #{tpu_custom_call.1} parent=5 // pred_region
      %s517 = ssub.s32 %s23, 1
    $region12: #{tpu_custom_call.1} parent=5 // pred_fallthru
      _
    %p518 = scmp.lt.s32.totalorder %s23, 4
    // Predicated region
    $region13: #{tpu_custom_call.1} parent=5 // pred_check
      %p519 = pneg %p518
    $region14: #{tpu_custom_call.1} parent=5 // pred_check_branch
      %521 = sbr.rel (%p519) target = $region16
    $region15: #{tpu_custom_call.1} parent=5 // pred_region
      // Predicated region
      $region17: #{tpu_custom_call.1} parent=15 // pred_check
        %p522 = pneg %p55
      $region18: #{tpu_custom_call.1} parent=15 // pred_check_branch
        %524 = sbr.rel (%p522) target = $region20
      $region19: #{tpu_custom_call.1} parent=15 // pred_region
        %p525 = scmp.lt.s32.totalorder %s30, 1
        %s526 = scalar_select %p525, %s30, 1
        %s527 = smul.addr %s526, 5
        %s528 = smul.addr %s527, 8
        %s529 = scalar_lea.vmem %s0, %s528
      $region20: #{tpu_custom_call.1} parent=15 // pred_fallthru
        _
      // Predicated region
      $region21: #{tpu_custom_call.1} parent=15 // pred_check
        %p530 = pneg %p81
      $region22: #{tpu_custom_call.1} parent=15 // pred_check_branch
        %532 = sbr.rel (%p530) target = $region24
      $region23: #{tpu_custom_call.1} parent=15 // pred_region
        %p533 = scmp.lt.s32.totalorder %s31, 1
        %s534 = scalar_select %p533, %s31, 1
        %s535 = scalar_lea.vmem %s1, %s534
      $region24: #{tpu_custom_call.1} parent=15 // pred_fallthru
        _
      // Predicated region
      $region25: #{tpu_custom_call.1} parent=15 // pred_check
        %p536 = pneg %p107
      $region26: #{tpu_custom_call.1} parent=15 // pred_check_branch
        %538 = sbr.rel (%p536) target = $region28
      $region27: #{tpu_custom_call.1} parent=15 // pred_region
        %p539 = scmp.lt.s32.totalorder %s31, 1
        %s540 = scalar_select %p539, %s31, 1
        %s541 = scalar_lea.vmem %s2, %s540
      $region28: #{tpu_custom_call.1} parent=15 // pred_fallthru
        _
      // Predicated region
      $region29: #{tpu_custom_call.1} parent=15 // pred_check
        %p542 = pneg %p133
      $region30: #{tpu_custom_call.1} parent=15 // pred_check_branch
        %544 = sbr.rel (%p542) target = $region32
      $region31: #{tpu_custom_call.1} parent=15 // pred_region
        %p545 = scmp.lt.s32.totalorder %s31, 1
        %s546 = scalar_select %p545, %s31, 1
        %s547 = smul.addr %s546, 4
        %s548 = smul.addr %s547, 4
        %s549 = scalar_lea.vmem %s3, %s548
      $region32: #{tpu_custom_call.1} parent=15 // pred_fallthru
        _
      // Predicated region
      $region33: #{tpu_custom_call.1} parent=15 // pred_check
        %p550 = pneg %p159
      $region34: #{tpu_custom_call.1} parent=15 // pred_check_branch
        %552 = sbr.rel (%p550) target = $region36
      $region35: #{tpu_custom_call.1} parent=15 // pred_region
        %p553 = scmp.lt.s32.totalorder %s31, 1
        %s554 = scalar_select %p553, %s31, 1
        %s555 = scalar_lea.vmem %s4, %s554
      $region36: #{tpu_custom_call.1} parent=15 // pred_fallthru
        _
      // Predicated region
      $region37: #{tpu_custom_call.1} parent=15 // pred_check
        %p556 = pneg %p185
      $region38: #{tpu_custom_call.1} parent=15 // pred_check_branch
        %558 = sbr.rel (%p556) target = $region40
      $region39: #{tpu_custom_call.1} parent=15 // pred_region
        %p559 = scmp.lt.s32.totalorder %s31, 1
        %s560 = scalar_select %p559, %s31, 1
        %s561 = smul.addr %s560, 4
        %s562 = smul.addr %s561, 4
        %s563 = scalar_lea.vmem %s5, %s562
      $region40: #{tpu_custom_call.1} parent=15 // pred_fallthru
        _
      // Predicated region
      $region41: #{tpu_custom_call.1} parent=15 // pred_check
        %p564 = pneg %p211
      $region42: #{tpu_custom_call.1} parent=15 // pred_check_branch
        %566 = sbr.rel (%p564) target = $region44
      $region43: #{tpu_custom_call.1} parent=15 // pred_region
        %p567 = scmp.lt.s32.totalorder %s31, 1
        %s568 = scalar_select %p567, %s31, 1
        %s569 = scalar_lea.vmem %s6, %s568
      $region44: #{tpu_custom_call.1} parent=15 // pred_fallthru
        _
      // Predicated region
      $region45: #{tpu_custom_call.1} parent=15 // pred_check
        %p570 = pneg %p237
      $region46: #{tpu_custom_call.1} parent=15 // pred_check_branch
        %572 = sbr.rel (%p570) target = $region48
      $region47: #{tpu_custom_call.1} parent=15 // pred_region
        %p573 = scmp.lt.s32.totalorder %s31, 1
        %s574 = scalar_select %p573, %s31, 1
        %s575 = smul.addr %s574, 4
        %s576 = smul.addr %s575, 4
        %s577 = scalar_lea.vmem %s7, %s576
      $region48: #{tpu_custom_call.1} parent=15 // pred_fallthru
        _
      // Predicated region
      $region49: #{tpu_custom_call.1} parent=15 // pred_check
        %p578 = pneg %p263
      $region50: #{tpu_custom_call.1} parent=15 // pred_check_branch
        %580 = sbr.rel (%p578) target = $region52
      $region51: #{tpu_custom_call.1} parent=15 // pred_region
        %p581 = scmp.lt.s32.totalorder %s31, 1
        %s582 = scalar_select %p581, %s31, 1
        %s583 = scalar_lea.vmem %s8, %s582
      $region52: #{tpu_custom_call.1} parent=15 // pred_fallthru
        _
      // Predicated region
      $region53: #{tpu_custom_call.1} parent=15 // pred_check
        %p584 = pneg %p289
      $region54: #{tpu_custom_call.1} parent=15 // pred_check_branch
        %586 = sbr.rel (%p584) target = $region56
      $region55: #{tpu_custom_call.1} parent=15 // pred_region
        %p587 = scmp.lt.s32.totalorder %s31, 1
        %s588 = scalar_select %p587, %s31, 1
        %s589 = smul.addr %s588, 4
        %s590 = smul.addr %s589, 4
        %s591 = scalar_lea.vmem %s9, %s590
      $region56: #{tpu_custom_call.1} parent=15 // pred_fallthru
        _
      // Predicated region
      $region57: #{tpu_custom_call.1} parent=15 // pred_check
        %p592 = pneg %p315
      $region58: #{tpu_custom_call.1} parent=15 // pred_check_branch
        %594 = sbr.rel (%p592) target = $region60
      $region59: #{tpu_custom_call.1} parent=15 // pred_region
        %p595 = scmp.lt.s32.totalorder %s31, 1
        %s596 = scalar_select %p595, %s31, 1
        %s597 = scalar_lea.vmem %s10, %s596
      $region60: #{tpu_custom_call.1} parent=15 // pred_fallthru
        _
      // Predicated region
      $region61: #{tpu_custom_call.1} parent=15 // pred_check
        %p598 = pneg %p341
      $region62: #{tpu_custom_call.1} parent=15 // pred_check_branch
        %600 = sbr.rel (%p598) target = $region64
      $region63: #{tpu_custom_call.1} parent=15 // pred_region
        %p601 = scmp.lt.s32.totalorder %s31, 1
        %s602 = scalar_select %p601, %s31, 1
        %s603 = scalar_lea.vmem %s11, %s602
      $region64: #{tpu_custom_call.1} parent=15 // pred_fallthru
        _
      // Predicated region
      $region65: #{tpu_custom_call.1} parent=15 // pred_check
        %p604 = pneg %p367
      $region66: #{tpu_custom_call.1} parent=15 // pred_check_branch
        %606 = sbr.rel (%p604) target = $region68
      $region67: #{tpu_custom_call.1} parent=15 // pred_region
        %p607 = scmp.lt.s32.totalorder %s31, 1
        %s608 = scalar_select %p607, %s31, 1
        %s609 = scalar_lea.vmem %s12, %s608
      $region68: #{tpu_custom_call.1} parent=15 // pred_fallthru
        _
      // Predicated region
      $region69: #{tpu_custom_call.1} parent=15 // pred_check
        %p610 = pneg %p393
      $region70: #{tpu_custom_call.1} parent=15 // pred_check_branch
        %612 = sbr.rel (%p610) target = $region72
      $region71: #{tpu_custom_call.1} parent=15 // pred_region
        %p613 = scmp.lt.s32.totalorder %s31, 1
        %s614 = scalar_select %p613, %s31, 1
        %s615 = smul.addr %s614, 4
        %s616 = smul.addr %s615, 4
        %s617 = scalar_lea.vmem %s13, %s616
      $region72: #{tpu_custom_call.1} parent=15 // pred_fallthru
        _
      // Predicated region
      $region73: #{tpu_custom_call.1} parent=15 // pred_check
        %p618 = pneg %p419
      $region74: #{tpu_custom_call.1} parent=15 // pred_check_branch
        %620 = sbr.rel (%p618) target = $region76
      $region75: #{tpu_custom_call.1} parent=15 // pred_region
        %p621 = scmp.lt.s32.totalorder %s31, 1
        %s622 = scalar_select %p621, %s31, 1
        %s623 = scalar_lea.vmem %s14, %s622
      $region76: #{tpu_custom_call.1} parent=15 // pred_fallthru
        _
      // Predicated region
      $region77: #{tpu_custom_call.1} parent=15 // pred_check
        %p624 = pneg %p445
      $region78: #{tpu_custom_call.1} parent=15 // pred_check_branch
        %626 = sbr.rel (%p624) target = $region80
      $region79: #{tpu_custom_call.1} parent=15 // pred_region
        %p627 = scmp.lt.s32.totalorder %s31, 1
        %s628 = scalar_select %p627, %s31, 1
        %s629 = smul.addr %s628, 16
        %s630 = smul.addr %s629, 4
        %s631 = scalar_lea.vmem %s15, %s630
      $region80: #{tpu_custom_call.1} parent=15 // pred_fallthru
        _
      // Predicated region
      $region81: #{tpu_custom_call.1} parent=15 // pred_check
        %p632 = pneg %p471
      $region82: #{tpu_custom_call.1} parent=15 // pred_check_branch
        %634 = sbr.rel (%p632) target = $region84
      $region83: #{tpu_custom_call.1} parent=15 // pred_region
        %p635 = scmp.lt.s32.totalorder %s31, 1
        %s636 = scalar_select %p635, %s31, 1
        %s637 = scalar_lea.vmem %s16, %s636
      $region84: #{tpu_custom_call.1} parent=15 // pred_fallthru
        _
    $region16: #{tpu_custom_call.1} parent=5 // pred_fallthru
      _
    %p638 = scmp.le.s32.totalorder 1, %s23
    %p639 = scmp.lt.s32.totalorder %s23, 5
    %p640 = pnand %p638, %p639
    %p641 = pneg %p640
    // Predicated region
    $region85: #{tpu_custom_call.1} parent=5 // pred_check
      _
    $region86: #{tpu_custom_call.1} parent=5 // pred_check_branch
      %643 = sbr.rel (%p640) target = $region88
    $region87: #{tpu_custom_call.1} parent=5 // pred_region
      %s644 = ssub.s32 %s23, 1
      %p645 = scmp.lt.s32.totalorder %s32, 1
      %s646 = scalar_select %p645, %s32, 1
      %s647 = smul.addr %s646, 5
      %s648 = smul.addr %s647, 8
      %s649 = scalar_lea.vmem %s0, %s648
      %p650 = pneg %p61
      %p651 = pneg %p58
      %p652 = scmp.lt.s32.totalorder %s33, 1
      %s653 = scalar_select %p652, %s33, 1
      %s654 = scalar_lea.vmem %s1, %s653
      %p655 = pneg %p87
      %p656 = pneg %p84
      %p657 = scmp.lt.s32.totalorder %s33, 1
      %s658 = scalar_select %p657, %s33, 1
      %s659 = scalar_lea.vmem %s2, %s658
      %p660 = pneg %p113
      %p661 = pneg %p110
      %p662 = scmp.lt.s32.totalorder %s33, 1
      %s663 = scalar_select %p662, %s33, 1
      %s664 = smul.addr %s663, 4
      %s665 = smul.addr %s664, 4
      %s666 = scalar_lea.vmem %s3, %s665
      %p667 = pneg %p139
      %p668 = pneg %p136
      %p669 = scmp.lt.s32.totalorder %s33, 1
      %s670 = scalar_select %p669, %s33, 1
      %s671 = scalar_lea.vmem %s4, %s670
      %p672 = pneg %p165
      %p673 = pneg %p162
      %p674 = scmp.lt.s32.totalorder %s33, 1
      %s675 = scalar_select %p674, %s33, 1
      %s676 = smul.addr %s675, 4
      %s677 = smul.addr %s676, 4
      %s678 = scalar_lea.vmem %s5, %s677
      %p679 = pneg %p191
      %p680 = pneg %p188
      %p681 = scmp.lt.s32.totalorder %s33, 1
      %s682 = scalar_select %p681, %s33, 1
      %s683 = scalar_lea.vmem %s6, %s682
      %p684 = pneg %p217
      %p685 = pneg %p214
      %p686 = scmp.lt.s32.totalorder %s33, 1
      %s687 = scalar_select %p686, %s33, 1
      %s688 = smul.addr %s687, 4
      %s689 = smul.addr %s688, 4
      %s690 = scalar_lea.vmem %s7, %s689
      %p691 = pneg %p243
      %p692 = pneg %p240
      %p693 = scmp.lt.s32.totalorder %s33, 1
      %s694 = scalar_select %p693, %s33, 1
      %s695 = scalar_lea.vmem %s8, %s694
      %p696 = pneg %p269
      %p697 = pneg %p266
      %p698 = scmp.lt.s32.totalorder %s33, 1
      %s699 = scalar_select %p698, %s33, 1
      %s700 = smul.addr %s699, 4
      %s701 = smul.addr %s700, 4
      %s702 = scalar_lea.vmem %s9, %s701
      %p703 = pneg %p295
      %p704 = pneg %p292
      %p705 = scmp.lt.s32.totalorder %s33, 1
      %s706 = scalar_select %p705, %s33, 1
      %s707 = scalar_lea.vmem %s10, %s706
      %p708 = pneg %p321
      %p709 = pneg %p318
      %p710 = scmp.lt.s32.totalorder %s33, 1
      %s711 = scalar_select %p710, %s33, 1
      %s712 = scalar_lea.vmem %s11, %s711
      %p713 = pneg %p347
      %p714 = pneg %p344
      %p715 = scmp.lt.s32.totalorder %s33, 1
      %s716 = scalar_select %p715, %s33, 1
      %s717 = scalar_lea.vmem %s12, %s716
      %p718 = pneg %p373
      %p719 = pneg %p370
      %p720 = scmp.lt.s32.totalorder %s33, 1
      %s721 = scalar_select %p720, %s33, 1
      %s722 = smul.addr %s721, 4
      %s723 = smul.addr %s722, 4
      %s724 = scalar_lea.vmem %s13, %s723
      %p725 = pneg %p399
      %p726 = pneg %p396
      %p727 = scmp.lt.s32.totalorder %s33, 1
      %s728 = scalar_select %p727, %s33, 1
      %s729 = scalar_lea.vmem %s14, %s728
      %p730 = pneg %p425
      %p731 = pneg %p422
      %p732 = scmp.lt.s32.totalorder %s33, 1
      %s733 = scalar_select %p732, %s33, 1
      %s734 = smul.addr %s733, 16
      %s735 = smul.addr %s734, 4
      %s736 = scalar_lea.vmem %s15, %s735
      %p737 = pneg %p451
      %p738 = pneg %p448
      %p739 = scmp.lt.s32.totalorder %s33, 1
      %s740 = scalar_select %p739, %s33, 1
      %s741 = scalar_lea.vmem %s16, %s740
      %p742 = pneg %p477
      %p743 = pneg %p474
      %p744 = pneg %p503
      %p745 = pneg %p500
      %p746 = scmp.lt.s32.totalorder %s32, 1
      %s747 = scalar_select %p746, %s32, 1
      %s748 = smul.addr %s747, 5
      %s749 = smul.addr %s748, 8
      %s750 = scalar_lea.vmem %s17, %s749
      %p751 = scmp.lt.s32.totalorder %s32, 1
      %s752 = scalar_select %p751, %s32, 1
      %s753 = smul.addr %s752, 5
      %s754 = smul.addr %s753, 8
      %s755 = scalar_lea.vmem %s0, %s754
      %p756 = scmp.lt.s32.totalorder %s33, 1
      %s757 = scalar_select %p756, %s33, 1
      %s758 = scalar_lea.vmem %s1, %s757
      %p759 = scmp.lt.s32.totalorder %s33, 1
      %s760 = scalar_select %p759, %s33, 1
      %s761 = scalar_lea.vmem %s2, %s760
      %p762 = scmp.lt.s32.totalorder %s33, 1
      %s763 = scalar_select %p762, %s33, 1
      %s764 = smul.addr %s763, 4
      %s765 = smul.addr %s764, 4
      %s766 = scalar_lea.vmem %s3, %s765
      %p767 = scmp.lt.s32.totalorder %s33, 1
      %s768 = scalar_select %p767, %s33, 1
      %s769 = scalar_lea.vmem %s4, %s768
      %p770 = scmp.lt.s32.totalorder %s33, 1
      %s771 = scalar_select %p770, %s33, 1
      %s772 = smul.addr %s771, 4
      %s773 = smul.addr %s772, 4
      %s774 = scalar_lea.vmem %s5, %s773
      %p775 = scmp.lt.s32.totalorder %s33, 1
      %s776 = scalar_select %p775, %s33, 1
      %s777 = scalar_lea.vmem %s6, %s776
      %p778 = scmp.lt.s32.totalorder %s33, 1
      %s779 = scalar_select %p778, %s33, 1
      %s780 = smul.addr %s779, 4
      %s781 = smul.addr %s780, 4
      %s782 = scalar_lea.vmem %s7, %s781
      %p783 = scmp.lt.s32.totalorder %s33, 1
      %s784 = scalar_select %p783, %s33, 1
      %s785 = scalar_lea.vmem %s8, %s784
      %p786 = scmp.lt.s32.totalorder %s33, 1
      %s787 = scalar_select %p786, %s33, 1
      %s788 = smul.addr %s787, 4
      %s789 = smul.addr %s788, 4
      %s790 = scalar_lea.vmem %s9, %s789
      %p791 = scmp.lt.s32.totalorder %s33, 1
      %s792 = scalar_select %p791, %s33, 1
      %s793 = scalar_lea.vmem %s10, %s792
      %p794 = scmp.lt.s32.totalorder %s33, 1
      %s795 = scalar_select %p794, %s33, 1
      %s796 = scalar_lea.vmem %s11, %s795
      %p797 = scmp.lt.s32.totalorder %s33, 1
      %s798 = scalar_select %p797, %s33, 1
      %s799 = scalar_lea.vmem %s12, %s798
      %p800 = scmp.lt.s32.totalorder %s33, 1
      %s801 = scalar_select %p800, %s33, 1
      %s802 = smul.addr %s801, 4
      %s803 = smul.addr %s802, 4
      %s804 = scalar_lea.vmem %s13, %s803
      %p805 = scmp.lt.s32.totalorder %s33, 1
      %s806 = scalar_select %p805, %s33, 1
      %s807 = scalar_lea.vmem %s14, %s806
      %p808 = scmp.lt.s32.totalorder %s33, 1
      %s809 = scalar_select %p808, %s33, 1
      %s810 = smul.addr %s809, 16
      %s811 = smul.addr %s810, 4
      %s812 = scalar_lea.vmem %s15, %s811
      %p813 = scmp.lt.s32.totalorder %s33, 1
      %s814 = scalar_select %p813, %s33, 1
      %s815 = scalar_lea.vmem %s16, %s814
      %p816 = scmp.lt.s32.totalorder %s32, 1
      %s817 = scalar_select %p816, %s32, 1
      %s818 = smul.addr %s817, 5
      %s819 = smul.addr %s818, 8
      %s820 = scalar_lea.vmem %s17, %s819
      %p822 = scmp.eq.s32.totalorder %s33, 0
      // Predicated region
      $region89: #{tpu_custom_call.1} parent=87 // pred_check
        %p823 = pneg %p822
      $region90: #{tpu_custom_call.1} parent=87 // pred_check_branch
        %825 = sbr.rel (%p823) target = $region92
      $region91: #{tpu_custom_call.1} parent=87 // pred_region
        %v826 = vld [vmem:[%s755] sm:$0xff]
        %v827 = vld [vmem:[%s755 + $0x8] sm:$0xff]
        %v828 = vld [vmem:[%s755 + $0x10] sm:$0xff]
        %v829 = vld [vmem:[%s755 + $0x18] sm:$0xff]
        %v830 = vld [vmem:[%s755 + $0x20] sm:$0xff]
        %vm831 = vcmask 261120
        %832 = vst.msk [vmem:[#allocation2] sm:$0xff] %vm831, %v826
        %833 = vst.msk [vmem:[#allocation2 + $0x8] sm:$0xff] %vm831, %v827
        %834 = vst.msk [vmem:[#allocation2 + $0x10] sm:$0xff] %vm831, %v828
        %835 = vst.msk [vmem:[#allocation2 + $0x18] sm:$0xff] %vm831, %v829
        %836 = vst.msk [vmem:[#allocation2 + $0x20] sm:$0xff] %vm831, %v830
        %v837 = vlaneseq
        %v838 = vshrl.u32 %v837, 7
        %v839 = vadd.s32 %v838, 8
        %v840 = vadd.s32 %v838, 16
        %v841 = vadd.s32 %v838, 24
        %v842 = vadd.s32 %v838, 32
        %v843 = vlaneseq
        %v844 = vand.u32 %v843, 127
        %vm845 = vcmp.lt.s32.totalorder %v844, 0
        %v846 = vsub.s32 0, %v844
        %v847 = vsel %vm845, %v846, %v844
        %v848 = vshrl.u32 %v847, 2
        %v849 = vand.u32 %v847, 3
        %v850 = vsub.s32 0, %v849
        %v851 = vsel %vm845, %v850, %v849
        %vm852 = vcmp.ne.s32.totalorder %v851, 0
        %vm853 = vcmp.lt.s32.totalorder %v851, 0
        %vm854 = vmand %vm853, %vm852
        %v855 = vadd.s32 %v851, 4
        %v856 = vsel %vm854, %v855, %v851
        %vm857 = vcmp.lt.s32.totalorder %v838, 0
        %v858 = vsub.s32 0, %v838
        %v859 = vsel %vm857, %v858, %v838
        %v860 = vshrl.u32 %v859, 2
        %v861 = vand.u32 %v859, 3
        %v862 = vsub.s32 0, %v861
        %v863 = vsel %vm857, %v862, %v861
        %vm864 = vcmp.lt.s32.totalorder %v839, 0
        %v865 = vsub.s32 0, %v839
        %v866 = vsel %vm864, %v865, %v839
        %v867 = vshrl.u32 %v866, 2
        %v868 = vand.u32 %v866, 3
        %v869 = vsub.s32 0, %v868
        %v870 = vsel %vm864, %v869, %v868
        %vm871 = vcmp.lt.s32.totalorder %v840, 0
        %v872 = vsub.s32 0, %v840
        %v873 = vsel %vm871, %v872, %v840
        %v874 = vshrl.u32 %v873, 2
        %v875 = vand.u32 %v873, 3
        %v876 = vsub.s32 0, %v875
        %v877 = vsel %vm871, %v876, %v875
        %vm878 = vcmp.lt.s32.totalorder %v841, 0
        %v879 = vsub.s32 0, %v841
        %v880 = vsel %vm878, %v879, %v841
        %v881 = vshrl.u32 %v880, 2
        %v882 = vand.u32 %v880, 3
        %v883 = vsub.s32 0, %v882
        %v884 = vsel %vm878, %v883, %v882
        %vm885 = vcmp.lt.s32.totalorder %v842, 0
        %v886 = vsub.s32 0, %v842
        %v887 = vsel %vm885, %v886, %v842
        %v888 = vshrl.u32 %v887, 2
        %v889 = vand.u32 %v887, 3
        %v890 = vsub.s32 0, %v889
        %v891 = vsel %vm885, %v890, %v889
        %vm892 = vcmp.ne.s32.totalorder %v863, 0
        %vm893 = vcmp.ne.s32.totalorder %v870, 0
        %vm894 = vcmp.ne.s32.totalorder %v877, 0
        %vm895 = vcmp.ne.s32.totalorder %v884, 0
        %vm896 = vcmp.ne.s32.totalorder %v891, 0
        %vm897 = vcmp.lt.s32.totalorder %v863, 0
        %vm898 = vcmp.lt.s32.totalorder %v870, 0
        %vm899 = vcmp.lt.s32.totalorder %v877, 0
        %vm900 = vcmp.lt.s32.totalorder %v884, 0
        %vm901 = vcmp.lt.s32.totalorder %v891, 0
        %vm902 = vmand %vm897, %vm892
        %vm903 = vmand %vm898, %vm893
        %vm904 = vmand %vm899, %vm894
        %vm905 = vmand %vm900, %vm895
        %vm906 = vmand %vm901, %vm896
        %v907 = vadd.s32 %v863, 4
        %v908 = vadd.s32 %v870, 4
        %v909 = vadd.s32 %v877, 4
        %v910 = vadd.s32 %v884, 4
        %v911 = vadd.s32 %v891, 4
        %v912 = vsel %vm902, %v907, %v863
        %v913 = vsel %vm903, %v908, %v870
        %v914 = vsel %vm904, %v909, %v877
        %v915 = vsel %vm905, %v910, %v884
        %v916 = vsel %vm906, %v911, %v891
        %vm917 = vcmp.le.s32.totalorder %v856, %v912
        %vm918 = vcmp.le.s32.totalorder %v856, %v913
        %vm919 = vcmp.le.s32.totalorder %v856, %v914
        %vm920 = vcmp.le.s32.totalorder %v856, %v915
        %vm921 = vcmp.le.s32.totalorder %v856, %v916
        %v922 = vsel %vm917, 0.0, -1e+30
        %v923 = vsel %vm918, 0.0, -1e+30
        %v924 = vsel %vm919, 0.0, -1e+30
        %v925 = vsel %vm920, 0.0, -1e+30
        %v926 = vsel %vm921, 0.0, -1e+30
        %vm927 = vcmask 326656
        %928 = vst.msk [vmem:[#allocation3] sm:$0xff] %vm927, %v922
        %929 = vst.msk [vmem:[#allocation3 + $0x8] sm:$0xff] %vm927, %v923
        %930 = vst.msk [vmem:[#allocation3 + $0x10] sm:$0xff] %vm927, %v924
        %931 = vst.msk [vmem:[#allocation3 + $0x18] sm:$0xff] %vm927, %v925
        %932 = vst.msk [vmem:[#allocation3 + $0x20] sm:$0xff] %vm927, %v926
      $region92: #{tpu_custom_call.1} parent=87 // pred_fallthru
        _
      %v933 = vld [vmem:[#allocation2] sm:$0xff]
      %v934 = vld [vmem:[#allocation2 + $0x8] sm:$0xff]
      %v935 = vld [vmem:[#allocation2 + $0x10] sm:$0xff]
      %v936 = vld [vmem:[#allocation2 + $0x18] sm:$0xff]
      %v937 = vld [vmem:[#allocation2 + $0x20] sm:$0xff]
      %v938 = vld [vmem:[#allocation3] sm:$0xff]
      %v939 = vld [vmem:[#allocation3 + $0x8] sm:$0xff]
      %v940 = vld [vmem:[#allocation3 + $0x10] sm:$0xff]
      %v941 = vld [vmem:[#allocation3 + $0x18] sm:$0xff]
      %v942 = vld [vmem:[#allocation3 + $0x20] sm:$0xff]
      %v943 = vld [vmem:[%s758] sm:$0x1]
      %v944 = vld [vmem:[%s761] sm:$0x1]
      %vm945 = vcmask 261120
      %v946 = vsel %vm945, %v933, 0.0
      %947 = vadd.xlane.f32.xlu0 %v946
      %v948 = vpop.xlane.xlu0 %947
      %v949 = vsel %vm945, %v934, 0.0
      %950 = vadd.xlane.f32.xlu0 %v949
      %v951 = vpop.xlane.xlu0 %950
      %v952 = vsel %vm945, %v935, 0.0
      %953 = vadd.xlane.f32.xlu0 %v952
      %v954 = vpop.xlane.xlu0 %953
      %v955 = vsel %vm945, %v936, 0.0
      %956 = vadd.xlane.f32.xlu0 %v955
      %v957 = vpop.xlane.xlu0 %956
      %v958 = vsel %vm945, %v937, 0.0
      %959 = vadd.xlane.f32.xlu0 %v958
      %v960 = vpop.xlane.xlu0 %959
      %v961 = vrcp.pop 32.0
      %v962 = vmul.f32 32.0, %v961
      %v963 = vsub.f32 1.0, %v962
      %v964 = vmul.f32 %v961, %v963
      %v965 = vadd.f32 %v961, %v964
      %vm966 = vweird.f32 %v961
      %v967 = vsel %vm966, %v961, %v965
      %v968 = vmul.f32 %v948, %v967
      %v969 = vmul.f32 %v951, %v967
      %v970 = vmul.f32 %v954, %v967
      %v971 = vmul.f32 %v957, %v967
      %v972 = vmul.f32 %v960, %v967
      %v973 = vsub.f32 %v933, %v968
      %v974 = vsub.f32 %v934, %v969
      %v975 = vsub.f32 %v935, %v970
      %v976 = vsub.f32 %v936, %v971
      %v977 = vsub.f32 %v937, %v972
      %v978 = vmul.f32 %v973, %v973
      %v979 = vmul.f32 %v974, %v974
      %v980 = vmul.f32 %v975, %v975
      %v981 = vmul.f32 %v976, %v976
      %v982 = vmul.f32 %v977, %v977
      %v983 = vsel %vm945, %v978, 0.0
      %984 = vadd.xlane.f32.xlu0 %v983
      %v985 = vpop.xlane.xlu0 %984
      %v986 = vsel %vm945, %v979, 0.0
      %987 = vadd.xlane.f32.xlu0 %v986
      %v988 = vpop.xlane.xlu0 %987
      %v989 = vsel %vm945, %v980, 0.0
      %990 = vadd.xlane.f32.xlu0 %v989
      %v991 = vpop.xlane.xlu0 %990
      %v992 = vsel %vm945, %v981, 0.0
      %993 = vadd.xlane.f32.xlu0 %v992
      %v994 = vpop.xlane.xlu0 %993
      %v995 = vsel %vm945, %v982, 0.0
      %996 = vadd.xlane.f32.xlu0 %v995
      %v997 = vpop.xlane.xlu0 %996
      %v998 = vmul.f32 %v985, %v967
      %v999 = vmul.f32 %v988, %v967
      %v1000 = vmul.f32 %v991, %v967
      %v1001 = vmul.f32 %v994, %v967
      %v1002 = vmul.f32 %v997, %v967
      %v1003 = vadd.f32 %v998, 1e-05
      %v1004 = vadd.f32 %v999, 1e-05
      %v1005 = vadd.f32 %v1000, 1e-05
      %v1006 = vadd.f32 %v1001, 1e-05
      %v1007 = vadd.f32 %v1002, 1e-05
      %v1008 = vrsqrt.pop %v1003
      %v1009 = vmul.f32 %v1008, %v1003
      %v1010 = vmul.f32 %v1009, %v1008
      %v1011 = vmul.f32 0.5, %v1010
      %v1012 = vsub.f32 1.5, %v1011
      %v1013 = vmul.f32 %v1008, %v1012
      %vm1014 = vweird.f32 %v1003
      %vm1015 = vweird.f32 %v1008
      %vm1016 = vmor %vm1014, %vm1015
      %v1017 = vsel %vm1016, %v1008, %v1013
      %v1018 = vrsqrt.pop %v1004
      %v1019 = vmul.f32 %v1018, %v1004
      %v1020 = vmul.f32 %v1019, %v1018
      %v1021 = vmul.f32 0.5, %v1020
      %v1022 = vsub.f32 1.5, %v1021
      %v1023 = vmul.f32 %v1018, %v1022
      %vm1024 = vweird.f32 %v1004
      %vm1025 = vweird.f32 %v1018
      %vm1026 = vmor %vm1024, %vm1025
      %v1027 = vsel %vm1026, %v1018, %v1023
      %v1028 = vrsqrt.pop %v1005
      %v1029 = vmul.f32 %v1028, %v1005
      %v1030 = vmul.f32 %v1029, %v1028
      %v1031 = vmul.f32 0.5, %v1030
      %v1032 = vsub.f32 1.5, %v1031
      %v1033 = vmul.f32 %v1028, %v1032
      %vm1034 = vweird.f32 %v1005
      %vm1035 = vweird.f32 %v1028
      %vm1036 = vmor %vm1034, %vm1035
      %v1037 = vsel %vm1036, %v1028, %v1033
      %v1038 = vrsqrt.pop %v1006
      %v1039 = vmul.f32 %v1038, %v1006
      %v1040 = vmul.f32 %v1039, %v1038
      %v1041 = vmul.f32 0.5, %v1040
      %v1042 = vsub.f32 1.5, %v1041
      %v1043 = vmul.f32 %v1038, %v1042
      %vm1044 = vweird.f32 %v1006
      %vm1045 = vweird.f32 %v1038
      %vm1046 = vmor %vm1044, %vm1045
      %v1047 = vsel %vm1046, %v1038, %v1043
      %v1048 = vrsqrt.pop %v1007
      %v1049 = vmul.f32 %v1048, %v1007
      %v1050 = vmul.f32 %v1049, %v1048
      %v1051 = vmul.f32 0.5, %v1050
      %v1052 = vsub.f32 1.5, %v1051
      %v1053 = vmul.f32 %v1048, %v1052
      %vm1054 = vweird.f32 %v1007
      %vm1055 = vweird.f32 %v1048
      %vm1056 = vmor %vm1054, %vm1055
      %v1057 = vsel %vm1056, %v1048, %v1053
      %v1058 = vmul.f32 %v973, %v1017
      %v1059 = vmul.f32 %v974, %v1027
      %v1060 = vmul.f32 %v975, %v1037
      %v1061 = vmul.f32 %v976, %v1047
      %v1062 = vmul.f32 %v977, %v1057
      %v1064 = vperm.slane %v943, 0
      %v1066 = vmul.f32 %v1058, %v1064
      %v1067 = vmul.f32 %v1059, %v1064
      %v1068 = vmul.f32 %v1060, %v1064
      %v1069 = vmul.f32 %v1061, %v1064
      %v1070 = vmul.f32 %v1062, %v1064
      %v1072 = vperm.slane %v944, 0
      %v1074 = vadd.f32 %v1066, %v1072
      %v1075 = vadd.f32 %v1067, %v1072
      %v1076 = vadd.f32 %v1068, %v1072
      %v1077 = vadd.f32 %v1069, %v1072
      %v1078 = vadd.f32 %v1070, %v1072
      %v1079 = vpack.c.bf16 %v1075, %v1074
      %v1080 = vpack.c.bf16 %v1077, %v1076
      %v1081 = vpack.c.bf16 %v1078, %v1078
      %v1082 = vld [vmem:[%s766] sm:$0xf]
      %v1083 = vld [vmem:[%s766 + $0x4] sm:$0xf]
      %v1084 = vld [vmem:[%s766 + $0x8] sm:$0xf]
      %v1085 = vld [vmem:[%s766 + $0xc] sm:$0xf]
      %v1086 = vld [vmem:[%s769] sm:$0x1]
      %v1088 = vperm.slane %v1086, 0
      %v1094 = vunpack.c.l.b16 %v1082
      %v1095 = vunpack.c.l.b16 %v1083
      %v1096 = vunpack.c.l.b16 %v1084
      %v1097 = vunpack.c.l.b16 %v1085
      %v1098 = vpack.c.b16 %v1095, %v1094
      %v1099 = vpack.c.b16 %v1097, %v1096
      %v1103 = vsel %vm945, %v1079, 0
      %v1106 = vsel %vm945, %v1080, 0
      %v1109 = vsel %vm945, %v1081, 0
      %1111 = vmatpush.bf16.msra.mxu0 0
      %1112 = vmatpush.bf16.msra.mxu0 0
      %1113 = vmatpush.bf16.msra.mxu0 0
      %1114 = vmatpush.bf16.msra.mxu0 0
      %1115 = vmatpush.bf16.msra.mxu0 0
      %1116 = vmatpush.bf16.msra.mxu0 0
      %1117 = vmatpush.bf16.msra.mxu0 %v1099
      %1118 = vmatpush.bf16.msra.mxu0 %v1098
      %1119 = vmatmul.bf16.gmra.mxu0 %v1103
      %v1120 = vpop.f32.mrf.mxu0
      %v1121 = vadd.f32 %v1088, %v1120
      %v1122 = vpop.f32.mrf.mxu0
      %v1123 = vadd.f32 %v1088, %v1122
      %1124 = vmatmul.bf16.gmra.mxu0 %v1106
      %v1125 = vpop.f32.mrf.mxu0
      %v1126 = vadd.f32 %v1088, %v1125
      %v1127 = vpop.f32.mrf.mxu0
      %v1128 = vadd.f32 %v1088, %v1127
      %1129 = vmatmul.bf16.gmra.mxu0 %v1109
      %v1130 = vpop.f32.mrf.mxu0
      %v1131 = vadd.f32 %v1088, %v1130
      %v1132 = vpop.f32.mrf.mxu0
      %1133 = vdwg.mxu0
      %v1134 = vpack.c.bf16 %v1121, %v1121
      %v1135 = vpack.c.bf16 %v1123, %v1123
      %v1136 = vpack.c.bf16 %v1126, %v1126
      %v1137 = vpack.c.bf16 %v1128, %v1128
      %v1138 = vpack.c.bf16 %v1131, %v1131
      %v1139 = vld [vmem:[%s774] sm:$0xf]
      %v1140 = vld [vmem:[%s774 + $0x4] sm:$0xf]
      %v1141 = vld [vmem:[%s774 + $0x8] sm:$0xf]
      %v1142 = vld [vmem:[%s774 + $0xc] sm:$0xf]
      %v1143 = vld [vmem:[%s777] sm:$0x1]
      %v1145 = vperm.slane %v1143, 0
      %v1151 = vunpack.c.l.b16 %v1139
      %v1152 = vunpack.c.l.b16 %v1140
      %v1153 = vunpack.c.l.b16 %v1141
      %v1154 = vunpack.c.l.b16 %v1142
      %v1155 = vpack.c.b16 %v1152, %v1151
      %v1156 = vpack.c.b16 %v1154, %v1153
      %1159 = vmatpush.bf16.msra.mxu0 0
      %1160 = vmatpush.bf16.msra.mxu0 0
      %1161 = vmatpush.bf16.msra.mxu0 0
      %1162 = vmatpush.bf16.msra.mxu0 0
      %1163 = vmatpush.bf16.msra.mxu0 0
      %1164 = vmatpush.bf16.msra.mxu0 0
      %1165 = vmatpush.bf16.msra.mxu0 %v1156
      %1166 = vmatpush.bf16.msra.mxu0 %v1155
      %1167 = vmatmul.bf16.gmra.mxu0 %v1103
      %v1168 = vpop.f32.mrf.mxu0
      %v1169 = vadd.f32 %v1145, %v1168
      %v1170 = vpop.f32.mrf.mxu0
      %v1171 = vadd.f32 %v1145, %v1170
      %1172 = vmatmul.bf16.gmra.mxu0 %v1106
      %v1173 = vpop.f32.mrf.mxu0
      %v1174 = vadd.f32 %v1145, %v1173
      %v1175 = vpop.f32.mrf.mxu0
      %v1176 = vadd.f32 %v1145, %v1175
      %1177 = vmatmul.bf16.gmra.mxu0 %v1109
      %v1178 = vpop.f32.mrf.mxu0
      %v1179 = vadd.f32 %v1145, %v1178
      %v1180 = vpop.f32.mrf.mxu0
      %1181 = vdwg.mxu0
      %v1182 = vpack.c.bf16 %v1169, %v1169
      %v1183 = vpack.c.bf16 %v1171, %v1171
      %v1184 = vpack.c.bf16 %v1174, %v1174
      %v1185 = vpack.c.bf16 %v1176, %v1176
      %v1186 = vpack.c.bf16 %v1179, %v1179
      %v1187 = vld [vmem:[%s782] sm:$0xf]
      %v1188 = vld [vmem:[%s782 + $0x4] sm:$0xf]
      %v1189 = vld [vmem:[%s782 + $0x8] sm:$0xf]
      %v1190 = vld [vmem:[%s782 + $0xc] sm:$0xf]
      %v1191 = vld [vmem:[%s785] sm:$0x1]
      %v1193 = vperm.slane %v1191, 0
      %v1199 = vunpack.c.l.b16 %v1187
      %v1200 = vunpack.c.l.b16 %v1188
      %v1201 = vunpack.c.l.b16 %v1189
      %v1202 = vunpack.c.l.b16 %v1190
      %v1203 = vpack.c.b16 %v1200, %v1199
      %v1204 = vpack.c.b16 %v1202, %v1201
      %1207 = vmatpush.bf16.msra.mxu0 0
      %1208 = vmatpush.bf16.msra.mxu0 0
      %1209 = vmatpush.bf16.msra.mxu0 0
      %1210 = vmatpush.bf16.msra.mxu0 0
      %1211 = vmatpush.bf16.msra.mxu0 0
      %1212 = vmatpush.bf16.msra.mxu0 0
      %1213 = vmatpush.bf16.msra.mxu0 %v1204
      %1214 = vmatpush.bf16.msra.mxu0 %v1203
      %1215 = vmatmul.bf16.gmra.mxu0 %v1103
      %v1216 = vpop.f32.mrf.mxu0
      %v1217 = vadd.f32 %v1193, %v1216
      %v1218 = vpop.f32.mrf.mxu0
      %v1219 = vadd.f32 %v1193, %v1218
      %1220 = vmatmul.bf16.gmra.mxu0 %v1106
      %v1221 = vpop.f32.mrf.mxu0
      %v1222 = vadd.f32 %v1193, %v1221
      %v1223 = vpop.f32.mrf.mxu0
      %v1224 = vadd.f32 %v1193, %v1223
      %1225 = vmatmul.bf16.gmra.mxu0 %v1109
      %v1226 = vpop.f32.mrf.mxu0
      %v1227 = vadd.f32 %v1193, %v1226
      %v1228 = vpop.f32.mrf.mxu0
      %1229 = vdwg.mxu0
      %v1230 = vpack.c.bf16 %v1217, %v1217
      %v1231 = vpack.c.bf16 %v1219, %v1219
      %v1232 = vpack.c.bf16 %v1222, %v1222
      %v1233 = vpack.c.bf16 %v1224, %v1224
      %v1234 = vpack.c.bf16 %v1227, %v1227
      %v1235 = vld [vmem:[%s790] sm:$0xf]
      %v1236 = vld [vmem:[%s790 + $0x4] sm:$0xf]
      %v1237 = vld [vmem:[%s790 + $0x8] sm:$0xf]
      %v1238 = vld [vmem:[%s790 + $0xc] sm:$0xf]
      %v1239 = vld [vmem:[%s793] sm:$0x1]
      %v1245 = vunpack.c.l.b16 %v1134
      %v1246 = vunpack.c.l.b16 %v1135
      %v1247 = vunpack.c.l.b16 %v1136
      %v1248 = vunpack.c.l.b16 %v1137
      %v1249 = vunpack.c.l.b16 %v1138
      %v1250 = vpack.c.b16 %v1246, %v1245
      %v1251 = vpack.c.b16 %v1248, %v1247
      %v1252 = vpack.c.b16 %v1249, %v1249
      %v1258 = vunpack.c.l.b16 %v1182
      %v1259 = vunpack.c.l.b16 %v1183
      %v1260 = vunpack.c.l.b16 %v1184
      %v1261 = vunpack.c.l.b16 %v1185
      %v1262 = vunpack.c.l.b16 %v1186
      %v1263 = vpack.c.b16 %v1259, %v1258
      %v1264 = vpack.c.b16 %v1261, %v1260
      %v1265 = vpack.c.b16 %v1262, %v1262
      %vm1266 = vcmask 64512
      %v1268 = vsel %vm1266, %v1250, 0
      %v1271 = vsel %vm1266, %v1251, 0
      %v1274 = vsel %vm1266, %v1252, 0
      %v1277 = vsel %vm1266, %v1263, 0
      %v1280 = vsel %vm1266, %v1264, 0
      %v1283 = vsel %vm1266, %v1265, 0
      %1285 = vmatpush.bf16.xpose.msra.mxu0 0
      %1286 = vmatpush.bf16.xpose.msra.mxu0 0
      %1287 = vmatpush.bf16.xpose.msra.mxu0 0
      %1288 = vmatpush.bf16.xpose.msra.mxu0 0
      %1289 = vmatpush.bf16.xpose.msra.mxu0 0
      %1290 = vmatpush.bf16.xpose.msra.mxu0 %v1283
      %1291 = vmatpush.bf16.xpose.msra.mxu0 %v1280
      %1292 = vmatpush.bf16.xpose.msra.mxu0 %v1277
      %1293 = vmatmul.bf16.gmra.mxu0 %v1268
      %v1294 = vpop.f32.mrf.mxu0
      %v1295 = vadd.f32 %v938, %v1294
      %v1296 = vpop.f32.mrf.mxu0
      %v1297 = vadd.f32 %v939, %v1296
      %1298 = vmatmul.bf16.gmra.mxu0 %v1271
      %v1299 = vpop.f32.mrf.mxu0
      %v1300 = vadd.f32 %v940, %v1299
      %v1301 = vpop.f32.mrf.mxu0
      %v1302 = vadd.f32 %v941, %v1301
      %1303 = vmatmul.bf16.gmra.mxu0 %v1274
      %v1304 = vpop.f32.mrf.mxu0
      %v1305 = vadd.f32 %v942, %v1304
      %v1306 = vpop.f32.mrf.mxu0
      %1307 = vdwg.mxu0
      %vm1308 = vcmask 326656
      %v1309 = vsel %vm1308, %v1295, -inf
      %1310 = vmax.xlane.f32.xlu0 %v1309
      %v1311 = vpop.xlane.xlu0 %1310
      %v1312 = vsel %vm1308, %v1297, -inf
      %1313 = vmax.xlane.f32.xlu0 %v1312
      %v1314 = vpop.xlane.xlu0 %1313
      %v1315 = vsel %vm1308, %v1300, -inf
      %1316 = vmax.xlane.f32.xlu0 %v1315
      %v1317 = vpop.xlane.xlu0 %1316
      %v1318 = vsel %vm1308, %v1302, -inf
      %1319 = vmax.xlane.f32.xlu0 %v1318
      %v1320 = vpop.xlane.xlu0 %1319
      %v1321 = vsel %vm1308, %v1305, -inf
      %1322 = vmax.xlane.f32.xlu0 %v1321
      %v1323 = vpop.xlane.xlu0 %1322
      %v1324 = vsub.f32 %v1295, %v1311
      %v1325 = vsub.f32 %v1297, %v1314
      %v1326 = vsub.f32 %v1300, %v1317
      %v1327 = vsub.f32 %v1302, %v1320
      %v1328 = vsub.f32 %v1305, %v1323
      %v1329 = vmul.f32 %v1324, 1.442695
      %v1330 = vpow.pop %v1329
      %v1331 = vmul.f32 %v1325, 1.442695
      %v1332 = vpow.pop %v1331
      %v1333 = vmul.f32 %v1326, 1.442695
      %v1334 = vpow.pop %v1333
      %v1335 = vmul.f32 %v1327, 1.442695
      %v1336 = vpow.pop %v1335
      %v1337 = vmul.f32 %v1328, 1.442695
      %v1338 = vpow.pop %v1337
      %v1339 = vsel %vm1308, %v1330, 0.0
      %1340 = vadd.xlane.f32.xlu0 %v1339
      %v1341 = vpop.xlane.xlu0 %1340
      %v1342 = vsel %vm1308, %v1332, 0.0
      %1343 = vadd.xlane.f32.xlu0 %v1342
      %v1344 = vpop.xlane.xlu0 %1343
      %v1345 = vsel %vm1308, %v1334, 0.0
      %1346 = vadd.xlane.f32.xlu0 %v1345
      %v1347 = vpop.xlane.xlu0 %1346
      %v1348 = vsel %vm1308, %v1336, 0.0
      %1349 = vadd.xlane.f32.xlu0 %v1348
      %v1350 = vpop.xlane.xlu0 %1349
      %v1351 = vsel %vm1308, %v1338, 0.0
      %1352 = vadd.xlane.f32.xlu0 %v1351
      %v1353 = vpop.xlane.xlu0 %1352
      %v1354 = vrcp.pop %v1341
      %v1355 = vmul.f32 %v1341, %v1354
      %v1356 = vsub.f32 1.0, %v1355
      %v1357 = vmul.f32 %v1354, %v1356
      %v1358 = vadd.f32 %v1354, %v1357
      %vm1359 = vweird.f32 %v1341
      %vm1360 = vweird.f32 %v1354
      %vm1361 = vmor %vm1359, %vm1360
      %v1362 = vsel %vm1361, %v1354, %v1358
      %v1363 = vand.u32 2147483647, %v1341
      %vm1364 = vcmp.eq.f32.partialorder %v1363, 8.507059e+37
      %v1365 = vand.u32 %v1341, 2147483648
      %v1366 = vor.u32 1.1754944e-38, %v1365
      %v1367 = vsel %vm1364, %v1366, %v1362
      %v1368 = vmul.f32 %v1330, %v1367
      %v1369 = vrcp.pop %v1344
      %v1370 = vmul.f32 %v1344, %v1369
      %v1371 = vsub.f32 1.0, %v1370
      %v1372 = vmul.f32 %v1369, %v1371
      %v1373 = vadd.f32 %v1369, %v1372
      %vm1374 = vweird.f32 %v1344
      %vm1375 = vweird.f32 %v1369
      %vm1376 = vmor %vm1374, %vm1375
      %v1377 = vsel %vm1376, %v1369, %v1373
      %v1378 = vand.u32 2147483647, %v1344
      %vm1379 = vcmp.eq.f32.partialorder %v1378, 8.507059e+37
      %v1380 = vand.u32 %v1344, 2147483648
      %v1381 = vor.u32 1.1754944e-38, %v1380
      %v1382 = vsel %vm1379, %v1381, %v1377
      %v1383 = vmul.f32 %v1332, %v1382
      %v1384 = vrcp.pop %v1347
      %v1385 = vmul.f32 %v1347, %v1384
      %v1386 = vsub.f32 1.0, %v1385
      %v1387 = vmul.f32 %v1384, %v1386
      %v1388 = vadd.f32 %v1384, %v1387
      %vm1389 = vweird.f32 %v1347
      %vm1390 = vweird.f32 %v1384
      %vm1391 = vmor %vm1389, %vm1390
      %v1392 = vsel %vm1391, %v1384, %v1388
      %v1393 = vand.u32 2147483647, %v1347
      %vm1394 = vcmp.eq.f32.partialorder %v1393, 8.507059e+37
      %v1395 = vand.u32 %v1347, 2147483648
      %v1396 = vor.u32 1.1754944e-38, %v1395
      %v1397 = vsel %vm1394, %v1396, %v1392
      %v1398 = vmul.f32 %v1334, %v1397
      %v1399 = vrcp.pop %v1350
      %v1400 = vmul.f32 %v1350, %v1399
      %v1401 = vsub.f32 1.0, %v1400
      %v1402 = vmul.f32 %v1399, %v1401
      %v1403 = vadd.f32 %v1399, %v1402
      %vm1404 = vweird.f32 %v1350
      %vm1405 = vweird.f32 %v1399
      %vm1406 = vmor %vm1404, %vm1405
      %v1407 = vsel %vm1406, %v1399, %v1403
      %v1408 = vand.u32 2147483647, %v1350
      %vm1409 = vcmp.eq.f32.partialorder %v1408, 8.507059e+37
      %v1410 = vand.u32 %v1350, 2147483648
      %v1411 = vor.u32 1.1754944e-38, %v1410
      %v1412 = vsel %vm1409, %v1411, %v1407
      %v1413 = vmul.f32 %v1336, %v1412
      %v1414 = vrcp.pop %v1353
      %v1415 = vmul.f32 %v1353, %v1414
      %v1416 = vsub.f32 1.0, %v1415
      %v1417 = vmul.f32 %v1414, %v1416
      %v1418 = vadd.f32 %v1414, %v1417
      %vm1419 = vweird.f32 %v1353
      %vm1420 = vweird.f32 %v1414
      %vm1421 = vmor %vm1419, %vm1420
      %v1422 = vsel %vm1421, %v1414, %v1418
      %v1423 = vand.u32 2147483647, %v1353
      %vm1424 = vcmp.eq.f32.partialorder %v1423, 8.507059e+37
      %v1425 = vand.u32 %v1353, 2147483648
      %v1426 = vor.u32 1.1754944e-38, %v1425
      %v1427 = vsel %vm1424, %v1426, %v1422
      %v1428 = vmul.f32 %v1338, %v1427
      %v1429 = vpack.c.bf16 %v1383, %v1368
      %v1430 = vpack.c.bf16 %v1413, %v1398
      %v1431 = vpack.c.bf16 %v1428, %v1428
      %v1437 = vunpack.c.l.b16 %v1230
      %v1438 = vunpack.c.l.b16 %v1231
      %v1439 = vunpack.c.l.b16 %v1232
      %v1440 = vunpack.c.l.b16 %v1233
      %v1441 = vunpack.c.l.b16 %v1234
      %v1442 = vpack.c.b16 %v1438, %v1437
      %v1443 = vpack.c.b16 %v1440, %v1439
      %v1444 = vpack.c.b16 %v1441, %v1441
      %v1448 = vsel %vm1308, %v1429, 0
      %v1451 = vsel %vm1308, %v1430, 0
      %v1454 = vsel %vm1308, %v1431, 0
      %vm1456 = vcmask 1043456
      %v1458 = vsel %vm1456, %v1444, 0
      %1460 = vmatpush.bf16.msra.mxu0 0
      %1461 = vmatpush.bf16.msra.mxu0 0
      %1462 = vmatpush.bf16.msra.mxu0 0
      %1463 = vmatpush.bf16.msra.mxu0 0
      %1464 = vmatpush.bf16.msra.mxu0 0
      %1465 = vmatpush.bf16.msra.mxu0 %v1458
      %1466 = vmatpush.bf16.msra.mxu0 %v1443
      %1467 = vmatpush.bf16.msra.mxu0 %v1442
      %1468 = vmatmul.bf16.gmra.mxu0 %v1448
      %v1469 = vpop.f32.mrf.mxu0
      %v1470 = vadd.f32 0.0, %v1469
      %v1471 = vpop.f32.mrf.mxu0
      %v1472 = vadd.f32 0.0, %v1471
      %1473 = vmatmul.bf16.gmra.mxu0 %v1451
      %v1474 = vpop.f32.mrf.mxu0
      %v1475 = vadd.f32 0.0, %v1474
      %v1476 = vpop.f32.mrf.mxu0
      %v1477 = vadd.f32 0.0, %v1476
      %1478 = vmatmul.bf16.gmra.mxu0 %v1454
      %v1479 = vpop.f32.mrf.mxu0
      %v1480 = vadd.f32 0.0, %v1479
      %v1481 = vpop.f32.mrf.mxu0
      %1482 = vdwg.mxu0
      %v1483 = vpack.c.bf16 %v1472, %v1470
      %v1484 = vpack.c.bf16 %v1477, %v1475
      %v1485 = vpack.c.bf16 %v1480, %v1480
      %1486 = vrot.lane.b32.xlu0 %v1250, 120
      %v1487 = vpop.permute.xlu0 %1486
      %1488 = vrot.lane.b32.xlu0 %v1251, 120
      %v1489 = vpop.permute.xlu0 %1488
      %1490 = vrot.lane.b32.xlu0 %v1252, 120
      %v1491 = vpop.permute.xlu0 %1490
      %1492 = vrot.lane.b32.xlu0 %v1263, 120
      %v1493 = vpop.permute.xlu0 %1492
      %1494 = vrot.lane.b32.xlu0 %v1264, 120
      %v1495 = vpop.permute.xlu0 %1494
      %1496 = vrot.lane.b32.xlu0 %v1265, 120
      %v1497 = vpop.permute.xlu0 %1496
      %v1499 = vsel %vm1266, %v1487, 0
      %v1502 = vsel %vm1266, %v1489, 0
      %v1505 = vsel %vm1266, %v1491, 0
      %v1508 = vsel %vm1266, %v1493, 0
      %v1511 = vsel %vm1266, %v1495, 0
      %v1514 = vsel %vm1266, %v1497, 0
      %1516 = vmatpush.bf16.xpose.msra.mxu0 0
      %1517 = vmatpush.bf16.xpose.msra.mxu0 0
      %1518 = vmatpush.bf16.xpose.msra.mxu0 0
      %1519 = vmatpush.bf16.xpose.msra.mxu0 0
      %1520 = vmatpush.bf16.xpose.msra.mxu0 0
      %1521 = vmatpush.bf16.xpose.msra.mxu0 %v1514
      %1522 = vmatpush.bf16.xpose.msra.mxu0 %v1511
      %1523 = vmatpush.bf16.xpose.msra.mxu0 %v1508
      %1524 = vmatmul.bf16.gmra.mxu0 %v1499
      %v1525 = vpop.f32.mrf.mxu0
      %v1526 = vadd.f32 %v938, %v1525
      %v1527 = vpop.f32.mrf.mxu0
      %v1528 = vadd.f32 %v939, %v1527
      %1529 = vmatmul.bf16.gmra.mxu0 %v1502
      %v1530 = vpop.f32.mrf.mxu0
      %v1531 = vadd.f32 %v940, %v1530
      %v1532 = vpop.f32.mrf.mxu0
      %v1533 = vadd.f32 %v941, %v1532
      %1534 = vmatmul.bf16.gmra.mxu0 %v1505
      %v1535 = vpop.f32.mrf.mxu0
      %v1536 = vadd.f32 %v942, %v1535
      %v1537 = vpop.f32.mrf.mxu0
      %1538 = vdwg.mxu0
      %v1539 = vsel %vm1308, %v1526, -inf
      %1540 = vmax.xlane.f32.xlu0 %v1539
      %v1541 = vpop.xlane.xlu0 %1540
      %v1542 = vsel %vm1308, %v1528, -inf
      %1543 = vmax.xlane.f32.xlu0 %v1542
      %v1544 = vpop.xlane.xlu0 %1543
      %v1545 = vsel %vm1308, %v1531, -inf
      %1546 = vmax.xlane.f32.xlu0 %v1545
      %v1547 = vpop.xlane.xlu0 %1546
      %v1548 = vsel %vm1308, %v1533, -inf
      %1549 = vmax.xlane.f32.xlu0 %v1548
      %v1550 = vpop.xlane.xlu0 %1549
      %v1551 = vsel %vm1308, %v1536, -inf
      %1552 = vmax.xlane.f32.xlu0 %v1551
      %v1553 = vpop.xlane.xlu0 %1552
      %v1554 = vsub.f32 %v1526, %v1541
      %v1555 = vsub.f32 %v1528, %v1544
      %v1556 = vsub.f32 %v1531, %v1547
      %v1557 = vsub.f32 %v1533, %v1550
      %v1558 = vsub.f32 %v1536, %v1553
      %v1559 = vmul.f32 %v1554, 1.442695
      %v1560 = vpow.pop %v1559
      %v1561 = vmul.f32 %v1555, 1.442695
      %v1562 = vpow.pop %v1561
      %v1563 = vmul.f32 %v1556, 1.442695
      %v1564 = vpow.pop %v1563
      %v1565 = vmul.f32 %v1557, 1.442695
      %v1566 = vpow.pop %v1565
      %v1567 = vmul.f32 %v1558, 1.442695
      %v1568 = vpow.pop %v1567
      %v1569 = vsel %vm1308, %v1560, 0.0
      %1570 = vadd.xlane.f32.xlu0 %v1569
      %v1571 = vpop.xlane.xlu0 %1570
      %v1572 = vsel %vm1308, %v1562, 0.0
      %1573 = vadd.xlane.f32.xlu0 %v1572
      %v1574 = vpop.xlane.xlu0 %1573
      %v1575 = vsel %vm1308, %v1564, 0.0
      %1576 = vadd.xlane.f32.xlu0 %v1575
      %v1577 = vpop.xlane.xlu0 %1576
      %v1578 = vsel %vm1308, %v1566, 0.0
      %1579 = vadd.xlane.f32.xlu0 %v1578
      %v1580 = vpop.xlane.xlu0 %1579
      %v1581 = vsel %vm1308, %v1568, 0.0
      %1582 = vadd.xlane.f32.xlu0 %v1581
      %v1583 = vpop.xlane.xlu0 %1582
      %v1584 = vrcp.pop %v1571
      %v1585 = vmul.f32 %v1571, %v1584
      %v1586 = vsub.f32 1.0, %v1585
      %v1587 = vmul.f32 %v1584, %v1586
      %v1588 = vadd.f32 %v1584, %v1587
      %vm1589 = vweird.f32 %v1571
      %vm1590 = vweird.f32 %v1584
      %vm1591 = vmor %vm1589, %vm1590
      %v1592 = vsel %vm1591, %v1584, %v1588
      %v1593 = vand.u32 2147483647, %v1571
      %vm1594 = vcmp.eq.f32.partialorder %v1593, 8.507059e+37
      %v1595 = vand.u32 %v1571, 2147483648
      %v1596 = vor.u32 1.1754944e-38, %v1595
      %v1597 = vsel %vm1594, %v1596, %v1592
      %v1598 = vmul.f32 %v1560, %v1597
      %v1599 = vrcp.pop %v1574
      %v1600 = vmul.f32 %v1574, %v1599
      %v1601 = vsub.f32 1.0, %v1600
      %v1602 = vmul.f32 %v1599, %v1601
      %v1603 = vadd.f32 %v1599, %v1602
      %vm1604 = vweird.f32 %v1574
      %vm1605 = vweird.f32 %v1599
      %vm1606 = vmor %vm1604, %vm1605
      %v1607 = vsel %vm1606, %v1599, %v1603
      %v1608 = vand.u32 2147483647, %v1574
      %vm1609 = vcmp.eq.f32.partialorder %v1608, 8.507059e+37
      %v1610 = vand.u32 %v1574, 2147483648
      %v1611 = vor.u32 1.1754944e-38, %v1610
      %v1612 = vsel %vm1609, %v1611, %v1607
      %v1613 = vmul.f32 %v1562, %v1612
      %v1614 = vrcp.pop %v1577
      %v1615 = vmul.f32 %v1577, %v1614
      %v1616 = vsub.f32 1.0, %v1615
      %v1617 = vmul.f32 %v1614, %v1616
      %v1618 = vadd.f32 %v1614, %v1617
      %vm1619 = vweird.f32 %v1577
      %vm1620 = vweird.f32 %v1614
      %vm1621 = vmor %vm1619, %vm1620
      %v1622 = vsel %vm1621, %v1614, %v1618
      %v1623 = vand.u32 2147483647, %v1577
      %vm1624 = vcmp.eq.f32.partialorder %v1623, 8.507059e+37
      %v1625 = vand.u32 %v1577, 2147483648
      %v1626 = vor.u32 1.1754944e-38, %v1625
      %v1627 = vsel %vm1624, %v1626, %v1622
      %v1628 = vmul.f32 %v1564, %v1627
      %v1629 = vrcp.pop %v1580
      %v1630 = vmul.f32 %v1580, %v1629
      %v1631 = vsub.f32 1.0, %v1630
      %v1632 = vmul.f32 %v1629, %v1631
      %v1633 = vadd.f32 %v1629, %v1632
      %vm1634 = vweird.f32 %v1580
      %vm1635 = vweird.f32 %v1629
      %vm1636 = vmor %vm1634, %vm1635
      %v1637 = vsel %vm1636, %v1629, %v1633
      %v1638 = vand.u32 2147483647, %v1580
      %vm1639 = vcmp.eq.f32.partialorder %v1638, 8.507059e+37
      %v1640 = vand.u32 %v1580, 2147483648
      %v1641 = vor.u32 1.1754944e-38, %v1640
      %v1642 = vsel %vm1639, %v1641, %v1637
      %v1643 = vmul.f32 %v1566, %v1642
      %v1644 = vrcp.pop %v1583
      %v1645 = vmul.f32 %v1583, %v1644
      %v1646 = vsub.f32 1.0, %v1645
      %v1647 = vmul.f32 %v1644, %v1646
      %v1648 = vadd.f32 %v1644, %v1647
      %vm1649 = vweird.f32 %v1583
      %vm1650 = vweird.f32 %v1644
      %vm1651 = vmor %vm1649, %vm1650
      %v1652 = vsel %vm1651, %v1644, %v1648
      %v1653 = vand.u32 2147483647, %v1583
      %vm1654 = vcmp.eq.f32.partialorder %v1653, 8.507059e+37
      %v1655 = vand.u32 %v1583, 2147483648
      %v1656 = vor.u32 1.1754944e-38, %v1655
      %v1657 = vsel %vm1654, %v1656, %v1652
      %v1658 = vmul.f32 %v1568, %v1657
      %v1659 = vpack.c.bf16 %v1613, %v1598
      %v1660 = vpack.c.bf16 %v1643, %v1628
      %v1661 = vpack.c.bf16 %v1658, %v1658
      %1662 = vrot.lane.b32.xlu0 %v1442, 120
      %v1663 = vpop.permute.xlu0 %1662
      %1664 = vrot.lane.b32.xlu0 %v1443, 120
      %v1665 = vpop.permute.xlu0 %1664
      %1666 = vrot.lane.b32.xlu0 %v1444, 120
      %v1667 = vpop.permute.xlu0 %1666
      %v1671 = vsel %vm1308, %v1659, 0
      %v1674 = vsel %vm1308, %v1660, 0
      %v1677 = vsel %vm1308, %v1661, 0
      %v1680 = vsel %vm1456, %v1667, 0
      %1682 = vmatpush.bf16.msra.mxu0 0
      %1683 = vmatpush.bf16.msra.mxu0 0
      %1684 = vmatpush.bf16.msra.mxu0 0
      %1685 = vmatpush.bf16.msra.mxu0 0
      %1686 = vmatpush.bf16.msra.mxu0 0
      %1687 = vmatpush.bf16.msra.mxu0 %v1680
      %1688 = vmatpush.bf16.msra.mxu0 %v1665
      %1689 = vmatpush.bf16.msra.mxu0 %v1663
      %1690 = vmatmul.bf16.gmra.mxu0 %v1671
      %v1691 = vpop.f32.mrf.mxu0
      %v1692 = vadd.f32 0.0, %v1691
      %v1693 = vpop.f32.mrf.mxu0
      %v1694 = vadd.f32 0.0, %v1693
      %1695 = vmatmul.bf16.gmra.mxu0 %v1674
      %v1696 = vpop.f32.mrf.mxu0
      %v1697 = vadd.f32 0.0, %v1696
      %v1698 = vpop.f32.mrf.mxu0
      %v1699 = vadd.f32 0.0, %v1698
      %1700 = vmatmul.bf16.gmra.mxu0 %v1677
      %v1701 = vpop.f32.mrf.mxu0
      %v1702 = vadd.f32 0.0, %v1701
      %v1703 = vpop.f32.mrf.mxu0
      %1704 = vdwg.mxu0
      %v1705 = vpack.c.bf16 %v1694, %v1692
      %v1706 = vpack.c.bf16 %v1699, %v1697
      %v1707 = vpack.c.bf16 %v1702, %v1702
      %v1709 = vsel %vm1266, %v1705, 0
      %v1712 = vsel %vm1266, %v1706, 0
      %v1715 = vsel %vm1266, %v1707, 0
      %v1718 = vsel %vm1456, %v1236, 0
      %1720 = vmatpush.bf16.msra.mxu0 0
      %1721 = vmatpush.bf16.msra.mxu0 0
      %1722 = vmatpush.bf16.msra.mxu0 0
      %1723 = vmatpush.bf16.msra.mxu0 0
      %1724 = vmatpush.bf16.msra.mxu0 0
      %1725 = vmatpush.bf16.msra.mxu0 0
      %1726 = vmatpush.bf16.msra.mxu0 0
      %1727 = vmatpush.bf16.msra.mxu0 %v1718
      %1728 = vmatmul.bf16.gmra.mxu0 %v1709
      %v1729 = vpop.f32.mrf.mxu0
      %v1730 = vadd.f32 0.0, %v1729
      %v1731 = vpop.f32.mrf.mxu0
      %v1732 = vadd.f32 0.0, %v1731
      %1733 = vmatmul.bf16.gmra.mxu0 %v1712
      %v1734 = vpop.f32.mrf.mxu0
      %v1735 = vadd.f32 0.0, %v1734
      %v1736 = vpop.f32.mrf.mxu0
      %v1737 = vadd.f32 0.0, %v1736
      %1738 = vmatmul.bf16.gmra.mxu0 %v1715
      %v1739 = vpop.f32.mrf.mxu0
      %v1740 = vadd.f32 0.0, %v1739
      %v1741 = vpop.f32.mrf.mxu0
      %1742 = vdwg.mxu0
      %v1744 = vsel %vm1266, %v1483, 0
      %v1747 = vsel %vm1266, %v1484, 0
      %v1750 = vsel %vm1266, %v1485, 0
      %v1753 = vsel %vm1456, %v1235, 0
      %1755 = vmatpush.bf16.msra.mxu0 0
      %1756 = vmatpush.bf16.msra.mxu0 0
      %1757 = vmatpush.bf16.msra.mxu0 0
      %1758 = vmatpush.bf16.msra.mxu0 0
      %1759 = vmatpush.bf16.msra.mxu0 0
      %1760 = vmatpush.bf16.msra.mxu0 0
      %1761 = vmatpush.bf16.msra.mxu0 0
      %1762 = vmatpush.bf16.msra.mxu0 %v1753
      %1763 = vmatmul.bf16.gmra.mxu0 %v1744
      %v1764 = vpop.f32.mrf.mxu0
      %v1765 = vadd.f32 %v1730, %v1764
      %v1766 = vpop.f32.mrf.mxu0
      %v1767 = vadd.f32 %v1732, %v1766
      %1768 = vmatmul.bf16.gmra.mxu0 %v1747
      %v1769 = vpop.f32.mrf.mxu0
      %v1770 = vadd.f32 %v1735, %v1769
      %v1771 = vpop.f32.mrf.mxu0
      %v1772 = vadd.f32 %v1737, %v1771
      %1773 = vmatmul.bf16.gmra.mxu0 %v1750
      %v1774 = vpop.f32.mrf.mxu0
      %v1775 = vadd.f32 %v1740, %v1774
      %v1776 = vpop.f32.mrf.mxu0
      %1777 = vdwg.mxu0
      %1778 = vrot.lane.b32.xlu0 %v1250, 112
      %v1779 = vpop.permute.xlu0 %1778
      %1780 = vrot.lane.b32.xlu0 %v1251, 112
      %v1781 = vpop.permute.xlu0 %1780
      %1782 = vrot.lane.b32.xlu0 %v1252, 112
      %v1783 = vpop.permute.xlu0 %1782
      %1784 = vrot.lane.b32.xlu0 %v1263, 112
      %v1785 = vpop.permute.xlu0 %1784
      %1786 = vrot.lane.b32.xlu0 %v1264, 112
      %v1787 = vpop.permute.xlu0 %1786
      %1788 = vrot.lane.b32.xlu0 %v1265, 112
      %v1789 = vpop.permute.xlu0 %1788
      %v1791 = vsel %vm1266, %v1779, 0
      %v1794 = vsel %vm1266, %v1781, 0
      %v1797 = vsel %vm1266, %v1783, 0
      %v1800 = vsel %vm1266, %v1785, 0
      %v1803 = vsel %vm1266, %v1787, 0
      %v1806 = vsel %vm1266, %v1789, 0
      %1808 = vmatpush.bf16.xpose.msra.mxu0 0
      %1809 = vmatpush.bf16.xpose.msra.mxu0 0
      %1810 = vmatpush.bf16.xpose.msra.mxu0 0
      %1811 = vmatpush.bf16.xpose.msra.mxu0 0
      %1812 = vmatpush.bf16.xpose.msra.mxu0 0
      %1813 = vmatpush.bf16.xpose.msra.mxu0 %v1806
      %1814 = vmatpush.bf16.xpose.msra.mxu0 %v1803
      %1815 = vmatpush.bf16.xpose.msra.mxu0 %v1800
      %1816 = vmatmul.bf16.gmra.mxu0 %v1791
      %v1817 = vpop.f32.mrf.mxu0
      %v1818 = vadd.f32 %v938, %v1817
      %v1819 = vpop.f32.mrf.mxu0
      %v1820 = vadd.f32 %v939, %v1819
      %1821 = vmatmul.bf16.gmra.mxu0 %v1794
      %v1822 = vpop.f32.mrf.mxu0
      %v1823 = vadd.f32 %v940, %v1822
      %v1824 = vpop.f32.mrf.mxu0
      %v1825 = vadd.f32 %v941, %v1824
      %1826 = vmatmul.bf16.gmra.mxu0 %v1797
      %v1827 = vpop.f32.mrf.mxu0
      %v1828 = vadd.f32 %v942, %v1827
      %v1829 = vpop.f32.mrf.mxu0
      %1830 = vdwg.mxu0
      %v1831 = vsel %vm1308, %v1818, -inf
      %1832 = vmax.xlane.f32.xlu0 %v1831
      %v1833 = vpop.xlane.xlu0 %1832
      %v1834 = vsel %vm1308, %v1820, -inf
      %1835 = vmax.xlane.f32.xlu0 %v1834
      %v1836 = vpop.xlane.xlu0 %1835
      %v1837 = vsel %vm1308, %v1823, -inf
      %1838 = vmax.xlane.f32.xlu0 %v1837
      %v1839 = vpop.xlane.xlu0 %1838
      %v1840 = vsel %vm1308, %v1825, -inf
      %1841 = vmax.xlane.f32.xlu0 %v1840
      %v1842 = vpop.xlane.xlu0 %1841
      %v1843 = vsel %vm1308, %v1828, -inf
      %1844 = vmax.xlane.f32.xlu0 %v1843
      %v1845 = vpop.xlane.xlu0 %1844
      %v1846 = vsub.f32 %v1818, %v1833
      %v1847 = vsub.f32 %v1820, %v1836
      %v1848 = vsub.f32 %v1823, %v1839
      %v1849 = vsub.f32 %v1825, %v1842
      %v1850 = vsub.f32 %v1828, %v1845
      %v1851 = vmul.f32 %v1846, 1.442695
      %v1852 = vpow.pop %v1851
      %v1853 = vmul.f32 %v1847, 1.442695
      %v1854 = vpow.pop %v1853
      %v1855 = vmul.f32 %v1848, 1.442695
      %v1856 = vpow.pop %v1855
      %v1857 = vmul.f32 %v1849, 1.442695
      %v1858 = vpow.pop %v1857
      %v1859 = vmul.f32 %v1850, 1.442695
      %v1860 = vpow.pop %v1859
      %v1861 = vsel %vm1308, %v1852, 0.0
      %1862 = vadd.xlane.f32.xlu0 %v1861
      %v1863 = vpop.xlane.xlu0 %1862
      %v1864 = vsel %vm1308, %v1854, 0.0
      %1865 = vadd.xlane.f32.xlu0 %v1864
      %v1866 = vpop.xlane.xlu0 %1865
      %v1867 = vsel %vm1308, %v1856, 0.0
      %1868 = vadd.xlane.f32.xlu0 %v1867
      %v1869 = vpop.xlane.xlu0 %1868
      %v1870 = vsel %vm1308, %v1858, 0.0
      %1871 = vadd.xlane.f32.xlu0 %v1870
      %v1872 = vpop.xlane.xlu0 %1871
      %v1873 = vsel %vm1308, %v1860, 0.0
      %1874 = vadd.xlane.f32.xlu0 %v1873
      %v1875 = vpop.xlane.xlu0 %1874
      %v1876 = vrcp.pop %v1863
      %v1877 = vmul.f32 %v1863, %v1876
      %v1878 = vsub.f32 1.0, %v1877
      %v1879 = vmul.f32 %v1876, %v1878
      %v1880 = vadd.f32 %v1876, %v1879
      %vm1881 = vweird.f32 %v1863
      %vm1882 = vweird.f32 %v1876
      %vm1883 = vmor %vm1881, %vm1882
      %v1884 = vsel %vm1883, %v1876, %v1880
      %v1885 = vand.u32 2147483647, %v1863
      %vm1886 = vcmp.eq.f32.partialorder %v1885, 8.507059e+37
      %v1887 = vand.u32 %v1863, 2147483648
      %v1888 = vor.u32 1.1754944e-38, %v1887
      %v1889 = vsel %vm1886, %v1888, %v1884
      %v1890 = vmul.f32 %v1852, %v1889
      %v1891 = vrcp.pop %v1866
      %v1892 = vmul.f32 %v1866, %v1891
      %v1893 = vsub.f32 1.0, %v1892
      %v1894 = vmul.f32 %v1891, %v1893
      %v1895 = vadd.f32 %v1891, %v1894
      %vm1896 = vweird.f32 %v1866
      %vm1897 = vweird.f32 %v1891
      %vm1898 = vmor %vm1896, %vm1897
      %v1899 = vsel %vm1898, %v1891, %v1895
      %v1900 = vand.u32 2147483647, %v1866
      %vm1901 = vcmp.eq.f32.partialorder %v1900, 8.507059e+37
      %v1902 = vand.u32 %v1866, 2147483648
      %v1903 = vor.u32 1.1754944e-38, %v1902
      %v1904 = vsel %vm1901, %v1903, %v1899
      %v1905 = vmul.f32 %v1854, %v1904
      %v1906 = vrcp.pop %v1869
      %v1907 = vmul.f32 %v1869, %v1906
      %v1908 = vsub.f32 1.0, %v1907
      %v1909 = vmul.f32 %v1906, %v1908
      %v1910 = vadd.f32 %v1906, %v1909
      %vm1911 = vweird.f32 %v1869
      %vm1912 = vweird.f32 %v1906
      %vm1913 = vmor %vm1911, %vm1912
      %v1914 = vsel %vm1913, %v1906, %v1910
      %v1915 = vand.u32 2147483647, %v1869
      %vm1916 = vcmp.eq.f32.partialorder %v1915, 8.507059e+37
      %v1917 = vand.u32 %v1869, 2147483648
      %v1918 = vor.u32 1.1754944e-38, %v1917
      %v1919 = vsel %vm1916, %v1918, %v1914
      %v1920 = vmul.f32 %v1856, %v1919
      %v1921 = vrcp.pop %v1872
      %v1922 = vmul.f32 %v1872, %v1921
      %v1923 = vsub.f32 1.0, %v1922
      %v1924 = vmul.f32 %v1921, %v1923
      %v1925 = vadd.f32 %v1921, %v1924
      %vm1926 = vweird.f32 %v1872
      %vm1927 = vweird.f32 %v1921
      %vm1928 = vmor %vm1926, %vm1927
      %v1929 = vsel %vm1928, %v1921, %v1925
      %v1930 = vand.u32 2147483647, %v1872
      %vm1931 = vcmp.eq.f32.partialorder %v1930, 8.507059e+37
      %v1932 = vand.u32 %v1872, 2147483648
      %v1933 = vor.u32 1.1754944e-38, %v1932
      %v1934 = vsel %vm1931, %v1933, %v1929
      %v1935 = vmul.f32 %v1858, %v1934
      %v1936 = vrcp.pop %v1875
      %v1937 = vmul.f32 %v1875, %v1936
      %v1938 = vsub.f32 1.0, %v1937
      %v1939 = vmul.f32 %v1936, %v1938
      %v1940 = vadd.f32 %v1936, %v1939
      %vm1941 = vweird.f32 %v1875
      %vm1942 = vweird.f32 %v1936
      %vm1943 = vmor %vm1941, %vm1942
      %v1944 = vsel %vm1943, %v1936, %v1940
      %v1945 = vand.u32 2147483647, %v1875
      %vm1946 = vcmp.eq.f32.partialorder %v1945, 8.507059e+37
      %v1947 = vand.u32 %v1875, 2147483648
      %v1948 = vor.u32 1.1754944e-38, %v1947
      %v1949 = vsel %vm1946, %v1948, %v1944
      %v1950 = vmul.f32 %v1860, %v1949
      %v1951 = vpack.c.bf16 %v1905, %v1890
      %v1952 = vpack.c.bf16 %v1935, %v1920
      %v1953 = vpack.c.bf16 %v1950, %v1950
      %1954 = vrot.lane.b32.xlu0 %v1442, 112
      %v1955 = vpop.permute.xlu0 %1954
      %1956 = vrot.lane.b32.xlu0 %v1443, 112
      %v1957 = vpop.permute.xlu0 %1956
      %1958 = vrot.lane.b32.xlu0 %v1444, 112
      %v1959 = vpop.permute.xlu0 %1958
      %v1963 = vsel %vm1308, %v1951, 0
      %v1966 = vsel %vm1308, %v1952, 0
      %v1969 = vsel %vm1308, %v1953, 0
      %v1972 = vsel %vm1456, %v1959, 0
      %1974 = vmatpush.bf16.msra.mxu0 0
      %1975 = vmatpush.bf16.msra.mxu0 0
      %1976 = vmatpush.bf16.msra.mxu0 0
      %1977 = vmatpush.bf16.msra.mxu0 0
      %1978 = vmatpush.bf16.msra.mxu0 0
      %1979 = vmatpush.bf16.msra.mxu0 %v1972
      %1980 = vmatpush.bf16.msra.mxu0 %v1957
      %1981 = vmatpush.bf16.msra.mxu0 %v1955
      %1982 = vmatmul.bf16.gmra.mxu0 %v1963
      %v1983 = vpop.f32.mrf.mxu0
      %v1984 = vadd.f32 0.0, %v1983
      %v1985 = vpop.f32.mrf.mxu0
      %v1986 = vadd.f32 0.0, %v1985
      %1987 = vmatmul.bf16.gmra.mxu0 %v1966
      %v1988 = vpop.f32.mrf.mxu0
      %v1989 = vadd.f32 0.0, %v1988
      %v1990 = vpop.f32.mrf.mxu0
      %v1991 = vadd.f32 0.0, %v1990
      %1992 = vmatmul.bf16.gmra.mxu0 %v1969
      %v1993 = vpop.f32.mrf.mxu0
      %v1994 = vadd.f32 0.0, %v1993
      %v1995 = vpop.f32.mrf.mxu0
      %1996 = vdwg.mxu0
      %v1997 = vpack.c.bf16 %v1986, %v1984
      %v1998 = vpack.c.bf16 %v1991, %v1989
      %v1999 = vpack.c.bf16 %v1994, %v1994
      %v2001 = vsel %vm1266, %v1997, 0
      %v2004 = vsel %vm1266, %v1998, 0
      %v2007 = vsel %vm1266, %v1999, 0
      %v2010 = vsel %vm1456, %v1237, 0
      %2012 = vmatpush.bf16.msra.mxu0 0
      %2013 = vmatpush.bf16.msra.mxu0 0
      %2014 = vmatpush.bf16.msra.mxu0 0
      %2015 = vmatpush.bf16.msra.mxu0 0
      %2016 = vmatpush.bf16.msra.mxu0 0
      %2017 = vmatpush.bf16.msra.mxu0 0
      %2018 = vmatpush.bf16.msra.mxu0 0
      %2019 = vmatpush.bf16.msra.mxu0 %v2010
      %2020 = vmatmul.bf16.gmra.mxu0 %v2001
      %v2021 = vpop.f32.mrf.mxu0
      %v2022 = vadd.f32 0.0, %v2021
      %v2023 = vpop.f32.mrf.mxu0
      %v2024 = vadd.f32 0.0, %v2023
      %2025 = vmatmul.bf16.gmra.mxu0 %v2004
      %v2026 = vpop.f32.mrf.mxu0
      %v2027 = vadd.f32 0.0, %v2026
      %v2028 = vpop.f32.mrf.mxu0
      %v2029 = vadd.f32 0.0, %v2028
      %2030 = vmatmul.bf16.gmra.mxu0 %v2007
      %v2031 = vpop.f32.mrf.mxu0
      %v2032 = vadd.f32 0.0, %v2031
      %v2033 = vpop.f32.mrf.mxu0
      %2034 = vdwg.mxu0
      %v2035 = vadd.f32 %v1765, %v2022
      %v2036 = vadd.f32 %v1767, %v2024
      %v2037 = vadd.f32 %v1770, %v2027
      %v2038 = vadd.f32 %v1772, %v2029
      %v2039 = vadd.f32 %v1775, %v2032
      %2040 = vrot.lane.b32.xlu0 %v1250, 104
      %v2041 = vpop.permute.xlu0 %2040
      %2042 = vrot.lane.b32.xlu0 %v1251, 104
      %v2043 = vpop.permute.xlu0 %2042
      %2044 = vrot.lane.b32.xlu0 %v1252, 104
      %v2045 = vpop.permute.xlu0 %2044
      %2046 = vrot.lane.b32.xlu0 %v1263, 104
      %v2047 = vpop.permute.xlu0 %2046
      %2048 = vrot.lane.b32.xlu0 %v1264, 104
      %v2049 = vpop.permute.xlu0 %2048
      %2050 = vrot.lane.b32.xlu0 %v1265, 104
      %v2051 = vpop.permute.xlu0 %2050
      %v2053 = vsel %vm1266, %v2041, 0
      %v2056 = vsel %vm1266, %v2043, 0
      %v2059 = vsel %vm1266, %v2045, 0
      %v2062 = vsel %vm1266, %v2047, 0
      %v2065 = vsel %vm1266, %v2049, 0
      %v2068 = vsel %vm1266, %v2051, 0
      %2070 = vmatpush.bf16.xpose.msra.mxu0 0
      %2071 = vmatpush.bf16.xpose.msra.mxu0 0
      %2072 = vmatpush.bf16.xpose.msra.mxu0 0
      %2073 = vmatpush.bf16.xpose.msra.mxu0 0
      %2074 = vmatpush.bf16.xpose.msra.mxu0 0
      %2075 = vmatpush.bf16.xpose.msra.mxu0 %v2068
      %2076 = vmatpush.bf16.xpose.msra.mxu0 %v2065
      %2077 = vmatpush.bf16.xpose.msra.mxu0 %v2062
      %2078 = vmatmul.bf16.gmra.mxu0 %v2053
      %v2079 = vpop.f32.mrf.mxu0
      %v2080 = vadd.f32 %v938, %v2079
      %v2081 = vpop.f32.mrf.mxu0
      %v2082 = vadd.f32 %v939, %v2081
      %2083 = vmatmul.bf16.gmra.mxu0 %v2056
      %v2084 = vpop.f32.mrf.mxu0
      %v2085 = vadd.f32 %v940, %v2084
      %v2086 = vpop.f32.mrf.mxu0
      %v2087 = vadd.f32 %v941, %v2086
      %2088 = vmatmul.bf16.gmra.mxu0 %v2059
      %v2089 = vpop.f32.mrf.mxu0
      %v2090 = vadd.f32 %v942, %v2089
      %v2091 = vpop.f32.mrf.mxu0
      %2092 = vdwg.mxu0
      %v2093 = vsel %vm1308, %v2080, -inf
      %2094 = vmax.xlane.f32.xlu0 %v2093
      %v2095 = vpop.xlane.xlu0 %2094
      %v2096 = vsel %vm1308, %v2082, -inf
      %2097 = vmax.xlane.f32.xlu0 %v2096
      %v2098 = vpop.xlane.xlu0 %2097
      %v2099 = vsel %vm1308, %v2085, -inf
      %2100 = vmax.xlane.f32.xlu0 %v2099
      %v2101 = vpop.xlane.xlu0 %2100
      %v2102 = vsel %vm1308, %v2087, -inf
      %2103 = vmax.xlane.f32.xlu0 %v2102
      %v2104 = vpop.xlane.xlu0 %2103
      %v2105 = vsel %vm1308, %v2090, -inf
      %2106 = vmax.xlane.f32.xlu0 %v2105
      %v2107 = vpop.xlane.xlu0 %2106
      %v2108 = vsub.f32 %v2080, %v2095
      %v2109 = vsub.f32 %v2082, %v2098
      %v2110 = vsub.f32 %v2085, %v2101
      %v2111 = vsub.f32 %v2087, %v2104
      %v2112 = vsub.f32 %v2090, %v2107
      %v2113 = vmul.f32 %v2108, 1.442695
      %v2114 = vpow.pop %v2113
      %v2115 = vmul.f32 %v2109, 1.442695
      %v2116 = vpow.pop %v2115
      %v2117 = vmul.f32 %v2110, 1.442695
      %v2118 = vpow.pop %v2117
      %v2119 = vmul.f32 %v2111, 1.442695
      %v2120 = vpow.pop %v2119
      %v2121 = vmul.f32 %v2112, 1.442695
      %v2122 = vpow.pop %v2121
      %v2123 = vsel %vm1308, %v2114, 0.0
      %2124 = vadd.xlane.f32.xlu0 %v2123
      %v2125 = vpop.xlane.xlu0 %2124
      %v2126 = vsel %vm1308, %v2116, 0.0
      %2127 = vadd.xlane.f32.xlu0 %v2126
      %v2128 = vpop.xlane.xlu0 %2127
      %v2129 = vsel %vm1308, %v2118, 0.0
      %2130 = vadd.xlane.f32.xlu0 %v2129
      %v2131 = vpop.xlane.xlu0 %2130
      %v2132 = vsel %vm1308, %v2120, 0.0
      %2133 = vadd.xlane.f32.xlu0 %v2132
      %v2134 = vpop.xlane.xlu0 %2133
      %v2135 = vsel %vm1308, %v2122, 0.0
      %2136 = vadd.xlane.f32.xlu0 %v2135
      %v2137 = vpop.xlane.xlu0 %2136
      %v2138 = vrcp.pop %v2125
      %v2139 = vmul.f32 %v2125, %v2138
      %v2140 = vsub.f32 1.0, %v2139
      %v2141 = vmul.f32 %v2138, %v2140
      %v2142 = vadd.f32 %v2138, %v2141
      %vm2143 = vweird.f32 %v2125
      %vm2144 = vweird.f32 %v2138
      %vm2145 = vmor %vm2143, %vm2144
      %v2146 = vsel %vm2145, %v2138, %v2142
      %v2147 = vand.u32 2147483647, %v2125
      %vm2148 = vcmp.eq.f32.partialorder %v2147, 8.507059e+37
      %v2149 = vand.u32 %v2125, 2147483648
      %v2150 = vor.u32 1.1754944e-38, %v2149
      %v2151 = vsel %vm2148, %v2150, %v2146
      %v2152 = vmul.f32 %v2114, %v2151
      %v2153 = vrcp.pop %v2128
      %v2154 = vmul.f32 %v2128, %v2153
      %v2155 = vsub.f32 1.0, %v2154
      %v2156 = vmul.f32 %v2153, %v2155
      %v2157 = vadd.f32 %v2153, %v2156
      %vm2158 = vweird.f32 %v2128
      %vm2159 = vweird.f32 %v2153
      %vm2160 = vmor %vm2158, %vm2159
      %v2161 = vsel %vm2160, %v2153, %v2157
      %v2162 = vand.u32 2147483647, %v2128
      %vm2163 = vcmp.eq.f32.partialorder %v2162, 8.507059e+37
      %v2164 = vand.u32 %v2128, 2147483648
      %v2165 = vor.u32 1.1754944e-38, %v2164
      %v2166 = vsel %vm2163, %v2165, %v2161
      %v2167 = vmul.f32 %v2116, %v2166
      %v2168 = vrcp.pop %v2131
      %v2169 = vmul.f32 %v2131, %v2168
      %v2170 = vsub.f32 1.0, %v2169
      %v2171 = vmul.f32 %v2168, %v2170
      %v2172 = vadd.f32 %v2168, %v2171
      %vm2173 = vweird.f32 %v2131
      %vm2174 = vweird.f32 %v2168
      %vm2175 = vmor %vm2173, %vm2174
      %v2176 = vsel %vm2175, %v2168, %v2172
      %v2177 = vand.u32 2147483647, %v2131
      %vm2178 = vcmp.eq.f32.partialorder %v2177, 8.507059e+37
      %v2179 = vand.u32 %v2131, 2147483648
      %v2180 = vor.u32 1.1754944e-38, %v2179
      %v2181 = vsel %vm2178, %v2180, %v2176
      %v2182 = vmul.f32 %v2118, %v2181
      %v2183 = vrcp.pop %v2134
      %v2184 = vmul.f32 %v2134, %v2183
      %v2185 = vsub.f32 1.0, %v2184
      %v2186 = vmul.f32 %v2183, %v2185
      %v2187 = vadd.f32 %v2183, %v2186
      %vm2188 = vweird.f32 %v2134
      %vm2189 = vweird.f32 %v2183
      %vm2190 = vmor %vm2188, %vm2189
      %v2191 = vsel %vm2190, %v2183, %v2187
      %v2192 = vand.u32 2147483647, %v2134
      %vm2193 = vcmp.eq.f32.partialorder %v2192, 8.507059e+37
      %v2194 = vand.u32 %v2134, 2147483648
      %v2195 = vor.u32 1.1754944e-38, %v2194
      %v2196 = vsel %vm2193, %v2195, %v2191
      %v2197 = vmul.f32 %v2120, %v2196
      %v2198 = vrcp.pop %v2137
      %v2199 = vmul.f32 %v2137, %v2198
      %v2200 = vsub.f32 1.0, %v2199
      %v2201 = vmul.f32 %v2198, %v2200
      %v2202 = vadd.f32 %v2198, %v2201
      %vm2203 = vweird.f32 %v2137
      %vm2204 = vweird.f32 %v2198
      %vm2205 = vmor %vm2203, %vm2204
      %v2206 = vsel %vm2205, %v2198, %v2202
      %v2207 = vand.u32 2147483647, %v2137
      %vm2208 = vcmp.eq.f32.partialorder %v2207, 8.507059e+37
      %v2209 = vand.u32 %v2137, 2147483648
      %v2210 = vor.u32 1.1754944e-38, %v2209
      %v2211 = vsel %vm2208, %v2210, %v2206
      %v2212 = vmul.f32 %v2122, %v2211
      %v2213 = vpack.c.bf16 %v2167, %v2152
      %v2214 = vpack.c.bf16 %v2197, %v2182
      %v2215 = vpack.c.bf16 %v2212, %v2212
      %2216 = vrot.lane.b32.xlu0 %v1442, 104
      %v2217 = vpop.permute.xlu0 %2216
      %2218 = vrot.lane.b32.xlu0 %v1443, 104
      %v2219 = vpop.permute.xlu0 %2218
      %2220 = vrot.lane.b32.xlu0 %v1444, 104
      %v2221 = vpop.permute.xlu0 %2220
      %v2225 = vsel %vm1308, %v2213, 0
      %v2228 = vsel %vm1308, %v2214, 0
      %v2231 = vsel %vm1308, %v2215, 0
      %v2234 = vsel %vm1456, %v2221, 0
      %2236 = vmatpush.bf16.msra.mxu0 0
      %2237 = vmatpush.bf16.msra.mxu0 0
      %2238 = vmatpush.bf16.msra.mxu0 0
      %2239 = vmatpush.bf16.msra.mxu0 0
      %2240 = vmatpush.bf16.msra.mxu0 0
      %2241 = vmatpush.bf16.msra.mxu0 %v2234
      %2242 = vmatpush.bf16.msra.mxu0 %v2219
      %2243 = vmatpush.bf16.msra.mxu0 %v2217
      %2244 = vmatmul.bf16.gmra.mxu0 %v2225
      %v2245 = vpop.f32.mrf.mxu0
      %v2246 = vadd.f32 0.0, %v2245
      %v2247 = vpop.f32.mrf.mxu0
      %v2248 = vadd.f32 0.0, %v2247
      %2249 = vmatmul.bf16.gmra.mxu0 %v2228
      %v2250 = vpop.f32.mrf.mxu0
      %v2251 = vadd.f32 0.0, %v2250
      %v2252 = vpop.f32.mrf.mxu0
      %v2253 = vadd.f32 0.0, %v2252
      %2254 = vmatmul.bf16.gmra.mxu0 %v2231
      %v2255 = vpop.f32.mrf.mxu0
      %v2256 = vadd.f32 0.0, %v2255
      %v2257 = vpop.f32.mrf.mxu0
      %2258 = vdwg.mxu0
      %v2259 = vpack.c.bf16 %v2248, %v2246
      %v2260 = vpack.c.bf16 %v2253, %v2251
      %v2261 = vpack.c.bf16 %v2256, %v2256
      %v2263 = vsel %vm1266, %v2259, 0
      %v2266 = vsel %vm1266, %v2260, 0
      %v2269 = vsel %vm1266, %v2261, 0
      %v2272 = vsel %vm1456, %v1238, 0
      %2274 = vmatpush.bf16.msra.mxu0 0
      %2275 = vmatpush.bf16.msra.mxu0 0
      %2276 = vmatpush.bf16.msra.mxu0 0
      %2277 = vmatpush.bf16.msra.mxu0 0
      %2278 = vmatpush.bf16.msra.mxu0 0
      %2279 = vmatpush.bf16.msra.mxu0 0
      %2280 = vmatpush.bf16.msra.mxu0 0
      %2281 = vmatpush.bf16.msra.mxu0 %v2272
      %2282 = vmatmul.bf16.gmra.mxu0 %v2263
      %v2283 = vpop.f32.mrf.mxu0
      %v2284 = vadd.f32 0.0, %v2283
      %v2285 = vpop.f32.mrf.mxu0
      %v2286 = vadd.f32 0.0, %v2285
      %2287 = vmatmul.bf16.gmra.mxu0 %v2266
      %v2288 = vpop.f32.mrf.mxu0
      %v2289 = vadd.f32 0.0, %v2288
      %v2290 = vpop.f32.mrf.mxu0
      %v2291 = vadd.f32 0.0, %v2290
      %2292 = vmatmul.bf16.gmra.mxu0 %v2269
      %v2293 = vpop.f32.mrf.mxu0
      %v2294 = vadd.f32 0.0, %v2293
      %v2295 = vpop.f32.mrf.mxu0
      %2296 = vdwg.mxu0
      %v2297 = vadd.f32 %v2035, %v2284
      %v2298 = vadd.f32 %v2036, %v2286
      %v2299 = vadd.f32 %v2037, %v2289
      %v2300 = vadd.f32 %v2038, %v2291
      %v2301 = vadd.f32 %v2039, %v2294
      %v2302 = vadd.f32 %v933, %v2297
      %v2303 = vadd.f32 %v934, %v2298
      %v2304 = vadd.f32 %v935, %v2299
      %v2305 = vadd.f32 %v936, %v2300
      %v2306 = vadd.f32 %v937, %v2301
      %v2308 = vperm.slane %v1239, 0
      %v2310 = vadd.f32 %v2302, %v2308
      %v2311 = vadd.f32 %v2303, %v2308
      %v2312 = vadd.f32 %v2304, %v2308
      %v2313 = vadd.f32 %v2305, %v2308
      %v2314 = vadd.f32 %v2306, %v2308
      %2315 = vst.msk [vmem:[#allocation2] sm:$0xff] %vm945, %v2310
      %2316 = vst.msk [vmem:[#allocation2 + $0x8] sm:$0xff] %vm945, %v2311
      %2317 = vst.msk [vmem:[#allocation2 + $0x10] sm:$0xff] %vm945, %v2312
      %2318 = vst.msk [vmem:[#allocation2 + $0x18] sm:$0xff] %vm945, %v2313
      %2319 = vst.msk [vmem:[#allocation2 + $0x20] sm:$0xff] %vm945, %v2314
      %v2320 = vld [vmem:[#allocation2] sm:$0xff]
      %v2321 = vld [vmem:[#allocation2 + $0x8] sm:$0xff]
      %v2322 = vld [vmem:[#allocation2 + $0x10] sm:$0xff]
      %v2323 = vld [vmem:[#allocation2 + $0x18] sm:$0xff]
      %v2324 = vld [vmem:[#allocation2 + $0x20] sm:$0xff]
      %v2325 = vld [vmem:[%s796] sm:$0x1]
      %v2326 = vld [vmem:[%s799] sm:$0x1]
      %v2327 = vsel %vm945, %v2320, 0.0
      %2328 = vadd.xlane.f32.xlu0 %v2327
      %v2329 = vpop.xlane.xlu0 %2328
      %v2330 = vsel %vm945, %v2321, 0.0
      %2331 = vadd.xlane.f32.xlu0 %v2330
      %v2332 = vpop.xlane.xlu0 %2331
      %v2333 = vsel %vm945, %v2322, 0.0
      %2334 = vadd.xlane.f32.xlu0 %v2333
      %v2335 = vpop.xlane.xlu0 %2334
      %v2336 = vsel %vm945, %v2323, 0.0
      %2337 = vadd.xlane.f32.xlu0 %v2336
      %v2338 = vpop.xlane.xlu0 %2337
      %v2339 = vsel %vm945, %v2324, 0.0
      %2340 = vadd.xlane.f32.xlu0 %v2339
      %v2341 = vpop.xlane.xlu0 %2340
      %v2342 = vmul.f32 %v2329, %v967
      %v2343 = vmul.f32 %v2332, %v967
      %v2344 = vmul.f32 %v2335, %v967
      %v2345 = vmul.f32 %v2338, %v967
      %v2346 = vmul.f32 %v2341, %v967
      %v2347 = vsub.f32 %v2320, %v2342
      %v2348 = vsub.f32 %v2321, %v2343
      %v2349 = vsub.f32 %v2322, %v2344
      %v2350 = vsub.f32 %v2323, %v2345
      %v2351 = vsub.f32 %v2324, %v2346
      %v2352 = vmul.f32 %v2347, %v2347
      %v2353 = vmul.f32 %v2348, %v2348
      %v2354 = vmul.f32 %v2349, %v2349
      %v2355 = vmul.f32 %v2350, %v2350
      %v2356 = vmul.f32 %v2351, %v2351
      %v2357 = vsel %vm945, %v2352, 0.0
      %2358 = vadd.xlane.f32.xlu0 %v2357
      %v2359 = vpop.xlane.xlu0 %2358
      %v2360 = vsel %vm945, %v2353, 0.0
      %2361 = vadd.xlane.f32.xlu0 %v2360
      %v2362 = vpop.xlane.xlu0 %2361
      %v2363 = vsel %vm945, %v2354, 0.0
      %2364 = vadd.xlane.f32.xlu0 %v2363
      %v2365 = vpop.xlane.xlu0 %2364
      %v2366 = vsel %vm945, %v2355, 0.0
      %2367 = vadd.xlane.f32.xlu0 %v2366
      %v2368 = vpop.xlane.xlu0 %2367
      %v2369 = vsel %vm945, %v2356, 0.0
      %2370 = vadd.xlane.f32.xlu0 %v2369
      %v2371 = vpop.xlane.xlu0 %2370
      %v2372 = vmul.f32 %v2359, %v967
      %v2373 = vmul.f32 %v2362, %v967
      %v2374 = vmul.f32 %v2365, %v967
      %v2375 = vmul.f32 %v2368, %v967
      %v2376 = vmul.f32 %v2371, %v967
      %v2377 = vadd.f32 %v2372, 1e-05
      %v2378 = vadd.f32 %v2373, 1e-05
      %v2379 = vadd.f32 %v2374, 1e-05
      %v2380 = vadd.f32 %v2375, 1e-05
      %v2381 = vadd.f32 %v2376, 1e-05
      %v2382 = vrsqrt.pop %v2377
      %v2383 = vmul.f32 %v2382, %v2377
      %v2384 = vmul.f32 %v2383, %v2382
      %v2385 = vmul.f32 0.5, %v2384
      %v2386 = vsub.f32 1.5, %v2385
      %v2387 = vmul.f32 %v2382, %v2386
      %vm2388 = vweird.f32 %v2377
      %vm2389 = vweird.f32 %v2382
      %vm2390 = vmor %vm2388, %vm2389
      %v2391 = vsel %vm2390, %v2382, %v2387
      %v2392 = vrsqrt.pop %v2378
      %v2393 = vmul.f32 %v2392, %v2378
      %v2394 = vmul.f32 %v2393, %v2392
      %v2395 = vmul.f32 0.5, %v2394
      %v2396 = vsub.f32 1.5, %v2395
      %v2397 = vmul.f32 %v2392, %v2396
      %vm2398 = vweird.f32 %v2378
      %vm2399 = vweird.f32 %v2392
      %vm2400 = vmor %vm2398, %vm2399
      %v2401 = vsel %vm2400, %v2392, %v2397
      %v2402 = vrsqrt.pop %v2379
      %v2403 = vmul.f32 %v2402, %v2379
      %v2404 = vmul.f32 %v2403, %v2402
      %v2405 = vmul.f32 0.5, %v2404
      %v2406 = vsub.f32 1.5, %v2405
      %v2407 = vmul.f32 %v2402, %v2406
      %vm2408 = vweird.f32 %v2379
      %vm2409 = vweird.f32 %v2402
      %vm2410 = vmor %vm2408, %vm2409
      %v2411 = vsel %vm2410, %v2402, %v2407
      %v2412 = vrsqrt.pop %v2380
      %v2413 = vmul.f32 %v2412, %v2380
      %v2414 = vmul.f32 %v2413, %v2412
      %v2415 = vmul.f32 0.5, %v2414
      %v2416 = vsub.f32 1.5, %v2415
      %v2417 = vmul.f32 %v2412, %v2416
      %vm2418 = vweird.f32 %v2380
      %vm2419 = vweird.f32 %v2412
      %vm2420 = vmor %vm2418, %vm2419
      %v2421 = vsel %vm2420, %v2412, %v2417
      %v2422 = vrsqrt.pop %v2381
      %v2423 = vmul.f32 %v2422, %v2381
      %v2424 = vmul.f32 %v2423, %v2422
      %v2425 = vmul.f32 0.5, %v2424
      %v2426 = vsub.f32 1.5, %v2425
      %v2427 = vmul.f32 %v2422, %v2426
      %vm2428 = vweird.f32 %v2381
      %vm2429 = vweird.f32 %v2422
      %vm2430 = vmor %vm2428, %vm2429
      %v2431 = vsel %vm2430, %v2422, %v2427
      %v2432 = vmul.f32 %v2347, %v2391
      %v2433 = vmul.f32 %v2348, %v2401
      %v2434 = vmul.f32 %v2349, %v2411
      %v2435 = vmul.f32 %v2350, %v2421
      %v2436 = vmul.f32 %v2351, %v2431
      %v2438 = vperm.slane %v2325, 0
      %v2440 = vmul.f32 %v2432, %v2438
      %v2441 = vmul.f32 %v2433, %v2438
      %v2442 = vmul.f32 %v2434, %v2438
      %v2443 = vmul.f32 %v2435, %v2438
      %v2444 = vmul.f32 %v2436, %v2438
      %v2446 = vperm.slane %v2326, 0
      %v2448 = vadd.f32 %v2440, %v2446
      %v2449 = vadd.f32 %v2441, %v2446
      %v2450 = vadd.f32 %v2442, %v2446
      %v2451 = vadd.f32 %v2443, %v2446
      %v2452 = vadd.f32 %v2444, %v2446
      %v2453 = vpack.c.bf16 %v2449, %v2448
      %v2454 = vpack.c.bf16 %v2451, %v2450
      %v2455 = vpack.c.bf16 %v2452, %v2452
      %v2456 = vld [vmem:[%s804] sm:$0xf]
      %v2457 = vld [vmem:[%s804 + $0x4] sm:$0xf]
      %v2458 = vld [vmem:[%s804 + $0x8] sm:$0xf]
      %v2459 = vld [vmem:[%s804 + $0xc] sm:$0xf]
      %v2460 = vld [vmem:[%s807] sm:$0x1]
      %v2462 = vperm.slane %v2460, 0
      %v2468 = vunpack.c.l.b16 %v2456
      %v2469 = vunpack.c.l.b16 %v2457
      %v2470 = vunpack.c.l.b16 %v2458
      %v2471 = vunpack.c.l.b16 %v2459
      %v2472 = vpack.c.b16 %v2469, %v2468
      %v2473 = vpack.c.b16 %v2471, %v2470
      %v2477 = vsel %vm945, %v2453, 0
      %v2480 = vsel %vm945, %v2454, 0
      %v2483 = vsel %vm945, %v2455, 0
      %2485 = vmatpush.bf16.msra.mxu0 0
      %2486 = vmatpush.bf16.msra.mxu0 0
      %2487 = vmatpush.bf16.msra.mxu0 0
      %2488 = vmatpush.bf16.msra.mxu0 0
      %2489 = vmatpush.bf16.msra.mxu0 0
      %2490 = vmatpush.bf16.msra.mxu0 0
      %2491 = vmatpush.bf16.msra.mxu0 %v2473
      %2492 = vmatpush.bf16.msra.mxu0 %v2472
      %2493 = vmatmul.bf16.gmra.mxu0 %v2477
      %v2494 = vpop.f32.mrf.mxu0
      %v2495 = vadd.f32 %v2462, %v2494
      %v2496 = vpop.f32.mrf.mxu0
      %v2497 = vadd.f32 %v2462, %v2496
      %2498 = vmatmul.bf16.gmra.mxu0 %v2480
      %v2499 = vpop.f32.mrf.mxu0
      %v2500 = vadd.f32 %v2462, %v2499
      %v2501 = vpop.f32.mrf.mxu0
      %v2502 = vadd.f32 %v2462, %v2501
      %2503 = vmatmul.bf16.gmra.mxu0 %v2483
      %v2504 = vpop.f32.mrf.mxu0
      %v2505 = vadd.f32 %v2462, %v2504
      %v2506 = vpop.f32.mrf.mxu0
      %2507 = vdwg.mxu0
      %v2508 = vmul.f32 %v2495, 0.5
      %v2509 = vmul.f32 %v2497, 0.5
      %v2510 = vmul.f32 %v2500, 0.5
      %v2511 = vmul.f32 %v2502, 0.5
      %v2512 = vmul.f32 %v2505, 0.5
      %v2513 = vmul.f32 %v2495, 0.70710677
      %v2514 = vmul.f32 %v2497, 0.70710677
      %v2515 = vmul.f32 %v2500, 0.70710677
      %v2516 = vmul.f32 %v2502, 0.70710677
      %v2517 = vmul.f32 %v2505, 0.70710677
      %v2518 = vand.u32 2147483647, %v2513
      %v2519 = vand.u32 2147483647, %v2514
      %v2520 = vand.u32 2147483647, %v2515
      %v2521 = vand.u32 2147483647, %v2516
      %v2522 = vand.u32 2147483647, %v2517
      %v2523 = vmul.f32 %v2518, 0.3275911
      %v2524 = vmul.f32 %v2519, 0.3275911
      %v2525 = vmul.f32 %v2520, 0.3275911
      %v2526 = vmul.f32 %v2521, 0.3275911
      %v2527 = vmul.f32 %v2522, 0.3275911
      %v2528 = vadd.f32 %v2523, 1.0
      %v2529 = vadd.f32 %v2524, 1.0
      %v2530 = vadd.f32 %v2525, 1.0
      %v2531 = vadd.f32 %v2526, 1.0
      %v2532 = vadd.f32 %v2527, 1.0
      %v2533 = vrcp.pop %v2528
      %v2534 = vrcp.pop %v2529
      %v2535 = vrcp.pop %v2530
      %v2536 = vrcp.pop %v2531
      %v2537 = vrcp.pop %v2532
      %v2538 = vmul.f32 %v2533, 1.0614054
      %v2539 = vmul.f32 %v2534, 1.0614054
      %v2540 = vmul.f32 %v2535, 1.0614054
      %v2541 = vmul.f32 %v2536, 1.0614054
      %v2542 = vmul.f32 %v2537, 1.0614054
      %v2543 = vadd.f32 %v2538, -1.4531521
      %v2544 = vadd.f32 %v2539, -1.4531521
      %v2545 = vadd.f32 %v2540, -1.4531521
      %v2546 = vadd.f32 %v2541, -1.4531521
      %v2547 = vadd.f32 %v2542, -1.4531521
      %v2548 = vmul.f32 %v2543, %v2533
      %v2549 = vmul.f32 %v2544, %v2534
      %v2550 = vmul.f32 %v2545, %v2535
      %v2551 = vmul.f32 %v2546, %v2536
      %v2552 = vmul.f32 %v2547, %v2537
      %v2553 = vadd.f32 %v2548, 1.4214138
      %v2554 = vadd.f32 %v2549, 1.4214138
      %v2555 = vadd.f32 %v2550, 1.4214138
      %v2556 = vadd.f32 %v2551, 1.4214138
      %v2557 = vadd.f32 %v2552, 1.4214138
      %v2558 = vmul.f32 %v2553, %v2533
      %v2559 = vmul.f32 %v2554, %v2534
      %v2560 = vmul.f32 %v2555, %v2535
      %v2561 = vmul.f32 %v2556, %v2536
      %v2562 = vmul.f32 %v2557, %v2537
      %v2563 = vadd.f32 %v2558, -0.28449672
      %v2564 = vadd.f32 %v2559, -0.28449672
      %v2565 = vadd.f32 %v2560, -0.28449672
      %v2566 = vadd.f32 %v2561, -0.28449672
      %v2567 = vadd.f32 %v2562, -0.28449672
      %v2568 = vmul.f32 %v2563, %v2533
      %v2569 = vmul.f32 %v2564, %v2534
      %v2570 = vmul.f32 %v2565, %v2535
      %v2571 = vmul.f32 %v2566, %v2536
      %v2572 = vmul.f32 %v2567, %v2537
      %v2573 = vadd.f32 %v2568, 0.2548296
      %v2574 = vadd.f32 %v2569, 0.2548296
      %v2575 = vadd.f32 %v2570, 0.2548296
      %v2576 = vadd.f32 %v2571, 0.2548296
      %v2577 = vadd.f32 %v2572, 0.2548296
      %v2578 = vmul.f32 %v2573, %v2533
      %v2579 = vmul.f32 %v2574, %v2534
      %v2580 = vmul.f32 %v2575, %v2535
      %v2581 = vmul.f32 %v2576, %v2536
      %v2582 = vmul.f32 %v2577, %v2537
      %v2583 = vsub.f32 0.0, %v2518
      %v2584 = vsub.f32 0.0, %v2519
      %v2585 = vsub.f32 0.0, %v2520
      %v2586 = vsub.f32 0.0, %v2521
      %v2587 = vsub.f32 0.0, %v2522
      %v2588 = vmul.f32 %v2583, %v2518
      %v2589 = vmul.f32 %v2584, %v2519
      %v2590 = vmul.f32 %v2585, %v2520
      %v2591 = vmul.f32 %v2586, %v2521
      %v2592 = vmul.f32 %v2587, %v2522
      %v2593 = vmul.f32 %v2588, 1.442695
      %v2594 = vpow.pop %v2593
      %v2595 = vmul.f32 %v2589, 1.442695
      %v2596 = vpow.pop %v2595
      %v2597 = vmul.f32 %v2590, 1.442695
      %v2598 = vpow.pop %v2597
      %v2599 = vmul.f32 %v2591, 1.442695
      %v2600 = vpow.pop %v2599
      %v2601 = vmul.f32 %v2592, 1.442695
      %v2602 = vpow.pop %v2601
      %v2603 = vmul.f32 %v2578, %v2594
      %v2604 = vmul.f32 %v2579, %v2596
      %v2605 = vmul.f32 %v2580, %v2598
      %v2606 = vmul.f32 %v2581, %v2600
      %v2607 = vmul.f32 %v2582, %v2602
      %v2608 = vsub.f32 1.0, %v2603
      %v2609 = vsub.f32 1.0, %v2604
      %v2610 = vsub.f32 1.0, %v2605
      %v2611 = vsub.f32 1.0, %v2606
      %v2612 = vsub.f32 1.0, %v2607
      %vm2613 = vcmp.ge.f32.partialorder %v2513, 0.0
      %vm2614 = vcmp.ge.f32.partialorder %v2514, 0.0
      %vm2615 = vcmp.ge.f32.partialorder %v2515, 0.0
      %vm2616 = vcmp.ge.f32.partialorder %v2516, 0.0
      %vm2617 = vcmp.ge.f32.partialorder %v2517, 0.0
      %v2618 = vsub.f32 0.0, %v2608
      %v2619 = vsub.f32 0.0, %v2609
      %v2620 = vsub.f32 0.0, %v2610
      %v2621 = vsub.f32 0.0, %v2611
      %v2622 = vsub.f32 0.0, %v2612
      %v2623 = vsel %vm2613, %v2608, %v2618
      %v2624 = vsel %vm2614, %v2609, %v2619
      %v2625 = vsel %vm2615, %v2610, %v2620
      %v2626 = vsel %vm2616, %v2611, %v2621
      %v2627 = vsel %vm2617, %v2612, %v2622
      %v2628 = vadd.f32 %v2623, 1.0
      %v2629 = vadd.f32 %v2624, 1.0
      %v2630 = vadd.f32 %v2625, 1.0
      %v2631 = vadd.f32 %v2626, 1.0
      %v2632 = vadd.f32 %v2627, 1.0
      %v2633 = vmul.f32 %v2508, %v2628
      %v2634 = vmul.f32 %v2509, %v2629
      %v2635 = vmul.f32 %v2510, %v2630
      %v2636 = vmul.f32 %v2511, %v2631
      %v2637 = vmul.f32 %v2512, %v2632
      %v2638 = vpack.c.bf16 %v2634, %v2633
      %v2639 = vpack.c.bf16 %v2636, %v2635
      %v2640 = vpack.c.bf16 %v2637, %v2637
      %v2641 = vld [vmem:[%s812] sm:$0xf]
      %v2642 = vld [vmem:[%s812 + $0x4] sm:$0xf]
      %v2643 = vld [vmem:[%s812 + $0x8] sm:$0xf]
      %v2644 = vld [vmem:[%s812 + $0xc] sm:$0xf]
      %v2645 = vld [vmem:[%s812 + $0x10] sm:$0xf]
      %v2646 = vld [vmem:[%s812 + $0x14] sm:$0xf]
      %v2647 = vld [vmem:[%s812 + $0x18] sm:$0xf]
      %v2648 = vld [vmem:[%s812 + $0x1c] sm:$0xf]
      %v2649 = vld [vmem:[%s812 + $0x20] sm:$0xf]
      %v2650 = vld [vmem:[%s812 + $0x24] sm:$0xf]
      %v2651 = vld [vmem:[%s812 + $0x28] sm:$0xf]
      %v2652 = vld [vmem:[%s812 + $0x2c] sm:$0xf]
      %v2653 = vld [vmem:[%s812 + $0x30] sm:$0xf]
      %v2654 = vld [vmem:[%s812 + $0x34] sm:$0xf]
      %v2655 = vld [vmem:[%s812 + $0x38] sm:$0xf]
      %v2656 = vld [vmem:[%s812 + $0x3c] sm:$0xf]
      %v2657 = vld [vmem:[%s815] sm:$0x1]
      %v2659 = vperm.slane %v2657, 0
      %v2677 = vunpack.c.l.b16 %v2641
      %v2678 = vunpack.c.l.b16 %v2642
      %v2679 = vunpack.c.l.b16 %v2643
      %v2680 = vunpack.c.l.b16 %v2644
      %v2681 = vunpack.c.l.b16 %v2645
      %v2682 = vunpack.c.l.b16 %v2646
      %v2683 = vunpack.c.l.b16 %v2647
      %v2684 = vunpack.c.l.b16 %v2648
      %v2685 = vunpack.c.l.b16 %v2649
      %v2686 = vunpack.c.l.b16 %v2650
      %v2687 = vunpack.c.l.b16 %v2651
      %v2688 = vunpack.c.l.b16 %v2652
      %v2689 = vunpack.c.l.b16 %v2653
      %v2690 = vunpack.c.l.b16 %v2654
      %v2691 = vunpack.c.l.b16 %v2655
      %v2692 = vunpack.c.l.b16 %v2656
      %v2693 = vpack.c.b16 %v2678, %v2677
      %v2694 = vpack.c.b16 %v2680, %v2679
      %v2695 = vpack.c.b16 %v2682, %v2681
      %v2696 = vpack.c.b16 %v2684, %v2683
      %v2697 = vpack.c.b16 %v2686, %v2685
      %v2698 = vpack.c.b16 %v2688, %v2687
      %v2699 = vpack.c.b16 %v2690, %v2689
      %v2700 = vpack.c.b16 %v2692, %v2691
      %2709 = vmatpush.bf16.msra.mxu0 %v2700
      %2710 = vmatpush.bf16.msra.mxu0 %v2699
      %2711 = vmatpush.bf16.msra.mxu0 %v2698
      %2712 = vmatpush.bf16.msra.mxu0 %v2697
      %2713 = vmatpush.bf16.msra.mxu0 %v2696
      %2714 = vmatpush.bf16.msra.mxu0 %v2695
      %2715 = vmatpush.bf16.msra.mxu0 %v2694
      %2716 = vmatpush.bf16.msra.mxu0 %v2693
      %2717 = vmatmul.bf16.gmra.mxu0 %v2638
      %v2718 = vpop.f32.mrf.mxu0
      %v2719 = vadd.f32 %v2659, %v2718
      %v2720 = vpop.f32.mrf.mxu0
      %v2721 = vadd.f32 %v2659, %v2720
      %2722 = vmatmul.bf16.gmra.mxu0 %v2639
      %v2723 = vpop.f32.mrf.mxu0
      %v2724 = vadd.f32 %v2659, %v2723
      %v2725 = vpop.f32.mrf.mxu0
      %v2726 = vadd.f32 %v2659, %v2725
      %2727 = vmatmul.bf16.gmra.mxu0 %v2640
      %v2728 = vpop.f32.mrf.mxu0
      %v2729 = vadd.f32 %v2659, %v2728
      %v2730 = vpop.f32.mrf.mxu0
      %2731 = vdwg.mxu0
      %v2732 = vadd.f32 %v2320, %v2719
      %v2733 = vadd.f32 %v2321, %v2721
      %v2734 = vadd.f32 %v2322, %v2724
      %v2735 = vadd.f32 %v2323, %v2726
      %v2736 = vadd.f32 %v2324, %v2729
      %2737 = vst.msk [vmem:[#allocation2] sm:$0xff] %vm945, %v2732
      %2738 = vst.msk [vmem:[#allocation2 + $0x8] sm:$0xff] %vm945, %v2733
      %2739 = vst.msk [vmem:[#allocation2 + $0x10] sm:$0xff] %vm945, %v2734
      %2740 = vst.msk [vmem:[#allocation2 + $0x18] sm:$0xff] %vm945, %v2735
      %2741 = vst.msk [vmem:[#allocation2 + $0x20] sm:$0xff] %vm945, %v2736
      %p2742 = scmp.eq.s32.totalorder %s33, 1
      // Predicated region
      $region93: #{tpu_custom_call.1} parent=87 // pred_check
        %p2743 = pneg %p2742
      $region94: #{tpu_custom_call.1} parent=87 // pred_check_branch
        %2745 = sbr.rel (%p2743) target = $region96
      $region95: #{tpu_custom_call.1} parent=87 // pred_region
        %v2746 = vld [vmem:[#allocation2] sm:$0xff]
        %v2747 = vld [vmem:[#allocation2 + $0x8] sm:$0xff]
        %v2748 = vld [vmem:[#allocation2 + $0x10] sm:$0xff]
        %v2749 = vld [vmem:[#allocation2 + $0x18] sm:$0xff]
        %v2750 = vld [vmem:[#allocation2 + $0x20] sm:$0xff]
        %2751 = vst.msk [vmem:[%s820] sm:$0xff] %vm945, %v2746
        %2752 = vst.msk [vmem:[%s820 + $0x8] sm:$0xff] %vm945, %v2747
        %2753 = vst.msk [vmem:[%s820 + $0x10] sm:$0xff] %vm945, %v2748
        %2754 = vst.msk [vmem:[%s820 + $0x18] sm:$0xff] %vm945, %v2749
        %2755 = vst.msk [vmem:[%s820 + $0x20] sm:$0xff] %vm945, %v2750
      $region96: #{tpu_custom_call.1} parent=87 // pred_fallthru
        _
      %p2756 = scmp.lt.s32.totalorder %s32, 1
      %s2757 = scalar_select %p2756, %s32, 1
      %s2758 = smul.addr %s2757, 5
      %s2759 = smul.addr %s2758, 8
      %s2760 = scalar_lea.vmem %s17, %s2759
      // Predicated region
      $region97: #{tpu_custom_call.1} parent=87 // pred_check
        %p2761 = pneg %p500
      $region98: #{tpu_custom_call.1} parent=87 // pred_check_branch
        %2763 = sbr.rel (%p2761) target = $region100
      $region99: #{tpu_custom_call.1} parent=87 // pred_region
        _
      $region100: #{tpu_custom_call.1} parent=87 // pred_fallthru
        _
    $region88: #{tpu_custom_call.1} parent=5 // pred_fallthru
      _
    %p2764 = scmp.le.s32.totalorder 2, %s23
    // Predicated region
    $region101: #{tpu_custom_call.1} parent=5 // pred_check
      %p2765 = pneg %p2764
    $region102: #{tpu_custom_call.1} parent=5 // pred_check_branch
      %2767 = sbr.rel (%p2765) target = $region104
    $region103: #{tpu_custom_call.1} parent=5 // pred_region
      %s2768 = ssub.s32 %s23, 2
      // Predicated region
      $region105: #{tpu_custom_call.1} parent=103 // pred_check
        %p2769 = pneg %p506
      $region106: #{tpu_custom_call.1} parent=103 // pred_check_branch
        %2771 = sbr.rel (%p2769) target = $region108
      $region107: #{tpu_custom_call.1} parent=103 // pred_region
        %p2772 = scmp.lt.s32.totalorder %s34, 1
        %s2773 = scalar_select %p2772, %s34, 1
        %s2774 = smul.addr %s2773, 5
        %s2775 = smul.addr %s2774, 8
        %s2776 = scalar_lea.vmem %s17, %s2775
      $region108: #{tpu_custom_call.1} parent=103 // pred_fallthru
        _
    $region104: #{tpu_custom_call.1} parent=5 // pred_fallthru
      _
  $region6: #{tpu_custom_call.1} parent=0 // loop_footer
    %s27 = sadd.s32 1, %s23
  $region7: #{tpu_custom_call.1} parent=0 // loop_footer_branch
    %22 = sbr.rel target = $region3
  $region8: #{tpu_custom_call.1} parent=0 // loop_exit
    _

</llo_original>
